<compile_context>
chip_gen: v5e
topology: v5e:2x2
jax: 0.10.0
libtpu: 0.0.40
codegen_flags: <defaults>
</compile_context>

<pallas_src>
import functools
import numpy as np

import jax
import jax.numpy as jnp
from jax.experimental import pallas as pl
from jax.experimental.pallas import tpu as pltpu

MXU_DTYPE = jnp.bfloat16  # matmul operand dtype; accumulation stays f32


def _bf(x):
    return x.astype(MXU_DTYPE)


def _layernorm(x, g, b, eps):
    mean = jnp.mean(x, axis=-1, keepdims=True)
    var = jnp.mean((x - mean) ** 2, axis=-1, keepdims=True)
    return (x - mean) * jax.lax.rsqrt(var + eps) * g + b


def _shift_rows(x, s):
    """y[t] = x[t - s] with zero fill outside [0, T).  s is a static int."""
    if s == 0:
        return x
    t, c = x.shape
    z = jnp.zeros((abs(s), c), x.dtype)
    if s > 0:
        return jnp.concatenate([z, x[: t - s, :]], axis=0)
    return jnp.concatenate([x[-s:, :], z], axis=0)


# -----------------------------------------------------------------------------
# Kernel 1: full FFT-block stack (attention + conv-FFN per layer), optionally
# with the mel projection fused into the epilogue (decoder).
# -----------------------------------------------------------------------------
def _fft_stack_kernel(*refs, n_layers, n_head, d_k, kernel_size, eps, mel_proj):
    if mel_proj:
        (x_ref, kmask_ref, nonpad_ref,
         wq_ref, wk_ref, wv_ref, bq_ref, bk_ref, bv_ref, wo_ref, bo_ref,
         g1_ref, be1_ref, c1w_ref, c1b_ref, c2w_ref, c2b_ref, g2_ref, be2_ref,
         melw_ref, melb_ref, o_ref) = refs
    else:
        (x_ref, kmask_ref, nonpad_ref,
         wq_ref, wk_ref, wv_ref, bq_ref, bk_ref, bv_ref, wo_ref, bo_ref,
         g1_ref, be1_ref, c1w_ref, c1b_ref, c2w_ref, c2b_ref, g2_ref, be2_ref,
         o_ref) = refs

    x = x_ref[0].astype(jnp.float32)                      # (T, D)
    T, D = x.shape
    F = c1w_ref.shape[-1]
    pad_l = (kernel_size - 1) // 2
    nonpad = nonpad_ref[0].astype(jnp.float32)            # (T, 1)
    # additive key-pad bias from the (1, T) mask -- no (T, T) bias in HBM
    bias = (kmask_ref[0].astype(jnp.float32) - 1.0) * 1e9  # (1, T)

    for l in range(n_layers):                             # static layer loop
        # ---- multi-head self-attention (1/sqrt(d_k) folded into wq/bq) ----
        acc = jnp.zeros((T, D), jnp.float32)
        for h in range(n_head):                           # static head loop
            q = jnp.dot(_bf(x), wq_ref[l, h],
                        preferred_element_type=jnp.float32) + bq_ref[l, h]
            k = jnp.dot(_bf(x), wk_ref[l, h],
                        preferred_element_type=jnp.float32) + bk_ref[l, h]
            v = jnp.dot(_bf(x), wv_ref[l, h],
                        preferred_element_type=jnp.float32) + bv_ref[l, h]
            s = jax.lax.dot_general(_bf(q), _bf(k), (((1,), (1,)), ((), ())),
                                    preferred_element_type=jnp.float32)
            s = s + bias
            s = s - jnp.max(s, axis=-1, keepdims=True)
            p = jnp.exp(s)
            p = p * pl.reciprocal(jnp.sum(p, axis=-1, keepdims=True), approx=True)
            o_h = jnp.dot(_bf(p), _bf(v), preferred_element_type=jnp.float32)
            # fold output projection per head -> no lane concat of heads
            acc = acc + jnp.dot(_bf(o_h), wo_ref[l, h],
                                preferred_element_type=jnp.float32)
        x1 = _layernorm(acc + bo_ref[l] + x, g1_ref[l], be1_ref[l], eps) * nonpad

        # ---- conv FFN: tap-accumulated matmuls on in-VMEM shifted rows ----
        acc1 = jnp.zeros((T, F), jnp.float32)
        for j in range(kernel_size):
            xs = _shift_rows(x1, pad_l - j)
            acc1 = acc1 + jnp.dot(_bf(xs), c1w_ref[l, j],
                                  preferred_element_type=jnp.float32)
        h1 = jnp.maximum(acc1 + c1b_ref[l], 0.0)

        acc2 = jnp.zeros((T, D), jnp.float32)
        for j in range(kernel_size):
            hs = _shift_rows(h1, pad_l - j)
            acc2 = acc2 + jnp.dot(_bf(hs), c2w_ref[l, j],
                                  preferred_element_type=jnp.float32)
        x = _layernorm(acc2 + c2b_ref[l] + x1, g2_ref[l], be2_ref[l], eps) * nonpad

    if mel_proj:
        # decoder epilogue: x is already length-masked (== mask_tensor mask)
        mel = jnp.dot(_bf(x), melw_ref[...],
                      preferred_element_type=jnp.float32) + melb_ref[...]
        o_ref[0] = mel.astype(o_ref.dtype)
    else:
        o_ref[0] = x.astype(o_ref.dtype)


# -----------------------------------------------------------------------------
# Kernel 2: fused variance predictor (conv+ReLU+LN, conv+ReLU+LN, F->1 reduce),
# lane-dense (1, T) output.
# -----------------------------------------------------------------------------
def _var_predictor_kernel(x_ref, w1_ref, b1_ref, g1_ref, be1_ref,
                          w2_ref, b2_ref, g2_ref, be2_ref, wl_ref, bl_ref,
                          o_ref, *, kernel_size, eps):
    x = x_ref[0].astype(jnp.float32)                      # (T, D)
    T = x.shape[0]
    F = w1_ref.shape[-1]
    pad_l = (kernel_size - 1) // 2

    acc1 = jnp.zeros((T, F), jnp.float32)
    for j in range(kernel_size):
        xs = _shift_rows(x, pad_l - j)
        acc1 = acc1 + jnp.dot(_bf(xs), w1_ref[j],
                              preferred_element_type=jnp.float32)
    h = _layernorm(jnp.maximum(acc1 + b1_ref[...], 0.0),
                   g1_ref[...], be1_ref[...], eps)

    acc2 = jnp.zeros((T, F), jnp.float32)
    for j in range(kernel_size):
        hs = _shift_rows(h, pad_l - j)
        acc2 = acc2 + jnp.dot(_bf(hs), w2_ref[j],
                              preferred_element_type=jnp.float32)
    h2 = _layernorm(jnp.maximum(acc2 + b2_ref[...], 0.0),
                    g2_ref[...], be2_ref[...], eps)

    # F -> 1 projection emitted lane-dense as (1, T)
    o = jax.lax.dot_general(_bf(wl_ref[...]), _bf(h2), (((1,), (1,)), ((), ())),
                            preferred_element_type=jnp.float32) + bl_ref[...]
    o_ref[0] = o


# -----------------------------------------------------------------------------
# Wrappers (one pallas_call each, grid over batch, "parallel")
# -----------------------------------------------------------------------------
def _const_spec(a):
    return pl.BlockSpec(a.shape, lambda b, _n=a.ndim: (0,) * _n)


def fft_stack(x, kmask, nonpad, sp, *, n_head, d_k, kernel_size,
              out_dtype=MXU_DTYPE, mel_w=None, mel_b=None):
    B, T, D = x.shape
    L = sp["wq"].shape[0]
    fuse_mel = mel_w is not None
    kern = functools.partial(_fft_stack_kernel, n_layers=L, n_head=n_head,
                             d_k=d_k, kernel_size=kernel_size, eps=1e-5,
                             mel_proj=fuse_mel)

    weights = [sp["wq"], sp["wk"], sp["wv"], sp["bq"], sp["bk"], sp["bv"],
               sp["wo"], sp["bo"], sp["g1"], sp["be1"],
               sp["c1w"], sp["c1b"], sp["c2w"], sp["c2b"], sp["g2"], sp["be2"]]
    args = [x, kmask, nonpad] + weights
    in_specs = [pl.BlockSpec((1, T, D), lambda b: (b, 0, 0)),
                pl.BlockSpec((1, 1, T), lambda b: (b, 0, 0)),
                pl.BlockSpec((1, T, 1), lambda b: (b, 0, 0))]
    in_specs += [_const_spec(w) for w in weights]

    if fuse_mel:
        args += [mel_w, mel_b]
        in_specs += [_const_spec(mel_w), _const_spec(mel_b)]
        out_dim = mel_w.shape[1]
        out_dtype = jnp.float32
    else:
        out_dim = D

    return pl.pallas_call(
        kern,
        out_shape=jax.ShapeDtypeStruct((B, T, out_dim), out_dtype),
        grid=(B,),
        in_specs=in_specs,
        out_specs=pl.BlockSpec((1, T, out_dim), lambda b: (b, 0, 0)),
        compiler_params=pltpu.CompilerParams(dimension_semantics=("parallel",)),
    )(*args)


def variance_predictor(x, p, *, kernel_size):
    B, T, D = x.shape
    kern = functools.partial(_var_predictor_kernel, kernel_size=kernel_size,
                             eps=1e-5)
    weights = [p["w1"], p["b1"], p["g1"], p["be1"],
               p["w2"], p["b2"], p["g2"], p["be2"], p["wl"], p["bl"]]
    out = pl.pallas_call(
        kern,
        out_shape=jax.ShapeDtypeStruct((B, 1, T), jnp.float32),
        grid=(B,),
        in_specs=[pl.BlockSpec((1, T, D), lambda b: (b, 0, 0))]
                 + [_const_spec(w) for w in weights],
        out_specs=pl.BlockSpec((1, 1, T), lambda b: (b, 0, 0)),
        compiler_params=pltpu.CompilerParams(dimension_semantics=("parallel",)),
    )(x, *weights)
    return out[:, 0, :]


# -----------------------------------------------------------------------------
# JAX glue (index ops)
# -----------------------------------------------------------------------------
def length_regulator(x, durations, max_len):
    """Expand x (B, T, D) by integer durations (B, T); zero beyond total length."""
    B, T, D = x.shape
    cum = jnp.cumsum(durations, axis=1)
    total = cum[:, -1]
    t_ids = jnp.arange(max_len)
    idx = jnp.sum(t_ids[None, :, None] >= cum[:, None, :], axis=-1)
    idx = jnp.clip(idx, 0, T - 1)
    out = jnp.take_along_axis(x, idx[..., None], axis=1)
    valid = (t_ids[None, :] < total[:, None]).astype(x.dtype)
    return out * valid[..., None], total


# -----------------------------------------------------------------------------
# Parameter init (deterministic, synthetic)
# -----------------------------------------------------------------------------
def _sinusoid_table(n_pos, d):
    pos = np.arange(n_pos)[:, None]
    i = np.arange(d)[None, :]
    angle = pos / np.power(10000.0, 2.0 * (i // 2) / d)
    table = np.zeros((n_pos, d), np.float32)
    table[:, 0::2] = np.sin(angle[:, 0::2])
    table[:, 1::2] = np.cos(angle[:, 1::2])
    table[0] = 0.0  # padding idx
    return jnp.asarray(table)


def init_fft_stack(key, n_layers, d_model, n_head, d_k, d_ff, kernel):
    scale = 1.0 / float(np.sqrt(d_k))  # folded into wq / bq

    def one(k):
        ks = jax.random.split(k, 12)
        nrm = lambda kk, shape, s: jax.random.normal(kk, shape, jnp.float32) * s
        return dict(
            wq=nrm(ks[0], (n_head, d_model, d_k), 0.05) * scale,
            bq=nrm(ks[1], (n_head, 1, d_k), 0.01) * scale,
            wk=nrm(ks[2], (n_head, d_model, d_k), 0.05),
            bk=nrm(ks[3], (n_head, 1, d_k), 0.01),
            wv=nrm(ks[4], (n_head, d_model, d_k), 0.05),
            bv=nrm(ks[5], (n_head, 1, d_k), 0.01),
            wo=nrm(ks[6], (n_head, d_k, d_model), 0.05),
            bo=nrm(ks[7], (1, d_model), 0.01),
            g1=jnp.ones((1, d_model), jnp.float32),
            be1=jnp.zeros((1, d_model), jnp.float32),
            c1w=nrm(ks[8], (kernel, d_model, d_ff), 0.05),
            c1b=nrm(ks[9], (1, d_ff), 0.01),
            c2w=nrm(ks[10], (kernel, d_ff, d_model), 0.05),
            c2b=nrm(ks[11], (1, d_model), 0.01),
            g2=jnp.ones((1, d_model), jnp.float32),
            be2=jnp.zeros((1, d_model), jnp.float32),
        )

    layers = [one(k) for k in jax.random.split(key, n_layers)]
    stacked = {name: jnp.stack([lyr[name] for lyr in layers])
               for name in layers[0]}
    for name in ("wq", "wk", "wv", "wo", "c1w", "c2w"):   # MXU operands -> bf16
        stacked[name] = stacked[name].astype(MXU_DTYPE)
    return stacked


def init_predictor(key, d_model, d_filter, kernel):
    ks = jax.random.split(key, 6)
    nrm = lambda kk, shape, s: jax.random.normal(kk, shape, jnp.float32) * s
    return dict(
        w1=nrm(ks[0], (kernel, d_model, d_filter), 0.05).astype(MXU_DTYPE),
        b1=nrm(ks[1], (1, d_filter), 0.01),
        g1=jnp.ones((1, d_filter), jnp.float32),
        be1=jnp.zeros((1, d_filter), jnp.float32),
        w2=nrm(ks[2], (kernel, d_filter, d_filter), 0.05).astype(MXU_DTYPE),
        b2=nrm(ks[3], (1, d_filter), 0.01),
        g2=jnp.ones((1, d_filter), jnp.float32),
        be2=jnp.zeros((1, d_filter), jnp.float32),
        wl=nrm(ks[4], (1, d_filter), 0.05).astype(MXU_DTYPE),
        bl=nrm(ks[5], (1, 1), 0.01),
    )


def init_params(key, cfg):
    keys = jax.random.split(key, 12)
    D = cfg["encoder_dim"]
    p = {}
    emb = jax.random.normal(keys[0], (cfg["vocab_size"], D), jnp.float32) * 0.05
    p["src_word_emb"] = emb.at[0].set(0.0)                  # padding_idx=0
    p["enc_pos_table"] = _sinusoid_table(cfg["max_seq_len"] + 1, D)
    p["dec_pos_table"] = _sinusoid_table(cfg["max_seq_len"] + 1, D)
    p["encoder"] = init_fft_stack(keys[1], cfg["n_enc_layers"], D, cfg["n_head"],
                                  cfg["d_k"], cfg["fft_filter"], cfg["fft_kernel"])
    p["decoder"] = init_fft_stack(keys[2], cfg["n_dec_layers"], D, cfg["n_head"],
                                  cfg["d_k"], cfg["fft_filter"], cfg["fft_kernel"])
    p["duration_predictor"] = init_predictor(keys[3], D, cfg["var_filter"], cfg["var_kernel"])
    p["pitch_predictor"] = init_predictor(keys[4], D, cfg["var_filter"], cfg["var_kernel"])
    p["energy_predictor"] = init_predictor(keys[5], D, cfg["var_filter"], cfg["var_kernel"])
    p["pitch_bins"] = jnp.linspace(0.0, 1.0, cfg["n_bins"] - 1)
    p["energy_bins"] = jnp.linspace(0.0, 1.0, cfg["n_bins"] - 1)
    p["pitch_emb"] = jax.random.normal(keys[6], (cfg["n_bins"], D), jnp.float32) * 0.05
    p["energy_emb"] = jax.random.normal(keys[7], (cfg["n_bins"], D), jnp.float32) * 0.05
    p["mel_w"] = (jax.random.normal(keys[8], (D, cfg["num_mels"]), jnp.float32)
                  * 0.05).astype(MXU_DTYPE)
    p["mel_b"] = jax.random.normal(keys[9], (1, cfg["num_mels"]), jnp.float32) * 0.01
    return p


# -----------------------------------------------------------------------------
# FastSpeech2 forward (training branch: all targets provided, dropout = 0)
# -----------------------------------------------------------------------------
def fastspeech2_forward(params, cfg, src_seq, src_pos, mel_pos, mel_max_length,
                        length_target, pitch_target, energy_target,
                        alpha=1.0, beta=1.0, gamma=1.0):
    del alpha, beta, gamma  # controls only used at inference
    nh, dk = cfg["n_head"], cfg["d_k"]
    kfft, kvar = cfg["fft_kernel"], cfg["var_kernel"]

    # ---- Encoder (one fused kernel over the whole stack) ----
    src_valid = (src_seq != 0).astype(jnp.float32)
    kmask = src_valid[:, None, :]            # (B, 1, T) key mask
    nonpad = src_valid[:, :, None]           # (B, T, 1)
    x0 = params["src_word_emb"][src_seq] + params["enc_pos_table"][src_pos]
    x = fft_stack(x0.astype(MXU_DTYPE), kmask, nonpad, params["encoder"],
                  n_head=nh, d_k=dk, kernel_size=kfft)       # bf16 activations

    # ---- Variance adaptor ----
    log_duration_prediction = variance_predictor(
        x, params["duration_predictor"], kernel_size=kvar)

    x_lr, _mel_len = length_regulator(x.astype(jnp.float32), length_target,
                                      mel_max_length)

    pitch_prediction = variance_predictor(
        x_lr.astype(MXU_DTYPE), params["pitch_predictor"], kernel_size=kvar)
    pitch_idx = jnp.digitize(pitch_target, params["pitch_bins"])
    x_lr = x_lr + params["pitch_emb"][pitch_idx]

    energy_prediction = variance_predictor(
        x_lr.astype(MXU_DTYPE), params["energy_predictor"], kernel_size=kvar)
    energy_idx = jnp.digitize(energy_target, params["energy_bins"])
    x_lr = x_lr + params["energy_emb"][energy_idx]

    # ---- Decoder + mel-length mask + mel projection (one fused kernel) ----
    mel_valid = (mel_pos != 0).astype(jnp.float32)
    dec_kmask = mel_valid[:, None, :]
    dec_nonpad = mel_valid[:, :, None]       # == mask_tensor mask (mel_pos = 1..len)
    y_in = (x_lr + params["dec_pos_table"][mel_pos]).astype(MXU_DTYPE)
    mel = fft_stack(y_in, dec_kmask, dec_nonpad, params["decoder"],
                    n_head=nh, d_k=dk, kernel_size=kfft,
                    mel_w=params["mel_w"], mel_b=params["mel_b"])
    return mel, log_duration_prediction, pitch_prediction, energy_prediction


# -----------------------------------------------------------------------------
# Main
# -----------------------------------------------------------------------------
if __name__ == "__main__":
    cfg = dict(
        vocab_size=50, max_seq_len=64,
        encoder_dim=32, n_enc_layers=2, n_dec_layers=2,
        n_head=2, d_k=16,
        fft_filter=64, fft_kernel=3,
        var_filter=32, var_kernel=3,
        n_bins=16, num_mels=8,
    )

    key = jax.random.PRNGKey(0)
    pkey, dkey = jax.random.split(key)
    params = init_params(pkey, cfg)

    B, T_src, mel_max_length = 2, 8, 16
    src_lens = np.array([8, 6])
    src_seq = np.array(jax.random.randint(dkey, (B, T_src), 1, cfg["vocab_size"]),
                       dtype=np.int32)
    for b in range(B):
        src_seq[b, src_lens[b]:] = 0
    src_pos = np.zeros((B, T_src), np.int32)
    for b in range(B):
        src_pos[b, :src_lens[b]] = np.arange(1, src_lens[b] + 1)

    length_target = np.zeros((B, T_src), np.int32)
    length_target[0, :8] = 2          # mel_len = 16
    length_target[1, :6] = 2          # mel_len = 12
    mel_lens = length_target.sum(axis=1)
    mel_pos = np.zeros((B, mel_max_length), np.int32)
    for b in range(B):
        mel_pos[b, :mel_lens[b]] = np.arange(1, mel_lens[b] + 1)

    k1, k2 = jax.random.split(jax.random.PRNGKey(1))
    pitch_target = jax.random.uniform(k1, (B, mel_max_length), jnp.float32)
    energy_target = jax.random.uniform(k2, (B, mel_max_length), jnp.float32)

    outs = fastspeech2_forward(
        params, cfg,
        jnp.asarray(src_seq), jnp.asarray(src_pos), jnp.asarray(mel_pos),
        mel_max_length, jnp.asarray(length_target), pitch_target, energy_target,
    )
    outs = jax.block_until_ready(outs)
    mel, log_dur, pitch_pred, energy_pred = outs
    assert mel.shape == (B, mel_max_length, cfg["num_mels"])
    assert log_dur.shape == (B, T_src)
    assert pitch_pred.shape == (B, mel_max_length)
    assert energy_pred.shape == (B, mel_max_length)
    assert bool(jnp.all(jnp.isfinite(mel)))
    assert bool(jnp.all(jnp.isfinite(log_dur)))
    assert bool(jnp.all(jnp.isfinite(pitch_pred)))
    assert bool(jnp.all(jnp.isfinite(energy_pred)))
    print("KERNEL_OK")
</pallas_src>

<mosaic_0001>
module attributes {stable_mosaic.version = 11 : i64} {
  func.func @_fft_stack_kernel(%arg0: i32, %arg1: memref<1x8x32xbf16, #tpu.memory_space<vmem>>, %arg2: memref<1x1x8xf32, #tpu.memory_space<vmem>>, %arg3: memref<1x8x1xf32, #tpu.memory_space<vmem>>, %arg4: memref<2x2x32x16xbf16, #tpu.memory_space<vmem>>, %arg5: memref<2x2x32x16xbf16, #tpu.memory_space<vmem>>, %arg6: memref<2x2x32x16xbf16, #tpu.memory_space<vmem>>, %arg7: memref<2x2x1x16xf32, #tpu.memory_space<vmem>>, %arg8: memref<2x2x1x16xf32, #tpu.memory_space<vmem>>, %arg9: memref<2x2x1x16xf32, #tpu.memory_space<vmem>>, %arg10: memref<2x2x16x32xbf16, #tpu.memory_space<vmem>>, %arg11: memref<2x1x32xf32, #tpu.memory_space<vmem>>, %arg12: memref<2x1x32xf32, #tpu.memory_space<vmem>>, %arg13: memref<2x1x32xf32, #tpu.memory_space<vmem>>, %arg14: memref<2x3x32x64xbf16, #tpu.memory_space<vmem>>, %arg15: memref<2x1x64xf32, #tpu.memory_space<vmem>>, %arg16: memref<2x3x64x32xbf16, #tpu.memory_space<vmem>>, %arg17: memref<2x1x32xf32, #tpu.memory_space<vmem>>, %arg18: memref<2x1x32xf32, #tpu.memory_space<vmem>>, %arg19: memref<2x1x32xf32, #tpu.memory_space<vmem>>, %arg20: memref<1x8x32xbf16, #tpu.memory_space<vmem>>) attributes {dimension_semantics = [#tpu.dimension_semantics<parallel>], iteration_bounds = array<i64: 2>, scalar_prefetch = 0 : i64, scratch_operands = 0 : i64, tpu.core_type = #tpu.core_type<tc>, window_params = [{transform_indices = @transform_0, window_bounds = array<i64: 1, 8, 32>}, {transform_indices = @transform_1, window_bounds = array<i64: 1, 1, 8>}, {transform_indices = @transform_2, window_bounds = array<i64: 1, 8, 1>}, {pipeline_mode = #tpu.pipeline_mode<synchronous>, transform_indices = @transform_3, window_bounds = array<i64: 2, 2, 32, 16>}, {pipeline_mode = #tpu.pipeline_mode<synchronous>, transform_indices = @transform_4, window_bounds = array<i64: 2, 2, 32, 16>}, {pipeline_mode = #tpu.pipeline_mode<synchronous>, transform_indices = @transform_5, window_bounds = array<i64: 2, 2, 32, 16>}, {pipeline_mode = #tpu.pipeline_mode<synchronous>, transform_indices = @transform_6, window_bounds = array<i64: 2, 2, 1, 16>}, {pipeline_mode = #tpu.pipeline_mode<synchronous>, transform_indices = @transform_7, window_bounds = array<i64: 2, 2, 1, 16>}, {pipeline_mode = #tpu.pipeline_mode<synchronous>, transform_indices = @transform_8, window_bounds = array<i64: 2, 2, 1, 16>}, {pipeline_mode = #tpu.pipeline_mode<synchronous>, transform_indices = @transform_9, window_bounds = array<i64: 2, 2, 16, 32>}, {pipeline_mode = #tpu.pipeline_mode<synchronous>, transform_indices = @transform_10, window_bounds = array<i64: 2, 1, 32>}, {pipeline_mode = #tpu.pipeline_mode<synchronous>, transform_indices = @transform_11, window_bounds = array<i64: 2, 1, 32>}, {pipeline_mode = #tpu.pipeline_mode<synchronous>, transform_indices = @transform_12, window_bounds = array<i64: 2, 1, 32>}, {pipeline_mode = #tpu.pipeline_mode<synchronous>, transform_indices = @transform_13, window_bounds = array<i64: 2, 3, 32, 64>}, {pipeline_mode = #tpu.pipeline_mode<synchronous>, transform_indices = @transform_14, window_bounds = array<i64: 2, 1, 64>}, {pipeline_mode = #tpu.pipeline_mode<synchronous>, transform_indices = @transform_15, window_bounds = array<i64: 2, 3, 64, 32>}, {pipeline_mode = #tpu.pipeline_mode<synchronous>, transform_indices = @transform_16, window_bounds = array<i64: 2, 1, 32>}, {pipeline_mode = #tpu.pipeline_mode<synchronous>, transform_indices = @transform_17, window_bounds = array<i64: 2, 1, 32>}, {pipeline_mode = #tpu.pipeline_mode<synchronous>, transform_indices = @transform_18, window_bounds = array<i64: 2, 1, 32>}, {transform_indices = @transform_19, window_bounds = array<i64: 1, 8, 32>}]} {
    %c0 = arith.constant 0 : index
    %c0_0 = arith.constant 0 : index
    %c0_1 = arith.constant 0 : index
    %0 = vector.load %arg1[%c0, %c0_0, %c0_1] : memref<1x8x32xbf16, #tpu.memory_space<vmem>>, vector<1x8x32xbf16>
    %1 = vector.shape_cast %0 : vector<1x8x32xbf16> to vector<8x32xbf16>
    %2 = arith.extf %1 : vector<8x32xbf16> to vector<8x32xf32>
    %c0_2 = arith.constant 0 : index
    %c0_3 = arith.constant 0 : index
    %c0_4 = arith.constant 0 : index
    %3 = vector.load %arg3[%c0_2, %c0_3, %c0_4] : memref<1x8x1xf32, #tpu.memory_space<vmem>>, vector<1x8x1xf32>
    %4 = vector.shape_cast %3 : vector<1x8x1xf32> to vector<8x1xf32>
    %c0_5 = arith.constant 0 : index
    %c0_6 = arith.constant 0 : index
    %c0_7 = arith.constant 0 : index
    %5 = vector.load %arg2[%c0_5, %c0_6, %c0_7] : memref<1x1x8xf32, #tpu.memory_space<vmem>>, vector<1x1x8xf32>
    %6 = vector.shape_cast %5 : vector<1x1x8xf32> to vector<1x8xf32>
    %cst = arith.constant 1.000000e+00 : f32
    %7 = vector.broadcast %cst : f32 to vector<1x8xf32>
    %8 = arith.subf %6, %7 : vector<1x8xf32>
    %cst_8 = arith.constant 1.000000e+09 : f32
    %9 = vector.broadcast %cst_8 : f32 to vector<1x8xf32>
    %10 = arith.mulf %8, %9 : vector<1x8xf32>
    %cst_9 = arith.constant 0.000000e+00 : f32
    %11 = vector.broadcast %cst_9 : f32 to vector<8x32xf32>
    %12 = arith.truncf %2 : vector<8x32xf32> to vector<8x32xbf16>
    %c0_10 = arith.constant 0 : index
    %c0_11 = arith.constant 0 : index
    %c0_12 = arith.constant 0 : index
    %c0_13 = arith.constant 0 : index
    %13 = vector.load %arg4[%c0_10, %c0_11, %c0_12, %c0_13] : memref<2x2x32x16xbf16, #tpu.memory_space<vmem>>, vector<1x1x32x16xbf16>
    %14 = vector.shape_cast %13 : vector<1x1x32x16xbf16> to vector<32x16xbf16>
    %cst_14 = arith.constant dense<0.000000e+00> : vector<8x16xf32>
    %15 = tpu.matmul %12, %14, %cst_14 {dimension_numbers = #tpu.dot_dimension_numbers<[1], [0], [0], [1], [0, 0, 1, 1], [], []>} : vector<8x32xbf16>, vector<32x16xbf16>, vector<8x16xf32> -> vector<8x16xf32>
    %c0_15 = arith.constant 0 : index
    %c0_16 = arith.constant 0 : index
    %c0_17 = arith.constant 0 : index
    %c0_18 = arith.constant 0 : index
    %16 = vector.load %arg7[%c0_15, %c0_16, %c0_17, %c0_18] : memref<2x2x1x16xf32, #tpu.memory_space<vmem>>, vector<1x1x1x16xf32>
    %17 = vector.shape_cast %16 : vector<1x1x1x16xf32> to vector<1x16xf32>
    %18 = vector.broadcast %17 : vector<1x16xf32> to vector<8x16xf32>
    %19 = arith.addf %15, %18 : vector<8x16xf32>
    %20 = arith.truncf %2 : vector<8x32xf32> to vector<8x32xbf16>
    %c0_19 = arith.constant 0 : index
    %c0_20 = arith.constant 0 : index
    %c0_21 = arith.constant 0 : index
    %c0_22 = arith.constant 0 : index
    %21 = vector.load %arg5[%c0_19, %c0_20, %c0_21, %c0_22] : memref<2x2x32x16xbf16, #tpu.memory_space<vmem>>, vector<1x1x32x16xbf16>
    %22 = vector.shape_cast %21 : vector<1x1x32x16xbf16> to vector<32x16xbf16>
    %cst_23 = arith.constant dense<0.000000e+00> : vector<8x16xf32>
    %23 = tpu.matmul %20, %22, %cst_23 {dimension_numbers = #tpu.dot_dimension_numbers<[1], [0], [0], [1], [0, 0, 1, 1], [], []>} : vector<8x32xbf16>, vector<32x16xbf16>, vector<8x16xf32> -> vector<8x16xf32>
    %c0_24 = arith.constant 0 : index
    %c0_25 = arith.constant 0 : index
    %c0_26 = arith.constant 0 : index
    %c0_27 = arith.constant 0 : index
    %24 = vector.load %arg8[%c0_24, %c0_25, %c0_26, %c0_27] : memref<2x2x1x16xf32, #tpu.memory_space<vmem>>, vector<1x1x1x16xf32>
    %25 = vector.shape_cast %24 : vector<1x1x1x16xf32> to vector<1x16xf32>
    %26 = vector.broadcast %25 : vector<1x16xf32> to vector<8x16xf32>
    %27 = arith.addf %23, %26 : vector<8x16xf32>
    %28 = arith.truncf %2 : vector<8x32xf32> to vector<8x32xbf16>
    %c0_28 = arith.constant 0 : index
    %c0_29 = arith.constant 0 : index
    %c0_30 = arith.constant 0 : index
    %c0_31 = arith.constant 0 : index
    %29 = vector.load %arg6[%c0_28, %c0_29, %c0_30, %c0_31] : memref<2x2x32x16xbf16, #tpu.memory_space<vmem>>, vector<1x1x32x16xbf16>
    %30 = vector.shape_cast %29 : vector<1x1x32x16xbf16> to vector<32x16xbf16>
    %cst_32 = arith.constant dense<0.000000e+00> : vector<8x16xf32>
    %31 = tpu.matmul %28, %30, %cst_32 {dimension_numbers = #tpu.dot_dimension_numbers<[1], [0], [0], [1], [0, 0, 1, 1], [], []>} : vector<8x32xbf16>, vector<32x16xbf16>, vector<8x16xf32> -> vector<8x16xf32>
    %c0_33 = arith.constant 0 : index
    %c0_34 = arith.constant 0 : index
    %c0_35 = arith.constant 0 : index
    %c0_36 = arith.constant 0 : index
    %32 = vector.load %arg9[%c0_33, %c0_34, %c0_35, %c0_36] : memref<2x2x1x16xf32, #tpu.memory_space<vmem>>, vector<1x1x1x16xf32>
    %33 = vector.shape_cast %32 : vector<1x1x1x16xf32> to vector<1x16xf32>
    %34 = vector.broadcast %33 : vector<1x16xf32> to vector<8x16xf32>
    %35 = arith.addf %31, %34 : vector<8x16xf32>
    %36 = arith.truncf %19 : vector<8x16xf32> to vector<8x16xbf16>
    %37 = arith.truncf %27 : vector<8x16xf32> to vector<8x16xbf16>
    %cst_37 = arith.constant dense<0.000000e+00> : vector<8x8xf32>
    %38 = tpu.matmul %36, %37, %cst_37 {dimension_numbers = #tpu.dot_dimension_numbers<[1], [1], [0], [0], [0, 0, 1, 0], [], []>} : vector<8x16xbf16>, vector<8x16xbf16>, vector<8x8xf32> -> vector<8x8xf32>
    %39 = vector.broadcast %10 : vector<1x8xf32> to vector<8x8xf32>
    %40 = arith.addf %38, %39 : vector<8x8xf32>
    %cst_38 = arith.constant dense<0xFF800000> : vector<8xf32>
    %41 = vector.multi_reduction <maximumf>, %40, %cst_38 [1] : vector<8x8xf32> to vector<8xf32>
    %42 = vector.shape_cast %41 : vector<8xf32> to vector<8x1xf32>
    %43 = vector.broadcast %42 : vector<8x1xf32> to vector<8x8xf32>
    %44 = arith.subf %40, %43 : vector<8x8xf32>
    %45 = math.exp %44 : vector<8x8xf32>
    %cst_39 = arith.constant dense<0.000000e+00> : vector<8xf32>
    %46 = vector.multi_reduction <add>, %45, %cst_39 [1] : vector<8x8xf32> to vector<8xf32>
    %47 = vector.shape_cast %46 : vector<8xf32> to vector<8x1xf32>
    %48 = tpu.reciprocal %47 {approx = true} : vector<8x1xf32> -> vector<8x1xf32>
    %49 = vector.broadcast %48 : vector<8x1xf32> to vector<8x8xf32>
    %50 = arith.mulf %45, %49 : vector<8x8xf32>
    %51 = arith.truncf %50 : vector<8x8xf32> to vector<8x8xbf16>
    %52 = arith.truncf %35 : vector<8x16xf32> to vector<8x16xbf16>
    %cst_40 = arith.constant dense<0.000000e+00> : vector<8x16xf32>
    %53 = tpu.matmul %51, %52, %cst_40 {dimension_numbers = #tpu.dot_dimension_numbers<[1], [0], [0], [1], [0, 0, 1, 1], [], []>} : vector<8x8xbf16>, vector<8x16xbf16>, vector<8x16xf32> -> vector<8x16xf32>
    %54 = arith.truncf %53 : vector<8x16xf32> to vector<8x16xbf16>
    %c0_41 = arith.constant 0 : index
    %c0_42 = arith.constant 0 : index
    %c0_43 = arith.constant 0 : index
    %c0_44 = arith.constant 0 : index
    %55 = vector.load %arg10[%c0_41, %c0_42, %c0_43, %c0_44] : memref<2x2x16x32xbf16, #tpu.memory_space<vmem>>, vector<1x1x16x32xbf16>
    %56 = vector.shape_cast %55 : vector<1x1x16x32xbf16> to vector<16x32xbf16>
    %cst_45 = arith.constant dense<0.000000e+00> : vector<8x32xf32>
    %57 = tpu.matmul %54, %56, %cst_45 {dimension_numbers = #tpu.dot_dimension_numbers<[1], [0], [0], [1], [0, 0, 1, 1], [], []>} : vector<8x16xbf16>, vector<16x32xbf16>, vector<8x32xf32> -> vector<8x32xf32>
    %58 = arith.addf %11, %57 : vector<8x32xf32>
    %59 = arith.truncf %2 : vector<8x32xf32> to vector<8x32xbf16>
    %c0_46 = arith.constant 0 : index
    %c1 = arith.constant 1 : index
    %c0_47 = arith.constant 0 : index
    %c0_48 = arith.constant 0 : index
    %60 = vector.load %arg4[%c0_46, %c1, %c0_47, %c0_48] : memref<2x2x32x16xbf16, #tpu.memory_space<vmem>>, vector<1x1x32x16xbf16>
    %61 = vector.shape_cast %60 : vector<1x1x32x16xbf16> to vector<32x16xbf16>
    %cst_49 = arith.constant dense<0.000000e+00> : vector<8x16xf32>
    %62 = tpu.matmul %59, %61, %cst_49 {dimension_numbers = #tpu.dot_dimension_numbers<[1], [0], [0], [1], [0, 0, 1, 1], [], []>} : vector<8x32xbf16>, vector<32x16xbf16>, vector<8x16xf32> -> vector<8x16xf32>
    %c0_50 = arith.constant 0 : index
    %c1_51 = arith.constant 1 : index
    %c0_52 = arith.constant 0 : index
    %c0_53 = arith.constant 0 : index
    %63 = vector.load %arg7[%c0_50, %c1_51, %c0_52, %c0_53] : memref<2x2x1x16xf32, #tpu.memory_space<vmem>>, vector<1x1x1x16xf32>
    %64 = vector.shape_cast %63 : vector<1x1x1x16xf32> to vector<1x16xf32>
    %65 = vector.broadcast %64 : vector<1x16xf32> to vector<8x16xf32>
    %66 = arith.addf %62, %65 : vector<8x16xf32>
    %67 = arith.truncf %2 : vector<8x32xf32> to vector<8x32xbf16>
    %c0_54 = arith.constant 0 : index
    %c1_55 = arith.constant 1 : index
    %c0_56 = arith.constant 0 : index
    %c0_57 = arith.constant 0 : index
    %68 = vector.load %arg5[%c0_54, %c1_55, %c0_56, %c0_57] : memref<2x2x32x16xbf16, #tpu.memory_space<vmem>>, vector<1x1x32x16xbf16>
    %69 = vector.shape_cast %68 : vector<1x1x32x16xbf16> to vector<32x16xbf16>
    %cst_58 = arith.constant dense<0.000000e+00> : vector<8x16xf32>
    %70 = tpu.matmul %67, %69, %cst_58 {dimension_numbers = #tpu.dot_dimension_numbers<[1], [0], [0], [1], [0, 0, 1, 1], [], []>} : vector<8x32xbf16>, vector<32x16xbf16>, vector<8x16xf32> -> vector<8x16xf32>
    %c0_59 = arith.constant 0 : index
    %c1_60 = arith.constant 1 : index
    %c0_61 = arith.constant 0 : index
    %c0_62 = arith.constant 0 : index
    %71 = vector.load %arg8[%c0_59, %c1_60, %c0_61, %c0_62] : memref<2x2x1x16xf32, #tpu.memory_space<vmem>>, vector<1x1x1x16xf32>
    %72 = vector.shape_cast %71 : vector<1x1x1x16xf32> to vector<1x16xf32>
    %73 = vector.broadcast %72 : vector<1x16xf32> to vector<8x16xf32>
    %74 = arith.addf %70, %73 : vector<8x16xf32>
    %75 = arith.truncf %2 : vector<8x32xf32> to vector<8x32xbf16>
    %c0_63 = arith.constant 0 : index
    %c1_64 = arith.constant 1 : index
    %c0_65 = arith.constant 0 : index
    %c0_66 = arith.constant 0 : index
    %76 = vector.load %arg6[%c0_63, %c1_64, %c0_65, %c0_66] : memref<2x2x32x16xbf16, #tpu.memory_space<vmem>>, vector<1x1x32x16xbf16>
    %77 = vector.shape_cast %76 : vector<1x1x32x16xbf16> to vector<32x16xbf16>
    %cst_67 = arith.constant dense<0.000000e+00> : vector<8x16xf32>
    %78 = tpu.matmul %75, %77, %cst_67 {dimension_numbers = #tpu.dot_dimension_numbers<[1], [0], [0], [1], [0, 0, 1, 1], [], []>} : vector<8x32xbf16>, vector<32x16xbf16>, vector<8x16xf32> -> vector<8x16xf32>
    %c0_68 = arith.constant 0 : index
    %c1_69 = arith.constant 1 : index
    %c0_70 = arith.constant 0 : index
    %c0_71 = arith.constant 0 : index
    %79 = vector.load %arg9[%c0_68, %c1_69, %c0_70, %c0_71] : memref<2x2x1x16xf32, #tpu.memory_space<vmem>>, vector<1x1x1x16xf32>
    %80 = vector.shape_cast %79 : vector<1x1x1x16xf32> to vector<1x16xf32>
    %81 = vector.broadcast %80 : vector<1x16xf32> to vector<8x16xf32>
    %82 = arith.addf %78, %81 : vector<8x16xf32>
    %83 = arith.truncf %66 : vector<8x16xf32> to vector<8x16xbf16>
    %84 = arith.truncf %74 : vector<8x16xf32> to vector<8x16xbf16>
    %cst_72 = arith.constant dense<0.000000e+00> : vector<8x8xf32>
    %85 = tpu.matmul %83, %84, %cst_72 {dimension_numbers = #tpu.dot_dimension_numbers<[1], [1], [0], [0], [0, 0, 1, 0], [], []>} : vector<8x16xbf16>, vector<8x16xbf16>, vector<8x8xf32> -> vector<8x8xf32>
    %86 = vector.broadcast %10 : vector<1x8xf32> to vector<8x8xf32>
    %87 = arith.addf %85, %86 : vector<8x8xf32>
    %cst_73 = arith.constant dense<0xFF800000> : vector<8xf32>
    %88 = vector.multi_reduction <maximumf>, %87, %cst_73 [1] : vector<8x8xf32> to vector<8xf32>
    %89 = vector.shape_cast %88 : vector<8xf32> to vector<8x1xf32>
    %90 = vector.broadcast %89 : vector<8x1xf32> to vector<8x8xf32>
    %91 = arith.subf %87, %90 : vector<8x8xf32>
    %92 = math.exp %91 : vector<8x8xf32>
    %cst_74 = arith.constant dense<0.000000e+00> : vector<8xf32>
    %93 = vector.multi_reduction <add>, %92, %cst_74 [1] : vector<8x8xf32> to vector<8xf32>
    %94 = vector.shape_cast %93 : vector<8xf32> to vector<8x1xf32>
    %95 = tpu.reciprocal %94 {approx = true} : vector<8x1xf32> -> vector<8x1xf32>
    %96 = vector.broadcast %95 : vector<8x1xf32> to vector<8x8xf32>
    %97 = arith.mulf %92, %96 : vector<8x8xf32>
    %98 = arith.truncf %97 : vector<8x8xf32> to vector<8x8xbf16>
    %99 = arith.truncf %82 : vector<8x16xf32> to vector<8x16xbf16>
    %cst_75 = arith.constant dense<0.000000e+00> : vector<8x16xf32>
    %100 = tpu.matmul %98, %99, %cst_75 {dimension_numbers = #tpu.dot_dimension_numbers<[1], [0], [0], [1], [0, 0, 1, 1], [], []>} : vector<8x8xbf16>, vector<8x16xbf16>, vector<8x16xf32> -> vector<8x16xf32>
    %101 = arith.truncf %100 : vector<8x16xf32> to vector<8x16xbf16>
    %c0_76 = arith.constant 0 : index
    %c1_77 = arith.constant 1 : index
    %c0_78 = arith.constant 0 : index
    %c0_79 = arith.constant 0 : index
    %102 = vector.load %arg10[%c0_76, %c1_77, %c0_78, %c0_79] : memref<2x2x16x32xbf16, #tpu.memory_space<vmem>>, vector<1x1x16x32xbf16>
    %103 = vector.shape_cast %102 : vector<1x1x16x32xbf16> to vector<16x32xbf16>
    %cst_80 = arith.constant dense<0.000000e+00> : vector<8x32xf32>
    %104 = tpu.matmul %101, %103, %cst_80 {dimension_numbers = #tpu.dot_dimension_numbers<[1], [0], [0], [1], [0, 0, 1, 1], [], []>} : vector<8x16xbf16>, vector<16x32xbf16>, vector<8x32xf32> -> vector<8x32xf32>
    %105 = arith.addf %58, %104 : vector<8x32xf32>
    %c0_81 = arith.constant 0 : index
    %c0_82 = arith.constant 0 : index
    %c0_83 = arith.constant 0 : index
    %106 = vector.load %arg11[%c0_81, %c0_82, %c0_83] : memref<2x1x32xf32, #tpu.memory_space<vmem>>, vector<1x1x32xf32>
    %107 = vector.shape_cast %106 : vector<1x1x32xf32> to vector<1x32xf32>
    %108 = vector.broadcast %107 : vector<1x32xf32> to vector<8x32xf32>
    %109 = arith.addf %105, %108 : vector<8x32xf32>
    %110 = arith.addf %109, %2 : vector<8x32xf32>
    %c0_84 = arith.constant 0 : index
    %c0_85 = arith.constant 0 : index
    %c0_86 = arith.constant 0 : index
    %111 = vector.load %arg12[%c0_84, %c0_85, %c0_86] : memref<2x1x32xf32, #tpu.memory_space<vmem>>, vector<1x1x32xf32>
    %112 = vector.shape_cast %111 : vector<1x1x32xf32> to vector<1x32xf32>
    %c0_87 = arith.constant 0 : index
    %c0_88 = arith.constant 0 : index
    %c0_89 = arith.constant 0 : index
    %113 = vector.load %arg13[%c0_87, %c0_88, %c0_89] : memref<2x1x32xf32, #tpu.memory_space<vmem>>, vector<1x1x32xf32>
    %114 = vector.shape_cast %113 : vector<1x1x32xf32> to vector<1x32xf32>
    %cst_90 = arith.constant dense<0.000000e+00> : vector<8xf32>
    %115 = vector.multi_reduction <add>, %110, %cst_90 [1] : vector<8x32xf32> to vector<8xf32>
    %116 = vector.shape_cast %115 : vector<8xf32> to vector<8x1xf32>
    %cst_91 = arith.constant 3.200000e+01 : f32
    %117 = vector.broadcast %cst_91 : f32 to vector<8x1xf32>
    %118 = arith.divf %116, %117 : vector<8x1xf32>
    %119 = vector.broadcast %118 : vector<8x1xf32> to vector<8x32xf32>
    %120 = arith.subf %110, %119 : vector<8x32xf32>
    %121 = arith.mulf %120, %120 : vector<8x32xf32>
    %cst_92 = arith.constant dense<0.000000e+00> : vector<8xf32>
    %122 = vector.multi_reduction <add>, %121, %cst_92 [1] : vector<8x32xf32> to vector<8xf32>
    %123 = vector.shape_cast %122 : vector<8xf32> to vector<8x1xf32>
    %cst_93 = arith.constant 3.200000e+01 : f32
    %124 = vector.broadcast %cst_93 : f32 to vector<8x1xf32>
    %125 = arith.divf %123, %124 : vector<8x1xf32>
    %126 = vector.broadcast %118 : vector<8x1xf32> to vector<8x32xf32>
    %127 = arith.subf %110, %126 : vector<8x32xf32>
    %cst_94 = arith.constant 9.99999974E-6 : f32
    %128 = vector.broadcast %cst_94 : f32 to vector<8x1xf32>
    %129 = arith.addf %125, %128 : vector<8x1xf32>
    %130 = math.rsqrt %129 : vector<8x1xf32>
    %131 = vector.broadcast %130 : vector<8x1xf32> to vector<8x32xf32>
    %132 = arith.mulf %127, %131 : vector<8x32xf32>
    %133 = vector.broadcast %112 : vector<1x32xf32> to vector<8x32xf32>
    %134 = arith.mulf %132, %133 : vector<8x32xf32>
    %135 = vector.broadcast %114 : vector<1x32xf32> to vector<8x32xf32>
    %136 = arith.addf %134, %135 : vector<8x32xf32>
    %137 = vector.broadcast %4 : vector<8x1xf32> to vector<8x32xf32>
    %138 = arith.mulf %136, %137 : vector<8x32xf32>
    %cst_95 = arith.constant 0.000000e+00 : f32
    %139 = vector.broadcast %cst_95 : f32 to vector<8x64xf32>
    %cst_96 = arith.constant 0.000000e+00 : f32
    %140 = vector.broadcast %cst_96 : f32 to vector<1x32xf32>
    %141 = vector.extract_strided_slice %138 {offsets = [0, 0], sizes = [7, 32], strides = [1, 1]} : vector<8x32xf32> to vector<7x32xf32>
    %142 = tpu.concatenate %140, %141 in 0 : vector<1x32xf32>, vector<7x32xf32> -> vector<8x32xf32>
    %143 = arith.truncf %142 : vector<8x32xf32> to vector<8x32xbf16>
    %c0_97 = arith.constant 0 : index
    %c0_98 = arith.constant 0 : index
    %c0_99 = arith.constant 0 : index
    %c0_100 = arith.constant 0 : index
    %144 = vector.load %arg14[%c0_97, %c0_98, %c0_99, %c0_100] : memref<2x3x32x64xbf16, #tpu.memory_space<vmem>>, vector<1x1x32x64xbf16>
    %145 = vector.shape_cast %144 : vector<1x1x32x64xbf16> to vector<32x64xbf16>
    %cst_101 = arith.constant dense<0.000000e+00> : vector<8x64xf32>
    %146 = tpu.matmul %143, %145, %cst_101 {dimension_numbers = #tpu.dot_dimension_numbers<[1], [0], [0], [1], [0, 0, 1, 1], [], []>} : vector<8x32xbf16>, vector<32x64xbf16>, vector<8x64xf32> -> vector<8x64xf32>
    %147 = arith.addf %139, %146 : vector<8x64xf32>
    %148 = arith.truncf %138 : vector<8x32xf32> to vector<8x32xbf16>
    %c0_102 = arith.constant 0 : index
    %c1_103 = arith.constant 1 : index
    %c0_104 = arith.constant 0 : index
    %c0_105 = arith.constant 0 : index
    %149 = vector.load %arg14[%c0_102, %c1_103, %c0_104, %c0_105] : memref<2x3x32x64xbf16, #tpu.memory_space<vmem>>, vector<1x1x32x64xbf16>
    %150 = vector.shape_cast %149 : vector<1x1x32x64xbf16> to vector<32x64xbf16>
    %cst_106 = arith.constant dense<0.000000e+00> : vector<8x64xf32>
    %151 = tpu.matmul %148, %150, %cst_106 {dimension_numbers = #tpu.dot_dimension_numbers<[1], [0], [0], [1], [0, 0, 1, 1], [], []>} : vector<8x32xbf16>, vector<32x64xbf16>, vector<8x64xf32> -> vector<8x64xf32>
    %152 = arith.addf %147, %151 : vector<8x64xf32>
    %cst_107 = arith.constant 0.000000e+00 : f32
    %153 = vector.broadcast %cst_107 : f32 to vector<1x32xf32>
    %154 = vector.extract_strided_slice %138 {offsets = [1, 0], sizes = [7, 32], strides = [1, 1]} : vector<8x32xf32> to vector<7x32xf32>
    %155 = tpu.concatenate %154, %153 in 0 : vector<7x32xf32>, vector<1x32xf32> -> vector<8x32xf32>
    %156 = arith.truncf %155 : vector<8x32xf32> to vector<8x32xbf16>
    %c0_108 = arith.constant 0 : index
    %c2 = arith.constant 2 : index
    %c0_109 = arith.constant 0 : index
    %c0_110 = arith.constant 0 : index
    %157 = vector.load %arg14[%c0_108, %c2, %c0_109, %c0_110] : memref<2x3x32x64xbf16, #tpu.memory_space<vmem>>, vector<1x1x32x64xbf16>
    %158 = vector.shape_cast %157 : vector<1x1x32x64xbf16> to vector<32x64xbf16>
    %cst_111 = arith.constant dense<0.000000e+00> : vector<8x64xf32>
    %159 = tpu.matmul %156, %158, %cst_111 {dimension_numbers = #tpu.dot_dimension_numbers<[1], [0], [0], [1], [0, 0, 1, 1], [], []>} : vector<8x32xbf16>, vector<32x64xbf16>, vector<8x64xf32> -> vector<8x64xf32>
    %160 = arith.addf %152, %159 : vector<8x64xf32>
    %c0_112 = arith.constant 0 : index
    %c0_113 = arith.constant 0 : index
    %c0_114 = arith.constant 0 : index
    %161 = vector.load %arg15[%c0_112, %c0_113, %c0_114] : memref<2x1x64xf32, #tpu.memory_space<vmem>>, vector<1x1x64xf32>
    %162 = vector.shape_cast %161 : vector<1x1x64xf32> to vector<1x64xf32>
    %163 = vector.broadcast %162 : vector<1x64xf32> to vector<8x64xf32>
    %164 = arith.addf %160, %163 : vector<8x64xf32>
    %cst_115 = arith.constant 0.000000e+00 : f32
    %165 = vector.broadcast %cst_115 : f32 to vector<8x64xf32>
    %166 = arith.maximumf %164, %165 : vector<8x64xf32>
    %cst_116 = arith.constant 0.000000e+00 : f32
    %167 = vector.broadcast %cst_116 : f32 to vector<8x32xf32>
    %cst_117 = arith.constant 0.000000e+00 : f32
    %168 = vector.broadcast %cst_117 : f32 to vector<1x64xf32>
    %169 = vector.extract_strided_slice %166 {offsets = [0, 0], sizes = [7, 64], strides = [1, 1]} : vector<8x64xf32> to vector<7x64xf32>
    %170 = tpu.concatenate %168, %169 in 0 : vector<1x64xf32>, vector<7x64xf32> -> vector<8x64xf32>
    %171 = arith.truncf %170 : vector<8x64xf32> to vector<8x64xbf16>
    %c0_118 = arith.constant 0 : index
    %c0_119 = arith.constant 0 : index
    %c0_120 = arith.constant 0 : index
    %c0_121 = arith.constant 0 : index
    %172 = vector.load %arg16[%c0_118, %c0_119, %c0_120, %c0_121] : memref<2x3x64x32xbf16, #tpu.memory_space<vmem>>, vector<1x1x64x32xbf16>
    %173 = vector.shape_cast %172 : vector<1x1x64x32xbf16> to vector<64x32xbf16>
    %cst_122 = arith.constant dense<0.000000e+00> : vector<8x32xf32>
    %174 = tpu.matmul %171, %173, %cst_122 {dimension_numbers = #tpu.dot_dimension_numbers<[1], [0], [0], [1], [0, 0, 1, 1], [], []>} : vector<8x64xbf16>, vector<64x32xbf16>, vector<8x32xf32> -> vector<8x32xf32>
    %175 = arith.addf %167, %174 : vector<8x32xf32>
    %176 = arith.truncf %166 : vector<8x64xf32> to vector<8x64xbf16>
    %c0_123 = arith.constant 0 : index
    %c1_124 = arith.constant 1 : index
    %c0_125 = arith.constant 0 : index
    %c0_126 = arith.constant 0 : index
    %177 = vector.load %arg16[%c0_123, %c1_124, %c0_125, %c0_126] : memref<2x3x64x32xbf16, #tpu.memory_space<vmem>>, vector<1x1x64x32xbf16>
    %178 = vector.shape_cast %177 : vector<1x1x64x32xbf16> to vector<64x32xbf16>
    %cst_127 = arith.constant dense<0.000000e+00> : vector<8x32xf32>
    %179 = tpu.matmul %176, %178, %cst_127 {dimension_numbers = #tpu.dot_dimension_numbers<[1], [0], [0], [1], [0, 0, 1, 1], [], []>} : vector<8x64xbf16>, vector<64x32xbf16>, vector<8x32xf32> -> vector<8x32xf32>
    %180 = arith.addf %175, %179 : vector<8x32xf32>
    %cst_128 = arith.constant 0.000000e+00 : f32
    %181 = vector.broadcast %cst_128 : f32 to vector<1x64xf32>
    %182 = vector.extract_strided_slice %166 {offsets = [1, 0], sizes = [7, 64], strides = [1, 1]} : vector<8x64xf32> to vector<7x64xf32>
    %183 = tpu.concatenate %182, %181 in 0 : vector<7x64xf32>, vector<1x64xf32> -> vector<8x64xf32>
    %184 = arith.truncf %183 : vector<8x64xf32> to vector<8x64xbf16>
    %c0_129 = arith.constant 0 : index
    %c2_130 = arith.constant 2 : index
    %c0_131 = arith.constant 0 : index
    %c0_132 = arith.constant 0 : index
    %185 = vector.load %arg16[%c0_129, %c2_130, %c0_131, %c0_132] : memref<2x3x64x32xbf16, #tpu.memory_space<vmem>>, vector<1x1x64x32xbf16>
    %186 = vector.shape_cast %185 : vector<1x1x64x32xbf16> to vector<64x32xbf16>
    %cst_133 = arith.constant dense<0.000000e+00> : vector<8x32xf32>
    %187 = tpu.matmul %184, %186, %cst_133 {dimension_numbers = #tpu.dot_dimension_numbers<[1], [0], [0], [1], [0, 0, 1, 1], [], []>} : vector<8x64xbf16>, vector<64x32xbf16>, vector<8x32xf32> -> vector<8x32xf32>
    %188 = arith.addf %180, %187 : vector<8x32xf32>
    %c0_134 = arith.constant 0 : index
    %c0_135 = arith.constant 0 : index
    %c0_136 = arith.constant 0 : index
    %189 = vector.load %arg17[%c0_134, %c0_135, %c0_136] : memref<2x1x32xf32, #tpu.memory_space<vmem>>, vector<1x1x32xf32>
    %190 = vector.shape_cast %189 : vector<1x1x32xf32> to vector<1x32xf32>
    %191 = vector.broadcast %190 : vector<1x32xf32> to vector<8x32xf32>
    %192 = arith.addf %188, %191 : vector<8x32xf32>
    %193 = arith.addf %192, %138 : vector<8x32xf32>
    %c0_137 = arith.constant 0 : index
    %c0_138 = arith.constant 0 : index
    %c0_139 = arith.constant 0 : index
    %194 = vector.load %arg18[%c0_137, %c0_138, %c0_139] : memref<2x1x32xf32, #tpu.memory_space<vmem>>, vector<1x1x32xf32>
    %195 = vector.shape_cast %194 : vector<1x1x32xf32> to vector<1x32xf32>
    %c0_140 = arith.constant 0 : index
    %c0_141 = arith.constant 0 : index
    %c0_142 = arith.constant 0 : index
    %196 = vector.load %arg19[%c0_140, %c0_141, %c0_142] : memref<2x1x32xf32, #tpu.memory_space<vmem>>, vector<1x1x32xf32>
    %197 = vector.shape_cast %196 : vector<1x1x32xf32> to vector<1x32xf32>
    %cst_143 = arith.constant dense<0.000000e+00> : vector<8xf32>
    %198 = vector.multi_reduction <add>, %193, %cst_143 [1] : vector<8x32xf32> to vector<8xf32>
    %199 = vector.shape_cast %198 : vector<8xf32> to vector<8x1xf32>
    %cst_144 = arith.constant 3.200000e+01 : f32
    %200 = vector.broadcast %cst_144 : f32 to vector<8x1xf32>
    %201 = arith.divf %199, %200 : vector<8x1xf32>
    %202 = vector.broadcast %201 : vector<8x1xf32> to vector<8x32xf32>
    %203 = arith.subf %193, %202 : vector<8x32xf32>
    %204 = arith.mulf %203, %203 : vector<8x32xf32>
    %cst_145 = arith.constant dense<0.000000e+00> : vector<8xf32>
    %205 = vector.multi_reduction <add>, %204, %cst_145 [1] : vector<8x32xf32> to vector<8xf32>
    %206 = vector.shape_cast %205 : vector<8xf32> to vector<8x1xf32>
    %cst_146 = arith.constant 3.200000e+01 : f32
    %207 = vector.broadcast %cst_146 : f32 to vector<8x1xf32>
    %208 = arith.divf %206, %207 : vector<8x1xf32>
    %209 = vector.broadcast %201 : vector<8x1xf32> to vector<8x32xf32>
    %210 = arith.subf %193, %209 : vector<8x32xf32>
    %cst_147 = arith.constant 9.99999974E-6 : f32
    %211 = vector.broadcast %cst_147 : f32 to vector<8x1xf32>
    %212 = arith.addf %208, %211 : vector<8x1xf32>
    %213 = math.rsqrt %212 : vector<8x1xf32>
    %214 = vector.broadcast %213 : vector<8x1xf32> to vector<8x32xf32>
    %215 = arith.mulf %210, %214 : vector<8x32xf32>
    %216 = vector.broadcast %195 : vector<1x32xf32> to vector<8x32xf32>
    %217 = arith.mulf %215, %216 : vector<8x32xf32>
    %218 = vector.broadcast %197 : vector<1x32xf32> to vector<8x32xf32>
    %219 = arith.addf %217, %218 : vector<8x32xf32>
    %220 = vector.broadcast %4 : vector<8x1xf32> to vector<8x32xf32>
    %221 = arith.mulf %219, %220 : vector<8x32xf32>
    %cst_148 = arith.constant 0.000000e+00 : f32
    %222 = vector.broadcast %cst_148 : f32 to vector<8x32xf32>
    %223 = arith.truncf %221 : vector<8x32xf32> to vector<8x32xbf16>
    %c1_149 = arith.constant 1 : index
    %c0_150 = arith.constant 0 : index
    %c0_151 = arith.constant 0 : index
    %c0_152 = arith.constant 0 : index
    %224 = vector.load %arg4[%c1_149, %c0_150, %c0_151, %c0_152] : memref<2x2x32x16xbf16, #tpu.memory_space<vmem>>, vector<1x1x32x16xbf16>
    %225 = vector.shape_cast %224 : vector<1x1x32x16xbf16> to vector<32x16xbf16>
    %cst_153 = arith.constant dense<0.000000e+00> : vector<8x16xf32>
    %226 = tpu.matmul %223, %225, %cst_153 {dimension_numbers = #tpu.dot_dimension_numbers<[1], [0], [0], [1], [0, 0, 1, 1], [], []>} : vector<8x32xbf16>, vector<32x16xbf16>, vector<8x16xf32> -> vector<8x16xf32>
    %c1_154 = arith.constant 1 : index
    %c0_155 = arith.constant 0 : index
    %c0_156 = arith.constant 0 : index
    %c0_157 = arith.constant 0 : index
    %227 = vector.load %arg7[%c1_154, %c0_155, %c0_156, %c0_157] : memref<2x2x1x16xf32, #tpu.memory_space<vmem>>, vector<1x1x1x16xf32>
    %228 = vector.shape_cast %227 : vector<1x1x1x16xf32> to vector<1x16xf32>
    %229 = vector.broadcast %228 : vector<1x16xf32> to vector<8x16xf32>
    %230 = arith.addf %226, %229 : vector<8x16xf32>
    %231 = arith.truncf %221 : vector<8x32xf32> to vector<8x32xbf16>
    %c1_158 = arith.constant 1 : index
    %c0_159 = arith.constant 0 : index
    %c0_160 = arith.constant 0 : index
    %c0_161 = arith.constant 0 : index
    %232 = vector.load %arg5[%c1_158, %c0_159, %c0_160, %c0_161] : memref<2x2x32x16xbf16, #tpu.memory_space<vmem>>, vector<1x1x32x16xbf16>
    %233 = vector.shape_cast %232 : vector<1x1x32x16xbf16> to vector<32x16xbf16>
    %cst_162 = arith.constant dense<0.000000e+00> : vector<8x16xf32>
    %234 = tpu.matmul %231, %233, %cst_162 {dimension_numbers = #tpu.dot_dimension_numbers<[1], [0], [0], [1], [0, 0, 1, 1], [], []>} : vector<8x32xbf16>, vector<32x16xbf16>, vector<8x16xf32> -> vector<8x16xf32>
    %c1_163 = arith.constant 1 : index
    %c0_164 = arith.constant 0 : index
    %c0_165 = arith.constant 0 : index
    %c0_166 = arith.constant 0 : index
    %235 = vector.load %arg8[%c1_163, %c0_164, %c0_165, %c0_166] : memref<2x2x1x16xf32, #tpu.memory_space<vmem>>, vector<1x1x1x16xf32>
    %236 = vector.shape_cast %235 : vector<1x1x1x16xf32> to vector<1x16xf32>
    %237 = vector.broadcast %236 : vector<1x16xf32> to vector<8x16xf32>
    %238 = arith.addf %234, %237 : vector<8x16xf32>
    %239 = arith.truncf %221 : vector<8x32xf32> to vector<8x32xbf16>
    %c1_167 = arith.constant 1 : index
    %c0_168 = arith.constant 0 : index
    %c0_169 = arith.constant 0 : index
    %c0_170 = arith.constant 0 : index
    %240 = vector.load %arg6[%c1_167, %c0_168, %c0_169, %c0_170] : memref<2x2x32x16xbf16, #tpu.memory_space<vmem>>, vector<1x1x32x16xbf16>
    %241 = vector.shape_cast %240 : vector<1x1x32x16xbf16> to vector<32x16xbf16>
    %cst_171 = arith.constant dense<0.000000e+00> : vector<8x16xf32>
    %242 = tpu.matmul %239, %241, %cst_171 {dimension_numbers = #tpu.dot_dimension_numbers<[1], [0], [0], [1], [0, 0, 1, 1], [], []>} : vector<8x32xbf16>, vector<32x16xbf16>, vector<8x16xf32> -> vector<8x16xf32>
    %c1_172 = arith.constant 1 : index
    %c0_173 = arith.constant 0 : index
    %c0_174 = arith.constant 0 : index
    %c0_175 = arith.constant 0 : index
    %243 = vector.load %arg9[%c1_172, %c0_173, %c0_174, %c0_175] : memref<2x2x1x16xf32, #tpu.memory_space<vmem>>, vector<1x1x1x16xf32>
    %244 = vector.shape_cast %243 : vector<1x1x1x16xf32> to vector<1x16xf32>
    %245 = vector.broadcast %244 : vector<1x16xf32> to vector<8x16xf32>
    %246 = arith.addf %242, %245 : vector<8x16xf32>
    %247 = arith.truncf %230 : vector<8x16xf32> to vector<8x16xbf16>
    %248 = arith.truncf %238 : vector<8x16xf32> to vector<8x16xbf16>
    %cst_176 = arith.constant dense<0.000000e+00> : vector<8x8xf32>
    %249 = tpu.matmul %247, %248, %cst_176 {dimension_numbers = #tpu.dot_dimension_numbers<[1], [1], [0], [0], [0, 0, 1, 0], [], []>} : vector<8x16xbf16>, vector<8x16xbf16>, vector<8x8xf32> -> vector<8x8xf32>
    %250 = vector.broadcast %10 : vector<1x8xf32> to vector<8x8xf32>
    %251 = arith.addf %249, %250 : vector<8x8xf32>
    %cst_177 = arith.constant dense<0xFF800000> : vector<8xf32>
    %252 = vector.multi_reduction <maximumf>, %251, %cst_177 [1] : vector<8x8xf32> to vector<8xf32>
    %253 = vector.shape_cast %252 : vector<8xf32> to vector<8x1xf32>
    %254 = vector.broadcast %253 : vector<8x1xf32> to vector<8x8xf32>
    %255 = arith.subf %251, %254 : vector<8x8xf32>
    %256 = math.exp %255 : vector<8x8xf32>
    %cst_178 = arith.constant dense<0.000000e+00> : vector<8xf32>
    %257 = vector.multi_reduction <add>, %256, %cst_178 [1] : vector<8x8xf32> to vector<8xf32>
    %258 = vector.shape_cast %257 : vector<8xf32> to vector<8x1xf32>
    %259 = tpu.reciprocal %258 {approx = true} : vector<8x1xf32> -> vector<8x1xf32>
    %260 = vector.broadcast %259 : vector<8x1xf32> to vector<8x8xf32>
    %261 = arith.mulf %256, %260 : vector<8x8xf32>
    %262 = arith.truncf %261 : vector<8x8xf32> to vector<8x8xbf16>
    %263 = arith.truncf %246 : vector<8x16xf32> to vector<8x16xbf16>
    %cst_179 = arith.constant dense<0.000000e+00> : vector<8x16xf32>
    %264 = tpu.matmul %262, %263, %cst_179 {dimension_numbers = #tpu.dot_dimension_numbers<[1], [0], [0], [1], [0, 0, 1, 1], [], []>} : vector<8x8xbf16>, vector<8x16xbf16>, vector<8x16xf32> -> vector<8x16xf32>
    %265 = arith.truncf %264 : vector<8x16xf32> to vector<8x16xbf16>
    %c1_180 = arith.constant 1 : index
    %c0_181 = arith.constant 0 : index
    %c0_182 = arith.constant 0 : index
    %c0_183 = arith.constant 0 : index
    %266 = vector.load %arg10[%c1_180, %c0_181, %c0_182, %c0_183] : memref<2x2x16x32xbf16, #tpu.memory_space<vmem>>, vector<1x1x16x32xbf16>
    %267 = vector.shape_cast %266 : vector<1x1x16x32xbf16> to vector<16x32xbf16>
    %cst_184 = arith.constant dense<0.000000e+00> : vector<8x32xf32>
    %268 = tpu.matmul %265, %267, %cst_184 {dimension_numbers = #tpu.dot_dimension_numbers<[1], [0], [0], [1], [0, 0, 1, 1], [], []>} : vector<8x16xbf16>, vector<16x32xbf16>, vector<8x32xf32> -> vector<8x32xf32>
    %269 = arith.addf %222, %268 : vector<8x32xf32>
    %270 = arith.truncf %221 : vector<8x32xf32> to vector<8x32xbf16>
    %c1_185 = arith.constant 1 : index
    %c1_186 = arith.constant 1 : index
    %c0_187 = arith.constant 0 : index
    %c0_188 = arith.constant 0 : index
    %271 = vector.load %arg4[%c1_185, %c1_186, %c0_187, %c0_188] : memref<2x2x32x16xbf16, #tpu.memory_space<vmem>>, vector<1x1x32x16xbf16>
    %272 = vector.shape_cast %271 : vector<1x1x32x16xbf16> to vector<32x16xbf16>
    %cst_189 = arith.constant dense<0.000000e+00> : vector<8x16xf32>
    %273 = tpu.matmul %270, %272, %cst_189 {dimension_numbers = #tpu.dot_dimension_numbers<[1], [0], [0], [1], [0, 0, 1, 1], [], []>} : vector<8x32xbf16>, vector<32x16xbf16>, vector<8x16xf32> -> vector<8x16xf32>
    %c1_190 = arith.constant 1 : index
    %c1_191 = arith.constant 1 : index
    %c0_192 = arith.constant 0 : index
    %c0_193 = arith.constant 0 : index
    %274 = vector.load %arg7[%c1_190, %c1_191, %c0_192, %c0_193] : memref<2x2x1x16xf32, #tpu.memory_space<vmem>>, vector<1x1x1x16xf32>
    %275 = vector.shape_cast %274 : vector<1x1x1x16xf32> to vector<1x16xf32>
    %276 = vector.broadcast %275 : vector<1x16xf32> to vector<8x16xf32>
    %277 = arith.addf %273, %276 : vector<8x16xf32>
    %278 = arith.truncf %221 : vector<8x32xf32> to vector<8x32xbf16>
    %c1_194 = arith.constant 1 : index
    %c1_195 = arith.constant 1 : index
    %c0_196 = arith.constant 0 : index
    %c0_197 = arith.constant 0 : index
    %279 = vector.load %arg5[%c1_194, %c1_195, %c0_196, %c0_197] : memref<2x2x32x16xbf16, #tpu.memory_space<vmem>>, vector<1x1x32x16xbf16>
    %280 = vector.shape_cast %279 : vector<1x1x32x16xbf16> to vector<32x16xbf16>
    %cst_198 = arith.constant dense<0.000000e+00> : vector<8x16xf32>
    %281 = tpu.matmul %278, %280, %cst_198 {dimension_numbers = #tpu.dot_dimension_numbers<[1], [0], [0], [1], [0, 0, 1, 1], [], []>} : vector<8x32xbf16>, vector<32x16xbf16>, vector<8x16xf32> -> vector<8x16xf32>
    %c1_199 = arith.constant 1 : index
    %c1_200 = arith.constant 1 : index
    %c0_201 = arith.constant 0 : index
    %c0_202 = arith.constant 0 : index
    %282 = vector.load %arg8[%c1_199, %c1_200, %c0_201, %c0_202] : memref<2x2x1x16xf32, #tpu.memory_space<vmem>>, vector<1x1x1x16xf32>
    %283 = vector.shape_cast %282 : vector<1x1x1x16xf32> to vector<1x16xf32>
    %284 = vector.broadcast %283 : vector<1x16xf32> to vector<8x16xf32>
    %285 = arith.addf %281, %284 : vector<8x16xf32>
    %286 = arith.truncf %221 : vector<8x32xf32> to vector<8x32xbf16>
    %c1_203 = arith.constant 1 : index
    %c1_204 = arith.constant 1 : index
    %c0_205 = arith.constant 0 : index
    %c0_206 = arith.constant 0 : index
    %287 = vector.load %arg6[%c1_203, %c1_204, %c0_205, %c0_206] : memref<2x2x32x16xbf16, #tpu.memory_space<vmem>>, vector<1x1x32x16xbf16>
    %288 = vector.shape_cast %287 : vector<1x1x32x16xbf16> to vector<32x16xbf16>
    %cst_207 = arith.constant dense<0.000000e+00> : vector<8x16xf32>
    %289 = tpu.matmul %286, %288, %cst_207 {dimension_numbers = #tpu.dot_dimension_numbers<[1], [0], [0], [1], [0, 0, 1, 1], [], []>} : vector<8x32xbf16>, vector<32x16xbf16>, vector<8x16xf32> -> vector<8x16xf32>
    %c1_208 = arith.constant 1 : index
    %c1_209 = arith.constant 1 : index
    %c0_210 = arith.constant 0 : index
    %c0_211 = arith.constant 0 : index
    %290 = vector.load %arg9[%c1_208, %c1_209, %c0_210, %c0_211] : memref<2x2x1x16xf32, #tpu.memory_space<vmem>>, vector<1x1x1x16xf32>
    %291 = vector.shape_cast %290 : vector<1x1x1x16xf32> to vector<1x16xf32>
    %292 = vector.broadcast %291 : vector<1x16xf32> to vector<8x16xf32>
    %293 = arith.addf %289, %292 : vector<8x16xf32>
    %294 = arith.truncf %277 : vector<8x16xf32> to vector<8x16xbf16>
    %295 = arith.truncf %285 : vector<8x16xf32> to vector<8x16xbf16>
    %cst_212 = arith.constant dense<0.000000e+00> : vector<8x8xf32>
    %296 = tpu.matmul %294, %295, %cst_212 {dimension_numbers = #tpu.dot_dimension_numbers<[1], [1], [0], [0], [0, 0, 1, 0], [], []>} : vector<8x16xbf16>, vector<8x16xbf16>, vector<8x8xf32> -> vector<8x8xf32>
    %297 = vector.broadcast %10 : vector<1x8xf32> to vector<8x8xf32>
    %298 = arith.addf %296, %297 : vector<8x8xf32>
    %cst_213 = arith.constant dense<0xFF800000> : vector<8xf32>
    %299 = vector.multi_reduction <maximumf>, %298, %cst_213 [1] : vector<8x8xf32> to vector<8xf32>
    %300 = vector.shape_cast %299 : vector<8xf32> to vector<8x1xf32>
    %301 = vector.broadcast %300 : vector<8x1xf32> to vector<8x8xf32>
    %302 = arith.subf %298, %301 : vector<8x8xf32>
    %303 = math.exp %302 : vector<8x8xf32>
    %cst_214 = arith.constant dense<0.000000e+00> : vector<8xf32>
    %304 = vector.multi_reduction <add>, %303, %cst_214 [1] : vector<8x8xf32> to vector<8xf32>
    %305 = vector.shape_cast %304 : vector<8xf32> to vector<8x1xf32>
    %306 = tpu.reciprocal %305 {approx = true} : vector<8x1xf32> -> vector<8x1xf32>
    %307 = vector.broadcast %306 : vector<8x1xf32> to vector<8x8xf32>
    %308 = arith.mulf %303, %307 : vector<8x8xf32>
    %309 = arith.truncf %308 : vector<8x8xf32> to vector<8x8xbf16>
    %310 = arith.truncf %293 : vector<8x16xf32> to vector<8x16xbf16>
    %cst_215 = arith.constant dense<0.000000e+00> : vector<8x16xf32>
    %311 = tpu.matmul %309, %310, %cst_215 {dimension_numbers = #tpu.dot_dimension_numbers<[1], [0], [0], [1], [0, 0, 1, 1], [], []>} : vector<8x8xbf16>, vector<8x16xbf16>, vector<8x16xf32> -> vector<8x16xf32>
    %312 = arith.truncf %311 : vector<8x16xf32> to vector<8x16xbf16>
    %c1_216 = arith.constant 1 : index
    %c1_217 = arith.constant 1 : index
    %c0_218 = arith.constant 0 : index
    %c0_219 = arith.constant 0 : index
    %313 = vector.load %arg10[%c1_216, %c1_217, %c0_218, %c0_219] : memref<2x2x16x32xbf16, #tpu.memory_space<vmem>>, vector<1x1x16x32xbf16>
    %314 = vector.shape_cast %313 : vector<1x1x16x32xbf16> to vector<16x32xbf16>
    %cst_220 = arith.constant dense<0.000000e+00> : vector<8x32xf32>
    %315 = tpu.matmul %312, %314, %cst_220 {dimension_numbers = #tpu.dot_dimension_numbers<[1], [0], [0], [1], [0, 0, 1, 1], [], []>} : vector<8x16xbf16>, vector<16x32xbf16>, vector<8x32xf32> -> vector<8x32xf32>
    %316 = arith.addf %269, %315 : vector<8x32xf32>
    %c1_221 = arith.constant 1 : index
    %c0_222 = arith.constant 0 : index
    %c0_223 = arith.constant 0 : index
    %317 = vector.load %arg11[%c1_221, %c0_222, %c0_223] : memref<2x1x32xf32, #tpu.memory_space<vmem>>, vector<1x1x32xf32>
    %318 = vector.shape_cast %317 : vector<1x1x32xf32> to vector<1x32xf32>
    %319 = vector.broadcast %318 : vector<1x32xf32> to vector<8x32xf32>
    %320 = arith.addf %316, %319 : vector<8x32xf32>
    %321 = arith.addf %320, %221 : vector<8x32xf32>
    %c1_224 = arith.constant 1 : index
    %c0_225 = arith.constant 0 : index
    %c0_226 = arith.constant 0 : index
    %322 = vector.load %arg12[%c1_224, %c0_225, %c0_226] : memref<2x1x32xf32, #tpu.memory_space<vmem>>, vector<1x1x32xf32>
    %323 = vector.shape_cast %322 : vector<1x1x32xf32> to vector<1x32xf32>
    %c1_227 = arith.constant 1 : index
    %c0_228 = arith.constant 0 : index
    %c0_229 = arith.constant 0 : index
    %324 = vector.load %arg13[%c1_227, %c0_228, %c0_229] : memref<2x1x32xf32, #tpu.memory_space<vmem>>, vector<1x1x32xf32>
    %325 = vector.shape_cast %324 : vector<1x1x32xf32> to vector<1x32xf32>
    %cst_230 = arith.constant dense<0.000000e+00> : vector<8xf32>
    %326 = vector.multi_reduction <add>, %321, %cst_230 [1] : vector<8x32xf32> to vector<8xf32>
    %327 = vector.shape_cast %326 : vector<8xf32> to vector<8x1xf32>
    %cst_231 = arith.constant 3.200000e+01 : f32
    %328 = vector.broadcast %cst_231 : f32 to vector<8x1xf32>
    %329 = arith.divf %327, %328 : vector<8x1xf32>
    %330 = vector.broadcast %329 : vector<8x1xf32> to vector<8x32xf32>
    %331 = arith.subf %321, %330 : vector<8x32xf32>
    %332 = arith.mulf %331, %331 : vector<8x32xf32>
    %cst_232 = arith.constant dense<0.000000e+00> : vector<8xf32>
    %333 = vector.multi_reduction <add>, %332, %cst_232 [1] : vector<8x32xf32> to vector<8xf32>
    %334 = vector.shape_cast %333 : vector<8xf32> to vector<8x1xf32>
    %cst_233 = arith.constant 3.200000e+01 : f32
    %335 = vector.broadcast %cst_233 : f32 to vector<8x1xf32>
    %336 = arith.divf %334, %335 : vector<8x1xf32>
    %337 = vector.broadcast %329 : vector<8x1xf32> to vector<8x32xf32>
    %338 = arith.subf %321, %337 : vector<8x32xf32>
    %cst_234 = arith.constant 9.99999974E-6 : f32
    %339 = vector.broadcast %cst_234 : f32 to vector<8x1xf32>
    %340 = arith.addf %336, %339 : vector<8x1xf32>
    %341 = math.rsqrt %340 : vector<8x1xf32>
    %342 = vector.broadcast %341 : vector<8x1xf32> to vector<8x32xf32>
    %343 = arith.mulf %338, %342 : vector<8x32xf32>
    %344 = vector.broadcast %323 : vector<1x32xf32> to vector<8x32xf32>
    %345 = arith.mulf %343, %344 : vector<8x32xf32>
    %346 = vector.broadcast %325 : vector<1x32xf32> to vector<8x32xf32>
    %347 = arith.addf %345, %346 : vector<8x32xf32>
    %348 = vector.broadcast %4 : vector<8x1xf32> to vector<8x32xf32>
    %349 = arith.mulf %347, %348 : vector<8x32xf32>
    %cst_235 = arith.constant 0.000000e+00 : f32
    %350 = vector.broadcast %cst_235 : f32 to vector<8x64xf32>
    %cst_236 = arith.constant 0.000000e+00 : f32
    %351 = vector.broadcast %cst_236 : f32 to vector<1x32xf32>
    %352 = vector.extract_strided_slice %349 {offsets = [0, 0], sizes = [7, 32], strides = [1, 1]} : vector<8x32xf32> to vector<7x32xf32>
    %353 = tpu.concatenate %351, %352 in 0 : vector<1x32xf32>, vector<7x32xf32> -> vector<8x32xf32>
    %354 = arith.truncf %353 : vector<8x32xf32> to vector<8x32xbf16>
    %c1_237 = arith.constant 1 : index
    %c0_238 = arith.constant 0 : index
    %c0_239 = arith.constant 0 : index
    %c0_240 = arith.constant 0 : index
    %355 = vector.load %arg14[%c1_237, %c0_238, %c0_239, %c0_240] : memref<2x3x32x64xbf16, #tpu.memory_space<vmem>>, vector<1x1x32x64xbf16>
    %356 = vector.shape_cast %355 : vector<1x1x32x64xbf16> to vector<32x64xbf16>
    %cst_241 = arith.constant dense<0.000000e+00> : vector<8x64xf32>
    %357 = tpu.matmul %354, %356, %cst_241 {dimension_numbers = #tpu.dot_dimension_numbers<[1], [0], [0], [1], [0, 0, 1, 1], [], []>} : vector<8x32xbf16>, vector<32x64xbf16>, vector<8x64xf32> -> vector<8x64xf32>
    %358 = arith.addf %350, %357 : vector<8x64xf32>
    %359 = arith.truncf %349 : vector<8x32xf32> to vector<8x32xbf16>
    %c1_242 = arith.constant 1 : index
    %c1_243 = arith.constant 1 : index
    %c0_244 = arith.constant 0 : index
    %c0_245 = arith.constant 0 : index
    %360 = vector.load %arg14[%c1_242, %c1_243, %c0_244, %c0_245] : memref<2x3x32x64xbf16, #tpu.memory_space<vmem>>, vector<1x1x32x64xbf16>
    %361 = vector.shape_cast %360 : vector<1x1x32x64xbf16> to vector<32x64xbf16>
    %cst_246 = arith.constant dense<0.000000e+00> : vector<8x64xf32>
    %362 = tpu.matmul %359, %361, %cst_246 {dimension_numbers = #tpu.dot_dimension_numbers<[1], [0], [0], [1], [0, 0, 1, 1], [], []>} : vector<8x32xbf16>, vector<32x64xbf16>, vector<8x64xf32> -> vector<8x64xf32>
    %363 = arith.addf %358, %362 : vector<8x64xf32>
    %cst_247 = arith.constant 0.000000e+00 : f32
    %364 = vector.broadcast %cst_247 : f32 to vector<1x32xf32>
    %365 = vector.extract_strided_slice %349 {offsets = [1, 0], sizes = [7, 32], strides = [1, 1]} : vector<8x32xf32> to vector<7x32xf32>
    %366 = tpu.concatenate %365, %364 in 0 : vector<7x32xf32>, vector<1x32xf32> -> vector<8x32xf32>
    %367 = arith.truncf %366 : vector<8x32xf32> to vector<8x32xbf16>
    %c1_248 = arith.constant 1 : index
    %c2_249 = arith.constant 2 : index
    %c0_250 = arith.constant 0 : index
    %c0_251 = arith.constant 0 : index
    %368 = vector.load %arg14[%c1_248, %c2_249, %c0_250, %c0_251] : memref<2x3x32x64xbf16, #tpu.memory_space<vmem>>, vector<1x1x32x64xbf16>
    %369 = vector.shape_cast %368 : vector<1x1x32x64xbf16> to vector<32x64xbf16>
    %cst_252 = arith.constant dense<0.000000e+00> : vector<8x64xf32>
    %370 = tpu.matmul %367, %369, %cst_252 {dimension_numbers = #tpu.dot_dimension_numbers<[1], [0], [0], [1], [0, 0, 1, 1], [], []>} : vector<8x32xbf16>, vector<32x64xbf16>, vector<8x64xf32> -> vector<8x64xf32>
    %371 = arith.addf %363, %370 : vector<8x64xf32>
    %c1_253 = arith.constant 1 : index
    %c0_254 = arith.constant 0 : index
    %c0_255 = arith.constant 0 : index
    %372 = vector.load %arg15[%c1_253, %c0_254, %c0_255] : memref<2x1x64xf32, #tpu.memory_space<vmem>>, vector<1x1x64xf32>
    %373 = vector.shape_cast %372 : vector<1x1x64xf32> to vector<1x64xf32>
    %374 = vector.broadcast %373 : vector<1x64xf32> to vector<8x64xf32>
    %375 = arith.addf %371, %374 : vector<8x64xf32>
    %cst_256 = arith.constant 0.000000e+00 : f32
    %376 = vector.broadcast %cst_256 : f32 to vector<8x64xf32>
    %377 = arith.maximumf %375, %376 : vector<8x64xf32>
    %cst_257 = arith.constant 0.000000e+00 : f32
    %378 = vector.broadcast %cst_257 : f32 to vector<8x32xf32>
    %cst_258 = arith.constant 0.000000e+00 : f32
    %379 = vector.broadcast %cst_258 : f32 to vector<1x64xf32>
    %380 = vector.extract_strided_slice %377 {offsets = [0, 0], sizes = [7, 64], strides = [1, 1]} : vector<8x64xf32> to vector<7x64xf32>
    %381 = tpu.concatenate %379, %380 in 0 : vector<1x64xf32>, vector<7x64xf32> -> vector<8x64xf32>
    %382 = arith.truncf %381 : vector<8x64xf32> to vector<8x64xbf16>
    %c1_259 = arith.constant 1 : index
    %c0_260 = arith.constant 0 : index
    %c0_261 = arith.constant 0 : index
    %c0_262 = arith.constant 0 : index
    %383 = vector.load %arg16[%c1_259, %c0_260, %c0_261, %c0_262] : memref<2x3x64x32xbf16, #tpu.memory_space<vmem>>, vector<1x1x64x32xbf16>
    %384 = vector.shape_cast %383 : vector<1x1x64x32xbf16> to vector<64x32xbf16>
    %cst_263 = arith.constant dense<0.000000e+00> : vector<8x32xf32>
    %385 = tpu.matmul %382, %384, %cst_263 {dimension_numbers = #tpu.dot_dimension_numbers<[1], [0], [0], [1], [0, 0, 1, 1], [], []>} : vector<8x64xbf16>, vector<64x32xbf16>, vector<8x32xf32> -> vector<8x32xf32>
    %386 = arith.addf %378, %385 : vector<8x32xf32>
    %387 = arith.truncf %377 : vector<8x64xf32> to vector<8x64xbf16>
    %c1_264 = arith.constant 1 : index
    %c1_265 = arith.constant 1 : index
    %c0_266 = arith.constant 0 : index
    %c0_267 = arith.constant 0 : index
    %388 = vector.load %arg16[%c1_264, %c1_265, %c0_266, %c0_267] : memref<2x3x64x32xbf16, #tpu.memory_space<vmem>>, vector<1x1x64x32xbf16>
    %389 = vector.shape_cast %388 : vector<1x1x64x32xbf16> to vector<64x32xbf16>
    %cst_268 = arith.constant dense<0.000000e+00> : vector<8x32xf32>
    %390 = tpu.matmul %387, %389, %cst_268 {dimension_numbers = #tpu.dot_dimension_numbers<[1], [0], [0], [1], [0, 0, 1, 1], [], []>} : vector<8x64xbf16>, vector<64x32xbf16>, vector<8x32xf32> -> vector<8x32xf32>
    %391 = arith.addf %386, %390 : vector<8x32xf32>
    %cst_269 = arith.constant 0.000000e+00 : f32
    %392 = vector.broadcast %cst_269 : f32 to vector<1x64xf32>
    %393 = vector.extract_strided_slice %377 {offsets = [1, 0], sizes = [7, 64], strides = [1, 1]} : vector<8x64xf32> to vector<7x64xf32>
    %394 = tpu.concatenate %393, %392 in 0 : vector<7x64xf32>, vector<1x64xf32> -> vector<8x64xf32>
    %395 = arith.truncf %394 : vector<8x64xf32> to vector<8x64xbf16>
    %c1_270 = arith.constant 1 : index
    %c2_271 = arith.constant 2 : index
    %c0_272 = arith.constant 0 : index
    %c0_273 = arith.constant 0 : index
    %396 = vector.load %arg16[%c1_270, %c2_271, %c0_272, %c0_273] : memref<2x3x64x32xbf16, #tpu.memory_space<vmem>>, vector<1x1x64x32xbf16>
    %397 = vector.shape_cast %396 : vector<1x1x64x32xbf16> to vector<64x32xbf16>
    %cst_274 = arith.constant dense<0.000000e+00> : vector<8x32xf32>
    %398 = tpu.matmul %395, %397, %cst_274 {dimension_numbers = #tpu.dot_dimension_numbers<[1], [0], [0], [1], [0, 0, 1, 1], [], []>} : vector<8x64xbf16>, vector<64x32xbf16>, vector<8x32xf32> -> vector<8x32xf32>
    %399 = arith.addf %391, %398 : vector<8x32xf32>
    %c1_275 = arith.constant 1 : index
    %c0_276 = arith.constant 0 : index
    %c0_277 = arith.constant 0 : index
    %400 = vector.load %arg17[%c1_275, %c0_276, %c0_277] : memref<2x1x32xf32, #tpu.memory_space<vmem>>, vector<1x1x32xf32>
    %401 = vector.shape_cast %400 : vector<1x1x32xf32> to vector<1x32xf32>
    %402 = vector.broadcast %401 : vector<1x32xf32> to vector<8x32xf32>
    %403 = arith.addf %399, %402 : vector<8x32xf32>
    %404 = arith.addf %403, %349 : vector<8x32xf32>
    %c1_278 = arith.constant 1 : index
    %c0_279 = arith.constant 0 : index
    %c0_280 = arith.constant 0 : index
    %405 = vector.load %arg18[%c1_278, %c0_279, %c0_280] : memref<2x1x32xf32, #tpu.memory_space<vmem>>, vector<1x1x32xf32>
    %406 = vector.shape_cast %405 : vector<1x1x32xf32> to vector<1x32xf32>
    %c1_281 = arith.constant 1 : index
    %c0_282 = arith.constant 0 : index
    %c0_283 = arith.constant 0 : index
    %407 = vector.load %arg19[%c1_281, %c0_282, %c0_283] : memref<2x1x32xf32, #tpu.memory_space<vmem>>, vector<1x1x32xf32>
    %408 = vector.shape_cast %407 : vector<1x1x32xf32> to vector<1x32xf32>
    %cst_284 = arith.constant dense<0.000000e+00> : vector<8xf32>
    %409 = vector.multi_reduction <add>, %404, %cst_284 [1] : vector<8x32xf32> to vector<8xf32>
    %410 = vector.shape_cast %409 : vector<8xf32> to vector<8x1xf32>
    %cst_285 = arith.constant 3.200000e+01 : f32
    %411 = vector.broadcast %cst_285 : f32 to vector<8x1xf32>
    %412 = arith.divf %410, %411 : vector<8x1xf32>
    %413 = vector.broadcast %412 : vector<8x1xf32> to vector<8x32xf32>
    %414 = arith.subf %404, %413 : vector<8x32xf32>
    %415 = arith.mulf %414, %414 : vector<8x32xf32>
    %cst_286 = arith.constant dense<0.000000e+00> : vector<8xf32>
    %416 = vector.multi_reduction <add>, %415, %cst_286 [1] : vector<8x32xf32> to vector<8xf32>
    %417 = vector.shape_cast %416 : vector<8xf32> to vector<8x1xf32>
    %cst_287 = arith.constant 3.200000e+01 : f32
    %418 = vector.broadcast %cst_287 : f32 to vector<8x1xf32>
    %419 = arith.divf %417, %418 : vector<8x1xf32>
    %420 = vector.broadcast %412 : vector<8x1xf32> to vector<8x32xf32>
    %421 = arith.subf %404, %420 : vector<8x32xf32>
    %cst_288 = arith.constant 9.99999974E-6 : f32
    %422 = vector.broadcast %cst_288 : f32 to vector<8x1xf32>
    %423 = arith.addf %419, %422 : vector<8x1xf32>
    %424 = math.rsqrt %423 : vector<8x1xf32>
    %425 = vector.broadcast %424 : vector<8x1xf32> to vector<8x32xf32>
    %426 = arith.mulf %421, %425 : vector<8x32xf32>
    %427 = vector.broadcast %406 : vector<1x32xf32> to vector<8x32xf32>
    %428 = arith.mulf %426, %427 : vector<8x32xf32>
    %429 = vector.broadcast %408 : vector<1x32xf32> to vector<8x32xf32>
    %430 = arith.addf %428, %429 : vector<8x32xf32>
    %431 = vector.broadcast %4 : vector<8x1xf32> to vector<8x32xf32>
    %432 = arith.mulf %430, %431 : vector<8x32xf32>
    %433 = arith.truncf %432 : vector<8x32xf32> to vector<8x32xbf16>
    %c0_289 = arith.constant 0 : index
    %c0_290 = arith.constant 0 : index
    %c0_291 = arith.constant 0 : index
    %434 = vector.load %arg20[%c0_289, %c0_290, %c0_291] : memref<1x8x32xbf16, #tpu.memory_space<vmem>>, vector<1x8x32xbf16>
    %435 = vector.shape_cast %434 : vector<1x8x32xbf16> to vector<8x32xbf16>
    %436 = vector.shape_cast %433 : vector<8x32xbf16> to vector<1x8x32xbf16>
    tpu.vector_store %arg20[%c0_289, %c0_290, %c0_291], %436 {strides = array<i32>} : memref<1x8x32xbf16, #tpu.memory_space<vmem>>, vector<1x8x32xbf16>,
    return
  }
  func.func @transform_0(%arg0: i32) -> (i32, i32, i32) {
    %c0_i32 = arith.constant 0 : i32
    %c0_i32_0 = arith.constant 0 : i32
    %c0_i32_1 = arith.constant 0 : i32
    return %arg0, %c0_i32, %c0_i32_0 : i32, i32, i32
  }
  func.func @transform_1(%arg0: i32) -> (i32, i32, i32) {
    %c0_i32 = arith.constant 0 : i32
    %c0_i32_0 = arith.constant 0 : i32
    %c0_i32_1 = arith.constant 0 : i32
    return %arg0, %c0_i32, %c0_i32_0 : i32, i32, i32
  }
  func.func @transform_2(%arg0: i32) -> (i32, i32, i32) {
    %c0_i32 = arith.constant 0 : i32
    %c0_i32_0 = arith.constant 0 : i32
    %c0_i32_1 = arith.constant 0 : i32
    return %arg0, %c0_i32, %c0_i32_0 : i32, i32, i32
  }
  func.func @transform_3(%arg0: i32) -> (i32, i32, i32, i32) {
    %c0_i32 = arith.constant 0 : i32
    %c0_i32_0 = arith.constant 0 : i32
    %c0_i32_1 = arith.constant 0 : i32
    %c0_i32_2 = arith.constant 0 : i32
    %c0_i32_3 = arith.constant 0 : i32
    return %c0_i32, %c0_i32_0, %c0_i32_1, %c0_i32_2 : i32, i32, i32, i32
  }
  func.func @transform_4(%arg0: i32) -> (i32, i32, i32, i32) {
    %c0_i32 = arith.constant 0 : i32
    %c0_i32_0 = arith.constant 0 : i32
    %c0_i32_1 = arith.constant 0 : i32
    %c0_i32_2 = arith.constant 0 : i32
    %c0_i32_3 = arith.constant 0 : i32
    return %c0_i32, %c0_i32_0, %c0_i32_1, %c0_i32_2 : i32, i32, i32, i32
  }
  func.func @transform_5(%arg0: i32) -> (i32, i32, i32, i32) {
    %c0_i32 = arith.constant 0 : i32
    %c0_i32_0 = arith.constant 0 : i32
    %c0_i32_1 = arith.constant 0 : i32
    %c0_i32_2 = arith.constant 0 : i32
    %c0_i32_3 = arith.constant 0 : i32
    return %c0_i32, %c0_i32_0, %c0_i32_1, %c0_i32_2 : i32, i32, i32, i32
  }
  func.func @transform_6(%arg0: i32) -> (i32, i32, i32, i32) {
    %c0_i32 = arith.constant 0 : i32
    %c0_i32_0 = arith.constant 0 : i32
    %c0_i32_1 = arith.constant 0 : i32
    %c0_i32_2 = arith.constant 0 : i32
    %c0_i32_3 = arith.constant 0 : i32
    return %c0_i32, %c0_i32_0, %c0_i32_1, %c0_i32_2 : i32, i32, i32, i32
  }
  func.func @transform_7(%arg0: i32) -> (i32, i32, i32, i32) {
    %c0_i32 = arith.constant 0 : i32
    %c0_i32_0 = arith.constant 0 : i32
    %c0_i32_1 = arith.constant 0 : i32
    %c0_i32_2 = arith.constant 0 : i32
    %c0_i32_3 = arith.constant 0 : i32
    return %c0_i32, %c0_i32_0, %c0_i32_1, %c0_i32_2 : i32, i32, i32, i32
  }
  func.func @transform_8(%arg0: i32) -> (i32, i32, i32, i32) {
    %c0_i32 = arith.constant 0 : i32
    %c0_i32_0 = arith.constant 0 : i32
    %c0_i32_1 = arith.constant 0 : i32
    %c0_i32_2 = arith.constant 0 : i32
    %c0_i32_3 = arith.constant 0 : i32
    return %c0_i32, %c0_i32_0, %c0_i32_1, %c0_i32_2 : i32, i32, i32, i32
  }
  func.func @transform_9(%arg0: i32) -> (i32, i32, i32, i32) {
    %c0_i32 = arith.constant 0 : i32
    %c0_i32_0 = arith.constant 0 : i32
    %c0_i32_1 = arith.constant 0 : i32
    %c0_i32_2 = arith.constant 0 : i32
    %c0_i32_3 = arith.constant 0 : i32
    return %c0_i32, %c0_i32_0, %c0_i32_1, %c0_i32_2 : i32, i32, i32, i32
  }
  func.func @transform_10(%arg0: i32) -> (i32, i32, i32) {
    %c0_i32 = arith.constant 0 : i32
    %c0_i32_0 = arith.constant 0 : i32
    %c0_i32_1 = arith.constant 0 : i32
    %c0_i32_2 = arith.constant 0 : i32
    return %c0_i32, %c0_i32_0, %c0_i32_1 : i32, i32, i32
  }
  func.func @transform_11(%arg0: i32) -> (i32, i32, i32) {
    %c0_i32 = arith.constant 0 : i32
    %c0_i32_0 = arith.constant 0 : i32
    %c0_i32_1 = arith.constant 0 : i32
    %c0_i32_2 = arith.constant 0 : i32
    return %c0_i32, %c0_i32_0, %c0_i32_1 : i32, i32, i32
  }
  func.func @transform_12(%arg0: i32) -> (i32, i32, i32) {
    %c0_i32 = arith.constant 0 : i32
    %c0_i32_0 = arith.constant 0 : i32
    %c0_i32_1 = arith.constant 0 : i32
    %c0_i32_2 = arith.constant 0 : i32
    return %c0_i32, %c0_i32_0, %c0_i32_1 : i32, i32, i32
  }
  func.func @transform_13(%arg0: i32) -> (i32, i32, i32, i32) {
    %c0_i32 = arith.constant 0 : i32
    %c0_i32_0 = arith.constant 0 : i32
    %c0_i32_1 = arith.constant 0 : i32
    %c0_i32_2 = arith.constant 0 : i32
    %c0_i32_3 = arith.constant 0 : i32
    return %c0_i32, %c0_i32_0, %c0_i32_1, %c0_i32_2 : i32, i32, i32, i32
  }
  func.func @transform_14(%arg0: i32) -> (i32, i32, i32) {
    %c0_i32 = arith.constant 0 : i32
    %c0_i32_0 = arith.constant 0 : i32
    %c0_i32_1 = arith.constant 0 : i32
    %c0_i32_2 = arith.constant 0 : i32
    return %c0_i32, %c0_i32_0, %c0_i32_1 : i32, i32, i32
  }
  func.func @transform_15(%arg0: i32) -> (i32, i32, i32, i32) {
    %c0_i32 = arith.constant 0 : i32
    %c0_i32_0 = arith.constant 0 : i32
    %c0_i32_1 = arith.constant 0 : i32
    %c0_i32_2 = arith.constant 0 : i32
    %c0_i32_3 = arith.constant 0 : i32
    return %c0_i32, %c0_i32_0, %c0_i32_1, %c0_i32_2 : i32, i32, i32, i32
  }
  func.func @transform_16(%arg0: i32) -> (i32, i32, i32) {
    %c0_i32 = arith.constant 0 : i32
    %c0_i32_0 = arith.constant 0 : i32
    %c0_i32_1 = arith.constant 0 : i32
    %c0_i32_2 = arith.constant 0 : i32
    return %c0_i32, %c0_i32_0, %c0_i32_1 : i32, i32, i32
  }
  func.func @transform_17(%arg0: i32) -> (i32, i32, i32) {
    %c0_i32 = arith.constant 0 : i32
    %c0_i32_0 = arith.constant 0 : i32
    %c0_i32_1 = arith.constant 0 : i32
    %c0_i32_2 = arith.constant 0 : i32
    return %c0_i32, %c0_i32_0, %c0_i32_1 : i32, i32, i32
  }
  func.func @transform_18(%arg0: i32) -> (i32, i32, i32) {
    %c0_i32 = arith.constant 0 : i32
    %c0_i32_0 = arith.constant 0 : i32
    %c0_i32_1 = arith.constant 0 : i32
    %c0_i32_2 = arith.constant 0 : i32
    return %c0_i32, %c0_i32_0, %c0_i32_1 : i32, i32, i32
  }
  func.func @transform_19(%arg0: i32) -> (i32, i32, i32) {
    %c0_i32 = arith.constant 0 : i32
    %c0_i32_0 = arith.constant 0 : i32
    %c0_i32_1 = arith.constant 0 : i32
    return %arg0, %c0_i32, %c0_i32_0 : i32, i32, i32
  }
}

</mosaic_0001>

<llo_original>
// kernel: tpu_custom_call.1
$region0: #{tpu_custom_call.1}
  #allocation0 [shape = 'u32[]', space=smem, size = 0x4, offset = 0x4, fixed_abs, tag = 'smem constant byte address 0x4 - core index']
  #allocation1 [shape = 'u32[72,128]{1,0:T(1,128)}', space=vmem, size = 0x9000, scoped, tag = 'internal scratch']
  %s0 = inlined_call_operand.vmem [shape: bf16[2,8,32], index: 0, kind: input, shape index: {}]
  %s1 = inlined_call_operand.vmem [shape: f32[2,1,8], index: 1, kind: input, shape index: {}]
  %s2 = inlined_call_operand.vmem [shape: f32[2,8,1], index: 2, kind: input, shape index: {}]
  %s3 = inlined_call_operand.vmem [shape: bf16[2,2,32,16], index: 3, kind: input, shape index: {}]
  %s4 = inlined_call_operand.vmem [shape: bf16[2,2,32,16], index: 4, kind: input, shape index: {}]
  %s5 = inlined_call_operand.vmem [shape: bf16[2,2,32,16], index: 5, kind: input, shape index: {}]
  %s6 = inlined_call_operand.vmem [shape: f32[2,2,1,16], index: 6, kind: input, shape index: {}]
  %s7 = inlined_call_operand.vmem [shape: f32[2,2,1,16], index: 7, kind: input, shape index: {}]
  %s8 = inlined_call_operand.vmem [shape: f32[2,2,1,16], index: 8, kind: input, shape index: {}]
  %s9 = inlined_call_operand.vmem [shape: bf16[2,2,16,32], index: 9, kind: input, shape index: {}]
  %s10 = inlined_call_operand.vmem [shape: f32[2,1,32], index: 10, kind: input, shape index: {}]
  %s11 = inlined_call_operand.vmem [shape: f32[2,1,32], index: 11, kind: input, shape index: {}]
  %s12 = inlined_call_operand.vmem [shape: f32[2,1,32], index: 12, kind: input, shape index: {}]
  %s13 = inlined_call_operand.vmem [shape: bf16[2,3,32,64], index: 13, kind: input, shape index: {}]
  %s14 = inlined_call_operand.vmem [shape: f32[2,1,64], index: 14, kind: input, shape index: {}]
  %s15 = inlined_call_operand.vmem [shape: bf16[2,3,64,32], index: 15, kind: input, shape index: {}]
  %s16 = inlined_call_operand.vmem [shape: f32[2,1,32], index: 16, kind: input, shape index: {}]
  %s17 = inlined_call_operand.vmem [shape: f32[2,1,32], index: 17, kind: input, shape index: {}]
  %s18 = inlined_call_operand.vmem [shape: f32[2,1,32], index: 18, kind: input, shape index: {}]
  %s19 = inlined_call_operand.hbm [shape: bf16[2,8,32], index: 19, kind: output, shape index: {}]
  %s20 = sld [smem:[#allocation0]]
  $region109: #{tpu_custom_call.1} parent=0
    _
  %s22 = ssub.s32 1, %s20
  %s23 = scalar_select 0, %s22, %s20
  $region1: #{tpu_custom_call.1} parent=0
    #allocation2 [shape = 'u8[4096]{0}', space=vmem, size = 0x1000, scoped, tag = 'output window, operand 0']
    #allocation3 [shape = 's32[2]{0}', space=sflag, size = 0x8, scoped, tag = 'scoped memory for tpu_custom_call.1']
    %24 = vsyncpa [#allocation3], 0
    %s25 = scalar_lea.sflag [#allocation3], 1
    %26 = vsyncpa %s25, 0
    loop: start=0, step=1, limit=4
    $region2: #{tpu_custom_call.1} parent=1 // loop_pre_header
      _
    $region3: #{tpu_custom_call.1} parent=1 // loop_header
      %s28 = sphi 0, %s32
      %p29 = scmp.ge.s32.totalorder %s28, 4
      %s38 = sphi 0, %s40
      %s41 = sphi 0, %s38
      %s42 = sphi 0, %s41
      %s58 = sphi 0, %s42
      %s64 = sphi 0, %s66
      %s67 = sphi 0, %s64
      %s68 = sphi 0, %s67
      %s84 = sphi 0, %s68
      %s90 = sphi 0, %s92
      %s93 = sphi 0, %s90
      %s94 = sphi 0, %s93
      %s110 = sphi 0, %s94
      %s114 = sphi 0, %s114
      %s116 = sphi 0, %s114
      %s117 = sphi 0, %s116
      %s131 = sphi 0, %s117
      %s135 = sphi 0, %s135
      %s137 = sphi 0, %s135
      %s138 = sphi 0, %s137
      %s152 = sphi 0, %s138
      %s156 = sphi 0, %s156
      %s158 = sphi 0, %s156
      %s159 = sphi 0, %s158
      %s173 = sphi 0, %s159
      %s177 = sphi 0, %s177
      %s179 = sphi 0, %s177
      %s180 = sphi 0, %s179
      %s194 = sphi 0, %s180
      %s198 = sphi 0, %s198
      %s200 = sphi 0, %s198
      %s201 = sphi 0, %s200
      %s215 = sphi 0, %s201
      %s219 = sphi 0, %s219
      %s221 = sphi 0, %s219
      %s222 = sphi 0, %s221
      %s236 = sphi 0, %s222
      %s240 = sphi 0, %s240
      %s242 = sphi 0, %s240
      %s243 = sphi 0, %s242
      %s257 = sphi 0, %s243
      %s261 = sphi 0, %s261
      %s263 = sphi 0, %s261
      %s264 = sphi 0, %s263
      %s278 = sphi 0, %s264
      %s282 = sphi 0, %s282
      %s284 = sphi 0, %s282
      %s285 = sphi 0, %s284
      %s299 = sphi 0, %s285
      %s303 = sphi 0, %s303
      %s305 = sphi 0, %s303
      %s306 = sphi 0, %s305
      %s320 = sphi 0, %s306
      %s324 = sphi 0, %s324
      %s326 = sphi 0, %s324
      %s327 = sphi 0, %s326
      %s341 = sphi 0, %s327
      %s345 = sphi 0, %s345
      %s347 = sphi 0, %s345
      %s348 = sphi 0, %s347
      %s362 = sphi 0, %s348
      %s366 = sphi 0, %s366
      %s368 = sphi 0, %s366
      %s369 = sphi 0, %s368
      %s383 = sphi 0, %s369
      %s387 = sphi 0, %s387
      %s389 = sphi 0, %s387
      %s390 = sphi 0, %s389
      %s404 = sphi 0, %s390
      %s408 = sphi 0, %s408
      %s410 = sphi 0, %s408
      %s411 = sphi 0, %s410
      %s425 = sphi 0, %s411
      %s429 = sphi 0, %s429
      %s431 = sphi 0, %s429
      %s432 = sphi 0, %s431
      %s446 = sphi 0, %s432
      %s452 = sphi 0, %s454
      %s455 = sphi 0, %s452
      %s456 = sphi 0, %s455
      %s472 = sphi 0, %s456
    $region4: #{tpu_custom_call.1} parent=1 // loop_header_branch
      %31 = sbr.rel (%p29) target = $region8
    $region5: #{tpu_custom_call.1} parent=1 // loop_body
      %s33 = ssub.s32 %s28, 1
      %s34 = ssub.s32 %s28, 2
      %s35 = sadd.s32 %s28, 1
      %s36 = ssub.s32 %s28, %s35
      %p37 = scmp.eq.s32.totalorder %s36, 0
      %s39 = sadd.s32 %s38, 1
      %s40 = scalar_select %p37, %s38, %s39
      %p43 = pneg %p37
      %p44 = scmp.eq.s32.totalorder %s28, 1
      %p45 = por %p43, %p44
      %p46 = scmp.ne.s32.totalorder %s38, %s41
      %p47 = scmp.eq.s32.totalorder %s28, 0
      %p48 = por %p46, %p47
      %p49 = scmp.ne.s32.totalorder %s38, %s41
      %p50 = scmp.eq.s32.totalorder %s33, 1
      %p51 = por %p49, %p50
      %p52 = scmp.ne.s32.totalorder %s41, %s42
      %p53 = scmp.eq.s32.totalorder %s33, 0
      %p54 = por %p52, %p53
      %p55 = scmp.ne.s32.totalorder %s41, %s42
      %p56 = scmp.eq.s32.totalorder %s34, 1
      %p57 = por %p55, %p56
      %p59 = scmp.ne.s32.totalorder %s42, %s58
      %p60 = scmp.eq.s32.totalorder %s34, 0
      %p61 = por %p59, %p60
      %s62 = ssub.s32 %s28, %s35
      %p63 = scmp.eq.s32.totalorder %s62, 0
      %s65 = sadd.s32 %s64, 1
      %s66 = scalar_select %p63, %s64, %s65
      %p69 = pneg %p63
      %p70 = scmp.eq.s32.totalorder %s28, 1
      %p71 = por %p69, %p70
      %p72 = scmp.ne.s32.totalorder %s64, %s67
      %p73 = scmp.eq.s32.totalorder %s28, 0
      %p74 = por %p72, %p73
      %p75 = scmp.ne.s32.totalorder %s64, %s67
      %p76 = scmp.eq.s32.totalorder %s33, 1
      %p77 = por %p75, %p76
      %p78 = scmp.ne.s32.totalorder %s67, %s68
      %p79 = scmp.eq.s32.totalorder %s33, 0
      %p80 = por %p78, %p79
      %p81 = scmp.ne.s32.totalorder %s67, %s68
      %p82 = scmp.eq.s32.totalorder %s34, 1
      %p83 = por %p81, %p82
      %p85 = scmp.ne.s32.totalorder %s68, %s84
      %p86 = scmp.eq.s32.totalorder %s34, 0
      %p87 = por %p85, %p86
      %s88 = ssub.s32 %s28, %s35
      %p89 = scmp.eq.s32.totalorder %s88, 0
      %s91 = sadd.s32 %s90, 1
      %s92 = scalar_select %p89, %s90, %s91
      %p95 = pneg %p89
      %p96 = scmp.eq.s32.totalorder %s28, 1
      %p97 = por %p95, %p96
      %p98 = scmp.ne.s32.totalorder %s90, %s93
      %p99 = scmp.eq.s32.totalorder %s28, 0
      %p100 = por %p98, %p99
      %p101 = scmp.ne.s32.totalorder %s90, %s93
      %p102 = scmp.eq.s32.totalorder %s33, 1
      %p103 = por %p101, %p102
      %p104 = scmp.ne.s32.totalorder %s93, %s94
      %p105 = scmp.eq.s32.totalorder %s33, 0
      %p106 = por %p104, %p105
      %p107 = scmp.ne.s32.totalorder %s93, %s94
      %p108 = scmp.eq.s32.totalorder %s34, 1
      %p109 = por %p107, %p108
      %p111 = scmp.ne.s32.totalorder %s94, %s110
      %p112 = scmp.eq.s32.totalorder %s34, 0
      %p113 = por %p111, %p112
      %s115 = sadd.s32 %s114, 1
      %p118 = scmp.eq.s32.totalorder %s28, 1
      %p119 = scmp.ne.s32.totalorder %s114, %s116
      %p120 = scmp.eq.s32.totalorder %s28, 0
      %p121 = por %p119, %p120
      %p122 = scmp.ne.s32.totalorder %s114, %s116
      %p123 = scmp.eq.s32.totalorder %s33, 1
      %p124 = por %p122, %p123
      %p125 = scmp.ne.s32.totalorder %s116, %s117
      %p126 = scmp.eq.s32.totalorder %s33, 0
      %p127 = por %p125, %p126
      %p128 = scmp.ne.s32.totalorder %s116, %s117
      %p129 = scmp.eq.s32.totalorder %s34, 1
      %p130 = por %p128, %p129
      %p132 = scmp.ne.s32.totalorder %s117, %s131
      %p133 = scmp.eq.s32.totalorder %s34, 0
      %p134 = por %p132, %p133
      %s136 = sadd.s32 %s135, 1
      %p139 = scmp.eq.s32.totalorder %s28, 1
      %p140 = scmp.ne.s32.totalorder %s135, %s137
      %p141 = scmp.eq.s32.totalorder %s28, 0
      %p142 = por %p140, %p141
      %p143 = scmp.ne.s32.totalorder %s135, %s137
      %p144 = scmp.eq.s32.totalorder %s33, 1
      %p145 = por %p143, %p144
      %p146 = scmp.ne.s32.totalorder %s137, %s138
      %p147 = scmp.eq.s32.totalorder %s33, 0
      %p148 = por %p146, %p147
      %p149 = scmp.ne.s32.totalorder %s137, %s138
      %p150 = scmp.eq.s32.totalorder %s34, 1
      %p151 = por %p149, %p150
      %p153 = scmp.ne.s32.totalorder %s138, %s152
      %p154 = scmp.eq.s32.totalorder %s34, 0
      %p155 = por %p153, %p154
      %s157 = sadd.s32 %s156, 1
      %p160 = scmp.eq.s32.totalorder %s28, 1
      %p161 = scmp.ne.s32.totalorder %s156, %s158
      %p162 = scmp.eq.s32.totalorder %s28, 0
      %p163 = por %p161, %p162
      %p164 = scmp.ne.s32.totalorder %s156, %s158
      %p165 = scmp.eq.s32.totalorder %s33, 1
      %p166 = por %p164, %p165
      %p167 = scmp.ne.s32.totalorder %s158, %s159
      %p168 = scmp.eq.s32.totalorder %s33, 0
      %p169 = por %p167, %p168
      %p170 = scmp.ne.s32.totalorder %s158, %s159
      %p171 = scmp.eq.s32.totalorder %s34, 1
      %p172 = por %p170, %p171
      %p174 = scmp.ne.s32.totalorder %s159, %s173
      %p175 = scmp.eq.s32.totalorder %s34, 0
      %p176 = por %p174, %p175
      %s178 = sadd.s32 %s177, 1
      %p181 = scmp.eq.s32.totalorder %s28, 1
      %p182 = scmp.ne.s32.totalorder %s177, %s179
      %p183 = scmp.eq.s32.totalorder %s28, 0
      %p184 = por %p182, %p183
      %p185 = scmp.ne.s32.totalorder %s177, %s179
      %p186 = scmp.eq.s32.totalorder %s33, 1
      %p187 = por %p185, %p186
      %p188 = scmp.ne.s32.totalorder %s179, %s180
      %p189 = scmp.eq.s32.totalorder %s33, 0
      %p190 = por %p188, %p189
      %p191 = scmp.ne.s32.totalorder %s179, %s180
      %p192 = scmp.eq.s32.totalorder %s34, 1
      %p193 = por %p191, %p192
      %p195 = scmp.ne.s32.totalorder %s180, %s194
      %p196 = scmp.eq.s32.totalorder %s34, 0
      %p197 = por %p195, %p196
      %s199 = sadd.s32 %s198, 1
      %p202 = scmp.eq.s32.totalorder %s28, 1
      %p203 = scmp.ne.s32.totalorder %s198, %s200
      %p204 = scmp.eq.s32.totalorder %s28, 0
      %p205 = por %p203, %p204
      %p206 = scmp.ne.s32.totalorder %s198, %s200
      %p207 = scmp.eq.s32.totalorder %s33, 1
      %p208 = por %p206, %p207
      %p209 = scmp.ne.s32.totalorder %s200, %s201
      %p210 = scmp.eq.s32.totalorder %s33, 0
      %p211 = por %p209, %p210
      %p212 = scmp.ne.s32.totalorder %s200, %s201
      %p213 = scmp.eq.s32.totalorder %s34, 1
      %p214 = por %p212, %p213
      %p216 = scmp.ne.s32.totalorder %s201, %s215
      %p217 = scmp.eq.s32.totalorder %s34, 0
      %p218 = por %p216, %p217
      %s220 = sadd.s32 %s219, 1
      %p223 = scmp.eq.s32.totalorder %s28, 1
      %p224 = scmp.ne.s32.totalorder %s219, %s221
      %p225 = scmp.eq.s32.totalorder %s28, 0
      %p226 = por %p224, %p225
      %p227 = scmp.ne.s32.totalorder %s219, %s221
      %p228 = scmp.eq.s32.totalorder %s33, 1
      %p229 = por %p227, %p228
      %p230 = scmp.ne.s32.totalorder %s221, %s222
      %p231 = scmp.eq.s32.totalorder %s33, 0
      %p232 = por %p230, %p231
      %p233 = scmp.ne.s32.totalorder %s221, %s222
      %p234 = scmp.eq.s32.totalorder %s34, 1
      %p235 = por %p233, %p234
      %p237 = scmp.ne.s32.totalorder %s222, %s236
      %p238 = scmp.eq.s32.totalorder %s34, 0
      %p239 = por %p237, %p238
      %s241 = sadd.s32 %s240, 1
      %p244 = scmp.eq.s32.totalorder %s28, 1
      %p245 = scmp.ne.s32.totalorder %s240, %s242
      %p246 = scmp.eq.s32.totalorder %s28, 0
      %p247 = por %p245, %p246
      %p248 = scmp.ne.s32.totalorder %s240, %s242
      %p249 = scmp.eq.s32.totalorder %s33, 1
      %p250 = por %p248, %p249
      %p251 = scmp.ne.s32.totalorder %s242, %s243
      %p252 = scmp.eq.s32.totalorder %s33, 0
      %p253 = por %p251, %p252
      %p254 = scmp.ne.s32.totalorder %s242, %s243
      %p255 = scmp.eq.s32.totalorder %s34, 1
      %p256 = por %p254, %p255
      %p258 = scmp.ne.s32.totalorder %s243, %s257
      %p259 = scmp.eq.s32.totalorder %s34, 0
      %p260 = por %p258, %p259
      %s262 = sadd.s32 %s261, 1
      %p265 = scmp.eq.s32.totalorder %s28, 1
      %p266 = scmp.ne.s32.totalorder %s261, %s263
      %p267 = scmp.eq.s32.totalorder %s28, 0
      %p268 = por %p266, %p267
      %p269 = scmp.ne.s32.totalorder %s261, %s263
      %p270 = scmp.eq.s32.totalorder %s33, 1
      %p271 = por %p269, %p270
      %p272 = scmp.ne.s32.totalorder %s263, %s264
      %p273 = scmp.eq.s32.totalorder %s33, 0
      %p274 = por %p272, %p273
      %p275 = scmp.ne.s32.totalorder %s263, %s264
      %p276 = scmp.eq.s32.totalorder %s34, 1
      %p277 = por %p275, %p276
      %p279 = scmp.ne.s32.totalorder %s264, %s278
      %p280 = scmp.eq.s32.totalorder %s34, 0
      %p281 = por %p279, %p280
      %s283 = sadd.s32 %s282, 1
      %p286 = scmp.eq.s32.totalorder %s28, 1
      %p287 = scmp.ne.s32.totalorder %s282, %s284
      %p288 = scmp.eq.s32.totalorder %s28, 0
      %p289 = por %p287, %p288
      %p290 = scmp.ne.s32.totalorder %s282, %s284
      %p291 = scmp.eq.s32.totalorder %s33, 1
      %p292 = por %p290, %p291
      %p293 = scmp.ne.s32.totalorder %s284, %s285
      %p294 = scmp.eq.s32.totalorder %s33, 0
      %p295 = por %p293, %p294
      %p296 = scmp.ne.s32.totalorder %s284, %s285
      %p297 = scmp.eq.s32.totalorder %s34, 1
      %p298 = por %p296, %p297
      %p300 = scmp.ne.s32.totalorder %s285, %s299
      %p301 = scmp.eq.s32.totalorder %s34, 0
      %p302 = por %p300, %p301
      %s304 = sadd.s32 %s303, 1
      %p307 = scmp.eq.s32.totalorder %s28, 1
      %p308 = scmp.ne.s32.totalorder %s303, %s305
      %p309 = scmp.eq.s32.totalorder %s28, 0
      %p310 = por %p308, %p309
      %p311 = scmp.ne.s32.totalorder %s303, %s305
      %p312 = scmp.eq.s32.totalorder %s33, 1
      %p313 = por %p311, %p312
      %p314 = scmp.ne.s32.totalorder %s305, %s306
      %p315 = scmp.eq.s32.totalorder %s33, 0
      %p316 = por %p314, %p315
      %p317 = scmp.ne.s32.totalorder %s305, %s306
      %p318 = scmp.eq.s32.totalorder %s34, 1
      %p319 = por %p317, %p318
      %p321 = scmp.ne.s32.totalorder %s306, %s320
      %p322 = scmp.eq.s32.totalorder %s34, 0
      %p323 = por %p321, %p322
      %s325 = sadd.s32 %s324, 1
      %p328 = scmp.eq.s32.totalorder %s28, 1
      %p329 = scmp.ne.s32.totalorder %s324, %s326
      %p330 = scmp.eq.s32.totalorder %s28, 0
      %p331 = por %p329, %p330
      %p332 = scmp.ne.s32.totalorder %s324, %s326
      %p333 = scmp.eq.s32.totalorder %s33, 1
      %p334 = por %p332, %p333
      %p335 = scmp.ne.s32.totalorder %s326, %s327
      %p336 = scmp.eq.s32.totalorder %s33, 0
      %p337 = por %p335, %p336
      %p338 = scmp.ne.s32.totalorder %s326, %s327
      %p339 = scmp.eq.s32.totalorder %s34, 1
      %p340 = por %p338, %p339
      %p342 = scmp.ne.s32.totalorder %s327, %s341
      %p343 = scmp.eq.s32.totalorder %s34, 0
      %p344 = por %p342, %p343
      %s346 = sadd.s32 %s345, 1
      %p349 = scmp.eq.s32.totalorder %s28, 1
      %p350 = scmp.ne.s32.totalorder %s345, %s347
      %p351 = scmp.eq.s32.totalorder %s28, 0
      %p352 = por %p350, %p351
      %p353 = scmp.ne.s32.totalorder %s345, %s347
      %p354 = scmp.eq.s32.totalorder %s33, 1
      %p355 = por %p353, %p354
      %p356 = scmp.ne.s32.totalorder %s347, %s348
      %p357 = scmp.eq.s32.totalorder %s33, 0
      %p358 = por %p356, %p357
      %p359 = scmp.ne.s32.totalorder %s347, %s348
      %p360 = scmp.eq.s32.totalorder %s34, 1
      %p361 = por %p359, %p360
      %p363 = scmp.ne.s32.totalorder %s348, %s362
      %p364 = scmp.eq.s32.totalorder %s34, 0
      %p365 = por %p363, %p364
      %s367 = sadd.s32 %s366, 1
      %p370 = scmp.eq.s32.totalorder %s28, 1
      %p371 = scmp.ne.s32.totalorder %s366, %s368
      %p372 = scmp.eq.s32.totalorder %s28, 0
      %p373 = por %p371, %p372
      %p374 = scmp.ne.s32.totalorder %s366, %s368
      %p375 = scmp.eq.s32.totalorder %s33, 1
      %p376 = por %p374, %p375
      %p377 = scmp.ne.s32.totalorder %s368, %s369
      %p378 = scmp.eq.s32.totalorder %s33, 0
      %p379 = por %p377, %p378
      %p380 = scmp.ne.s32.totalorder %s368, %s369
      %p381 = scmp.eq.s32.totalorder %s34, 1
      %p382 = por %p380, %p381
      %p384 = scmp.ne.s32.totalorder %s369, %s383
      %p385 = scmp.eq.s32.totalorder %s34, 0
      %p386 = por %p384, %p385
      %s388 = sadd.s32 %s387, 1
      %p391 = scmp.eq.s32.totalorder %s28, 1
      %p392 = scmp.ne.s32.totalorder %s387, %s389
      %p393 = scmp.eq.s32.totalorder %s28, 0
      %p394 = por %p392, %p393
      %p395 = scmp.ne.s32.totalorder %s387, %s389
      %p396 = scmp.eq.s32.totalorder %s33, 1
      %p397 = por %p395, %p396
      %p398 = scmp.ne.s32.totalorder %s389, %s390
      %p399 = scmp.eq.s32.totalorder %s33, 0
      %p400 = por %p398, %p399
      %p401 = scmp.ne.s32.totalorder %s389, %s390
      %p402 = scmp.eq.s32.totalorder %s34, 1
      %p403 = por %p401, %p402
      %p405 = scmp.ne.s32.totalorder %s390, %s404
      %p406 = scmp.eq.s32.totalorder %s34, 0
      %p407 = por %p405, %p406
      %s409 = sadd.s32 %s408, 1
      %p412 = scmp.eq.s32.totalorder %s28, 1
      %p413 = scmp.ne.s32.totalorder %s408, %s410
      %p414 = scmp.eq.s32.totalorder %s28, 0
      %p415 = por %p413, %p414
      %p416 = scmp.ne.s32.totalorder %s408, %s410
      %p417 = scmp.eq.s32.totalorder %s33, 1
      %p418 = por %p416, %p417
      %p419 = scmp.ne.s32.totalorder %s410, %s411
      %p420 = scmp.eq.s32.totalorder %s33, 0
      %p421 = por %p419, %p420
      %p422 = scmp.ne.s32.totalorder %s410, %s411
      %p423 = scmp.eq.s32.totalorder %s34, 1
      %p424 = por %p422, %p423
      %p426 = scmp.ne.s32.totalorder %s411, %s425
      %p427 = scmp.eq.s32.totalorder %s34, 0
      %p428 = por %p426, %p427
      %s430 = sadd.s32 %s429, 1
      %p433 = scmp.eq.s32.totalorder %s28, 1
      %p434 = scmp.ne.s32.totalorder %s429, %s431
      %p435 = scmp.eq.s32.totalorder %s28, 0
      %p436 = por %p434, %p435
      %p437 = scmp.ne.s32.totalorder %s429, %s431
      %p438 = scmp.eq.s32.totalorder %s33, 1
      %p439 = por %p437, %p438
      %p440 = scmp.ne.s32.totalorder %s431, %s432
      %p441 = scmp.eq.s32.totalorder %s33, 0
      %p442 = por %p440, %p441
      %p443 = scmp.ne.s32.totalorder %s431, %s432
      %p444 = scmp.eq.s32.totalorder %s34, 1
      %p445 = por %p443, %p444
      %p447 = scmp.ne.s32.totalorder %s432, %s446
      %p448 = scmp.eq.s32.totalorder %s34, 0
      %p449 = por %p447, %p448
      %s450 = ssub.s32 %s28, %s35
      %p451 = scmp.eq.s32.totalorder %s450, 0
      %s453 = sadd.s32 %s452, 1
      %s454 = scalar_select %p451, %s452, %s453
      %p457 = pneg %p451
      %p458 = scmp.eq.s32.totalorder %s28, 1
      %p459 = por %p457, %p458
      %p460 = scmp.ne.s32.totalorder %s452, %s455
      %p461 = scmp.eq.s32.totalorder %s28, 0
      %p462 = por %p460, %p461
      %p463 = scmp.ne.s32.totalorder %s452, %s455
      %p464 = scmp.eq.s32.totalorder %s33, 1
      %p465 = por %p463, %p464
      %p466 = scmp.ne.s32.totalorder %s455, %s456
      %p467 = scmp.eq.s32.totalorder %s33, 0
      %p468 = por %p466, %p467
      %p469 = scmp.ne.s32.totalorder %s455, %s456
      %p470 = scmp.eq.s32.totalorder %s34, 1
      %p471 = por %p469, %p470
      %p473 = scmp.ne.s32.totalorder %s456, %s472
      %p474 = scmp.eq.s32.totalorder %s34, 0
      %p475 = por %p473, %p474
      %p476 = scmp.le.s32.totalorder 1, %s28
      %p477 = scmp.lt.s32.totalorder %s28, 3
      %p478 = pnand %p476, %p477
      %p479 = pneg %p478
      // Predicated region
      $region9: #{tpu_custom_call.1} parent=5 // pred_check
        _
      $region10: #{tpu_custom_call.1} parent=5 // pred_check_branch
        %481 = sbr.rel (%p478) target = $region12
      $region11: #{tpu_custom_call.1} parent=5 // pred_region
        %s482 = ssub.s32 %s28, 1
        // Predicated region
        $region13: #{tpu_custom_call.1} parent=11 // pred_check
          %p483 = pneg %p127
        $region14: #{tpu_custom_call.1} parent=11 // pred_check_branch
          %485 = sbr.rel (%p483) target = $region16
        $region15: #{tpu_custom_call.1} parent=11 // pred_region
          _
        $region16: #{tpu_custom_call.1} parent=11 // pred_fallthru
          _
        // Predicated region
        $region17: #{tpu_custom_call.1} parent=11 // pred_check
          %p486 = pneg %p148
        $region18: #{tpu_custom_call.1} parent=11 // pred_check_branch
          %488 = sbr.rel (%p486) target = $region20
        $region19: #{tpu_custom_call.1} parent=11 // pred_region
          _
        $region20: #{tpu_custom_call.1} parent=11 // pred_fallthru
          _
        // Predicated region
        $region21: #{tpu_custom_call.1} parent=11 // pred_check
          %p489 = pneg %p169
        $region22: #{tpu_custom_call.1} parent=11 // pred_check_branch
          %491 = sbr.rel (%p489) target = $region24
        $region23: #{tpu_custom_call.1} parent=11 // pred_region
          _
        $region24: #{tpu_custom_call.1} parent=11 // pred_fallthru
          _
        // Predicated region
        $region25: #{tpu_custom_call.1} parent=11 // pred_check
          %p492 = pneg %p190
        $region26: #{tpu_custom_call.1} parent=11 // pred_check_branch
          %494 = sbr.rel (%p492) target = $region28
        $region27: #{tpu_custom_call.1} parent=11 // pred_region
          _
        $region28: #{tpu_custom_call.1} parent=11 // pred_fallthru
          _
        // Predicated region
        $region29: #{tpu_custom_call.1} parent=11 // pred_check
          %p495 = pneg %p211
        $region30: #{tpu_custom_call.1} parent=11 // pred_check_branch
          %497 = sbr.rel (%p495) target = $region32
        $region31: #{tpu_custom_call.1} parent=11 // pred_region
          _
        $region32: #{tpu_custom_call.1} parent=11 // pred_fallthru
          _
        // Predicated region
        $region33: #{tpu_custom_call.1} parent=11 // pred_check
          %p498 = pneg %p232
        $region34: #{tpu_custom_call.1} parent=11 // pred_check_branch
          %500 = sbr.rel (%p498) target = $region36
        $region35: #{tpu_custom_call.1} parent=11 // pred_region
          _
        $region36: #{tpu_custom_call.1} parent=11 // pred_fallthru
          _
        // Predicated region
        $region37: #{tpu_custom_call.1} parent=11 // pred_check
          %p501 = pneg %p253
        $region38: #{tpu_custom_call.1} parent=11 // pred_check_branch
          %503 = sbr.rel (%p501) target = $region40
        $region39: #{tpu_custom_call.1} parent=11 // pred_region
          _
        $region40: #{tpu_custom_call.1} parent=11 // pred_fallthru
          _
        // Predicated region
        $region41: #{tpu_custom_call.1} parent=11 // pred_check
          %p504 = pneg %p274
        $region42: #{tpu_custom_call.1} parent=11 // pred_check_branch
          %506 = sbr.rel (%p504) target = $region44
        $region43: #{tpu_custom_call.1} parent=11 // pred_region
          _
        $region44: #{tpu_custom_call.1} parent=11 // pred_fallthru
          _
        // Predicated region
        $region45: #{tpu_custom_call.1} parent=11 // pred_check
          %p507 = pneg %p295
        $region46: #{tpu_custom_call.1} parent=11 // pred_check_branch
          %509 = sbr.rel (%p507) target = $region48
        $region47: #{tpu_custom_call.1} parent=11 // pred_region
          _
        $region48: #{tpu_custom_call.1} parent=11 // pred_fallthru
          _
        // Predicated region
        $region49: #{tpu_custom_call.1} parent=11 // pred_check
          %p510 = pneg %p316
        $region50: #{tpu_custom_call.1} parent=11 // pred_check_branch
          %512 = sbr.rel (%p510) target = $region52
        $region51: #{tpu_custom_call.1} parent=11 // pred_region
          _
        $region52: #{tpu_custom_call.1} parent=11 // pred_fallthru
          _
        // Predicated region
        $region53: #{tpu_custom_call.1} parent=11 // pred_check
          %p513 = pneg %p337
        $region54: #{tpu_custom_call.1} parent=11 // pred_check_branch
          %515 = sbr.rel (%p513) target = $region56
        $region55: #{tpu_custom_call.1} parent=11 // pred_region
          _
        $region56: #{tpu_custom_call.1} parent=11 // pred_fallthru
          _
        // Predicated region
        $region57: #{tpu_custom_call.1} parent=11 // pred_check
          %p516 = pneg %p358
        $region58: #{tpu_custom_call.1} parent=11 // pred_check_branch
          %518 = sbr.rel (%p516) target = $region60
        $region59: #{tpu_custom_call.1} parent=11 // pred_region
          _
        $region60: #{tpu_custom_call.1} parent=11 // pred_fallthru
          _
        // Predicated region
        $region61: #{tpu_custom_call.1} parent=11 // pred_check
          %p519 = pneg %p379
        $region62: #{tpu_custom_call.1} parent=11 // pred_check_branch
          %521 = sbr.rel (%p519) target = $region64
        $region63: #{tpu_custom_call.1} parent=11 // pred_region
          _
        $region64: #{tpu_custom_call.1} parent=11 // pred_fallthru
          _
        // Predicated region
        $region65: #{tpu_custom_call.1} parent=11 // pred_check
          %p522 = pneg %p400
        $region66: #{tpu_custom_call.1} parent=11 // pred_check_branch
          %524 = sbr.rel (%p522) target = $region68
        $region67: #{tpu_custom_call.1} parent=11 // pred_region
          _
        $region68: #{tpu_custom_call.1} parent=11 // pred_fallthru
          _
        // Predicated region
        $region69: #{tpu_custom_call.1} parent=11 // pred_check
          %p525 = pneg %p421
        $region70: #{tpu_custom_call.1} parent=11 // pred_check_branch
          %527 = sbr.rel (%p525) target = $region72
        $region71: #{tpu_custom_call.1} parent=11 // pred_region
          _
        $region72: #{tpu_custom_call.1} parent=11 // pred_fallthru
          _
        // Predicated region
        $region73: #{tpu_custom_call.1} parent=11 // pred_check
          %p528 = pneg %p442
        $region74: #{tpu_custom_call.1} parent=11 // pred_check_branch
          %530 = sbr.rel (%p528) target = $region76
        $region75: #{tpu_custom_call.1} parent=11 // pred_region
          _
        $region76: #{tpu_custom_call.1} parent=11 // pred_fallthru
          _
      $region12: #{tpu_custom_call.1} parent=5 // pred_fallthru
        _
      %p531 = scmp.lt.s32.totalorder %s28, 2
      // Predicated region
      $region77: #{tpu_custom_call.1} parent=5 // pred_check
        %p532 = pneg %p531
      $region78: #{tpu_custom_call.1} parent=5 // pred_check_branch
        %534 = sbr.rel (%p532) target = $region80
      $region79: #{tpu_custom_call.1} parent=5 // pred_region
        // Predicated region
        $region81: #{tpu_custom_call.1} parent=79 // pred_check
          %p535 = pneg %p48
        $region82: #{tpu_custom_call.1} parent=79 // pred_check_branch
          %537 = sbr.rel (%p535) target = $region84
        $region83: #{tpu_custom_call.1} parent=79 // pred_region
          %p538 = scmp.lt.s32.totalorder %s28, 1
          %s539 = scalar_select %p538, %s28, 1
          %s540 = smul.addr %s539, 4
          %s541 = scalar_lea.vmem %s0, %s540
        $region84: #{tpu_custom_call.1} parent=79 // pred_fallthru
          _
        // Predicated region
        $region85: #{tpu_custom_call.1} parent=79 // pred_check
          %p542 = pneg %p74
        $region86: #{tpu_custom_call.1} parent=79 // pred_check_branch
          %544 = sbr.rel (%p542) target = $region88
        $region87: #{tpu_custom_call.1} parent=79 // pred_region
          %p545 = scmp.lt.s32.totalorder %s28, 1
          %s546 = scalar_select %p545, %s28, 1
          %s547 = scalar_lea.vmem %s1, %s546
        $region88: #{tpu_custom_call.1} parent=79 // pred_fallthru
          _
        // Predicated region
        $region89: #{tpu_custom_call.1} parent=79 // pred_check
          %p548 = pneg %p100
        $region90: #{tpu_custom_call.1} parent=79 // pred_check_branch
          %550 = sbr.rel (%p548) target = $region92
        $region91: #{tpu_custom_call.1} parent=79 // pred_region
          %p551 = scmp.lt.s32.totalorder %s28, 1
          %s552 = scalar_select %p551, %s28, 1
          %s553 = smul.addr %s552, 8
          %s554 = scalar_lea.vmem %s2, %s553
        $region92: #{tpu_custom_call.1} parent=79 // pred_fallthru
          _
      $region80: #{tpu_custom_call.1} parent=5 // pred_fallthru
        _
      %p555 = scmp.le.s32.totalorder 1, %s28
      %p556 = scmp.lt.s32.totalorder %s28, 3
      %p557 = pnand %p555, %p556
      %p558 = pneg %p557
      // Predicated region
      $region93: #{tpu_custom_call.1} parent=5 // pred_check
        _
      $region94: #{tpu_custom_call.1} parent=5 // pred_check_branch
        %560 = sbr.rel (%p557) target = $region96
      $region95: #{tpu_custom_call.1} parent=5 // pred_region
        %s561 = ssub.s32 %s28, 1
        %p562 = scmp.lt.s32.totalorder %s33, 1
        %s563 = scalar_select %p562, %s33, 1
        %s564 = smul.addr %s563, 4
        %s565 = scalar_lea.vmem %s0, %s564
        %p566 = pneg %p54
        %p567 = pneg %p51
        %p568 = scmp.lt.s32.totalorder %s33, 1
        %s569 = scalar_select %p568, %s33, 1
        %s570 = scalar_lea.vmem %s1, %s569
        %p571 = pneg %p80
        %p572 = pneg %p77
        %p573 = scmp.lt.s32.totalorder %s33, 1
        %s574 = scalar_select %p573, %s33, 1
        %s575 = smul.addr %s574, 8
        %s576 = scalar_lea.vmem %s2, %s575
        %p577 = pneg %p106
        %p578 = pneg %p103
        %p579 = pneg %p127
        %p580 = pneg %p124
        %p581 = pneg %p148
        %p582 = pneg %p145
        %p583 = pneg %p169
        %p584 = pneg %p166
        %p585 = pneg %p190
        %p586 = pneg %p187
        %p587 = pneg %p211
        %p588 = pneg %p208
        %p589 = pneg %p232
        %p590 = pneg %p229
        %p591 = pneg %p253
        %p592 = pneg %p250
        %p593 = pneg %p274
        %p594 = pneg %p271
        %p595 = pneg %p295
        %p596 = pneg %p292
        %p597 = pneg %p316
        %p598 = pneg %p313
        %p599 = pneg %p337
        %p600 = pneg %p334
        %p601 = pneg %p358
        %p602 = pneg %p355
        %p603 = pneg %p379
        %p604 = pneg %p376
        %p605 = pneg %p400
        %p606 = pneg %p397
        %p607 = pneg %p421
        %p608 = pneg %p418
        %p609 = pneg %p442
        %p610 = pneg %p439
        %p611 = pneg %p468
        %p612 = pneg %p465
        %s613 = sand.u32 %s455, 1
        %s614 = scalar_lea.sflag [#allocation3], %s613
        %s615 = sand.u32 %s455, 1
        %s616 = smul.addr %s615, 4
        %s617 = scalar_lea.vmem [#allocation2], %s616
        %p618 = scmp.lt.s32.totalorder %s33, 1
        %s619 = scalar_select %p618, %s33, 1
        %s620 = smul.addr %s619, 4
        %s621 = scalar_lea.vmem %s0, %s620
        %p622 = scmp.lt.s32.totalorder %s33, 1
        %s623 = scalar_select %p622, %s33, 1
        %s624 = scalar_lea.vmem %s1, %s623
        %p625 = scmp.lt.s32.totalorder %s33, 1
        %s626 = scalar_select %p625, %s33, 1
        %s627 = smul.addr %s626, 8
        %s628 = scalar_lea.vmem %s2, %s627
        %v630 = vld [vmem:[%s621] sm:$0xf]
        %v631 = vunpack.c.l.bf16 %v630
        %v632 = vld [vmem:[%s628] sm:$0xff]
        %v633 = vld [vmem:[%s624] sm:$0x1]
        %v634 = vsub.f32 %v633, 1.0
        %v635 = vmul.f32 %v634, 1e+09
        %v636 = vld [vmem:[%s3] sm:$0xf]
        %v637 = vld [vmem:[%s3 + $0x4] sm:$0xf]
        %v638 = vld [vmem:[%s3 + $0x8] sm:$0xf]
        %v639 = vld [vmem:[%s3 + $0xc] sm:$0xf]
        %v640 = vld [vmem:[%s6] sm:$0x1]
        %v642 = vperm.slane %v640, 0
        %v648 = vunpack.c.l.b16 %v636
        %v649 = vunpack.c.l.b16 %v637
        %v650 = vunpack.c.l.b16 %v638
        %v651 = vunpack.c.l.b16 %v639
        %v652 = vpack.c.b16 %v649, %v648
        %v653 = vpack.c.b16 %v651, %v650
        %vm656 = vcmask 261120
        %v658 = vsel %vm656, %v630, 0
        %660 = vmatpush.bf16.msra.mxu0 0
        %661 = vmatpush.bf16.msra.mxu0 0
        %662 = vmatpush.bf16.msra.mxu0 0
        %663 = vmatpush.bf16.msra.mxu0 0
        %664 = vmatpush.bf16.msra.mxu0 0
        %665 = vmatpush.bf16.msra.mxu0 0
        %666 = vmatpush.bf16.msra.mxu0 %v653
        %667 = vmatpush.bf16.msra.mxu0 %v652
        %668 = vmatmul.bf16.gmra.mxu0 %v658
        %v669 = vpop.f32.mrf.mxu0
        %v670 = vadd.f32 %v642, %v669
        %v671 = vpop.f32.mrf.mxu0
        %672 = vdwg.mxu0
        %v673 = vld [vmem:[%s4] sm:$0xf]
        %v674 = vld [vmem:[%s4 + $0x4] sm:$0xf]
        %v675 = vld [vmem:[%s4 + $0x8] sm:$0xf]
        %v676 = vld [vmem:[%s4 + $0xc] sm:$0xf]
        %v677 = vld [vmem:[%s7] sm:$0x1]
        %v679 = vperm.slane %v677, 0
        %v685 = vunpack.c.l.b16 %v673
        %v686 = vunpack.c.l.b16 %v674
        %v687 = vunpack.c.l.b16 %v675
        %v688 = vunpack.c.l.b16 %v676
        %v689 = vpack.c.b16 %v686, %v685
        %v690 = vpack.c.b16 %v688, %v687
        %693 = vmatpush.bf16.msra.mxu0 0
        %694 = vmatpush.bf16.msra.mxu0 0
        %695 = vmatpush.bf16.msra.mxu0 0
        %696 = vmatpush.bf16.msra.mxu0 0
        %697 = vmatpush.bf16.msra.mxu0 0
        %698 = vmatpush.bf16.msra.mxu0 0
        %699 = vmatpush.bf16.msra.mxu0 %v690
        %700 = vmatpush.bf16.msra.mxu0 %v689
        %701 = vmatmul.bf16.gmra.mxu0 %v658
        %v702 = vpop.f32.mrf.mxu0
        %v703 = vadd.f32 %v679, %v702
        %v704 = vpop.f32.mrf.mxu0
        %705 = vdwg.mxu0
        %v706 = vld [vmem:[%s5] sm:$0xf]
        %v707 = vld [vmem:[%s5 + $0x4] sm:$0xf]
        %v708 = vld [vmem:[%s5 + $0x8] sm:$0xf]
        %v709 = vld [vmem:[%s5 + $0xc] sm:$0xf]
        %v710 = vld [vmem:[%s8] sm:$0x1]
        %v712 = vperm.slane %v710, 0
        %v718 = vunpack.c.l.b16 %v706
        %v719 = vunpack.c.l.b16 %v707
        %v720 = vunpack.c.l.b16 %v708
        %v721 = vunpack.c.l.b16 %v709
        %v722 = vpack.c.b16 %v719, %v718
        %v723 = vpack.c.b16 %v721, %v720
        %726 = vmatpush.bf16.msra.mxu0 0
        %727 = vmatpush.bf16.msra.mxu0 0
        %728 = vmatpush.bf16.msra.mxu0 0
        %729 = vmatpush.bf16.msra.mxu0 0
        %730 = vmatpush.bf16.msra.mxu0 0
        %731 = vmatpush.bf16.msra.mxu0 0
        %732 = vmatpush.bf16.msra.mxu0 %v723
        %733 = vmatpush.bf16.msra.mxu0 %v722
        %734 = vmatmul.bf16.gmra.mxu0 %v658
        %v735 = vpop.f32.mrf.mxu0
        %v736 = vadd.f32 %v712, %v735
        %v737 = vpop.f32.mrf.mxu0
        %738 = vdwg.mxu0
        %v739 = vpack.c.bf16 %v670, %v670
        %v740 = vpack.c.bf16 %v703, %v703
        %v742 = vperm.slane %v635, 0
        %vm744 = vcmask 130048
        %v746 = vsel %vm744, %v739, 0
        %v749 = vsel %vm744, %v740, 0
        %751 = vmatpush.bf16.xpose.msra.mxu0 0
        %752 = vmatpush.bf16.xpose.msra.mxu0 0
        %753 = vmatpush.bf16.xpose.msra.mxu0 0
        %754 = vmatpush.bf16.xpose.msra.mxu0 0
        %755 = vmatpush.bf16.xpose.msra.mxu0 0
        %756 = vmatpush.bf16.xpose.msra.mxu0 0
        %757 = vmatpush.bf16.xpose.msra.mxu0 0
        %758 = vmatpush.bf16.xpose.msra.mxu0 %v749
        %759 = vmatmul.bf16.gmra.mxu0 %v746
        %v760 = vpop.f32.mrf.mxu0
        %v761 = vadd.f32 %v742, %v760
        %v762 = vpop.f32.mrf.mxu0
        %763 = vdwg.mxu0
        %vm764 = vcmask 64512
        %v765 = vsel %vm764, %v761, -inf
        %766 = vmax.xlane.f32.xlu0 %v765
        %v767 = vpop.xlane.xlu0 %766
        %v768 = vsub.f32 %v761, %v767
        %v769 = vmul.f32 %v768, 1.442695
        %v770 = vpow.pop %v769
        %v771 = vsel %vm764, %v770, 0.0
        %772 = vadd.xlane.f32.xlu0 %v771
        %v773 = vpop.xlane.xlu0 %772
        %v774 = vrcp.pop %v773
        %v775 = vmul.f32 %v770, %v774
        %v776 = vpack.c.bf16 %v775, %v775
        %v777 = vpack.c.bf16 %v736, %v736
        %v779 = vsel %vm764, %v776, 0
        %vm781 = vcmask 1043456
        %v783 = vsel %vm781, %v777, 0
        %785 = vmatpush.bf16.msra.mxu0 0
        %786 = vmatpush.bf16.msra.mxu0 0
        %787 = vmatpush.bf16.msra.mxu0 0
        %788 = vmatpush.bf16.msra.mxu0 0
        %789 = vmatpush.bf16.msra.mxu0 0
        %790 = vmatpush.bf16.msra.mxu0 0
        %791 = vmatpush.bf16.msra.mxu0 0
        %792 = vmatpush.bf16.msra.mxu0 %v783
        %793 = vmatmul.bf16.gmra.mxu0 %v779
        %v794 = vpop.f32.mrf.mxu0
        %v795 = vadd.f32 0.0, %v794
        %v796 = vpop.f32.mrf.mxu0
        %797 = vdwg.mxu0
        %v798 = vpack.c.bf16 %v795, %v795
        %v799 = vld [vmem:[%s9] sm:$0xf]
        %v800 = vld [vmem:[%s9 + $0x4] sm:$0xf]
        %s801 = scalar_lea.vmem %s3, 16
        %v802 = vld [vmem:[%s801] sm:$0xf]
        %v803 = vld [vmem:[%s801 + $0x4] sm:$0xf]
        %v804 = vld [vmem:[%s801 + $0x8] sm:$0xf]
        %v805 = vld [vmem:[%s801 + $0xc] sm:$0xf]
        %s806 = scalar_lea.vmem %s6, 1
        %v807 = vld [vmem:[%s806] sm:$0x1]
        %v809 = vperm.slane %v807, 0
        %v815 = vunpack.c.l.b16 %v802
        %v816 = vunpack.c.l.b16 %v803
        %v817 = vunpack.c.l.b16 %v804
        %v818 = vunpack.c.l.b16 %v805
        %v819 = vpack.c.b16 %v816, %v815
        %v820 = vpack.c.b16 %v818, %v817
        %823 = vmatpush.bf16.msra.mxu0 0
        %824 = vmatpush.bf16.msra.mxu0 0
        %825 = vmatpush.bf16.msra.mxu0 0
        %826 = vmatpush.bf16.msra.mxu0 0
        %827 = vmatpush.bf16.msra.mxu0 0
        %828 = vmatpush.bf16.msra.mxu0 0
        %829 = vmatpush.bf16.msra.mxu0 %v820
        %830 = vmatpush.bf16.msra.mxu0 %v819
        %831 = vmatmul.bf16.gmra.mxu0 %v658
        %v832 = vpop.f32.mrf.mxu0
        %v833 = vadd.f32 %v809, %v832
        %v834 = vpop.f32.mrf.mxu0
        %835 = vdwg.mxu0
        %s836 = scalar_lea.vmem %s4, 16
        %v837 = vld [vmem:[%s836] sm:$0xf]
        %v838 = vld [vmem:[%s836 + $0x4] sm:$0xf]
        %v839 = vld [vmem:[%s836 + $0x8] sm:$0xf]
        %v840 = vld [vmem:[%s836 + $0xc] sm:$0xf]
        %s841 = scalar_lea.vmem %s7, 1
        %v842 = vld [vmem:[%s841] sm:$0x1]
        %v844 = vperm.slane %v842, 0
        %v850 = vunpack.c.l.b16 %v837
        %v851 = vunpack.c.l.b16 %v838
        %v852 = vunpack.c.l.b16 %v839
        %v853 = vunpack.c.l.b16 %v840
        %v854 = vpack.c.b16 %v851, %v850
        %v855 = vpack.c.b16 %v853, %v852
        %858 = vmatpush.bf16.msra.mxu0 0
        %859 = vmatpush.bf16.msra.mxu0 0
        %860 = vmatpush.bf16.msra.mxu0 0
        %861 = vmatpush.bf16.msra.mxu0 0
        %862 = vmatpush.bf16.msra.mxu0 0
        %863 = vmatpush.bf16.msra.mxu0 0
        %864 = vmatpush.bf16.msra.mxu0 %v855
        %865 = vmatpush.bf16.msra.mxu0 %v854
        %866 = vmatmul.bf16.gmra.mxu0 %v658
        %v867 = vpop.f32.mrf.mxu0
        %v868 = vadd.f32 %v844, %v867
        %v869 = vpop.f32.mrf.mxu0
        %870 = vdwg.mxu0
        %s871 = scalar_lea.vmem %s5, 16
        %v872 = vld [vmem:[%s871] sm:$0xf]
        %v873 = vld [vmem:[%s871 + $0x4] sm:$0xf]
        %v874 = vld [vmem:[%s871 + $0x8] sm:$0xf]
        %v875 = vld [vmem:[%s871 + $0xc] sm:$0xf]
        %s876 = scalar_lea.vmem %s8, 1
        %v877 = vld [vmem:[%s876] sm:$0x1]
        %v879 = vperm.slane %v877, 0
        %v885 = vunpack.c.l.b16 %v872
        %v886 = vunpack.c.l.b16 %v873
        %v887 = vunpack.c.l.b16 %v874
        %v888 = vunpack.c.l.b16 %v875
        %v889 = vpack.c.b16 %v886, %v885
        %v890 = vpack.c.b16 %v888, %v887
        %893 = vmatpush.bf16.msra.mxu0 0
        %894 = vmatpush.bf16.msra.mxu0 0
        %895 = vmatpush.bf16.msra.mxu0 0
        %896 = vmatpush.bf16.msra.mxu0 0
        %897 = vmatpush.bf16.msra.mxu0 0
        %898 = vmatpush.bf16.msra.mxu0 0
        %899 = vmatpush.bf16.msra.mxu0 %v890
        %900 = vmatpush.bf16.msra.mxu0 %v889
        %901 = vmatmul.bf16.gmra.mxu0 %v658
        %v902 = vpop.f32.mrf.mxu0
        %v903 = vadd.f32 %v879, %v902
        %v904 = vpop.f32.mrf.mxu0
        %905 = vdwg.mxu0
        %v906 = vpack.c.bf16 %v833, %v833
        %v907 = vpack.c.bf16 %v868, %v868
        %v909 = vsel %vm744, %v906, 0
        %v912 = vsel %vm744, %v907, 0
        %914 = vmatpush.bf16.xpose.msra.mxu0 0
        %915 = vmatpush.bf16.xpose.msra.mxu0 0
        %916 = vmatpush.bf16.xpose.msra.mxu0 0
        %917 = vmatpush.bf16.xpose.msra.mxu0 0
        %918 = vmatpush.bf16.xpose.msra.mxu0 0
        %919 = vmatpush.bf16.xpose.msra.mxu0 0
        %920 = vmatpush.bf16.xpose.msra.mxu0 0
        %921 = vmatpush.bf16.xpose.msra.mxu0 %v912
        %922 = vmatmul.bf16.gmra.mxu0 %v909
        %v923 = vpop.f32.mrf.mxu0
        %v924 = vadd.f32 %v742, %v923
        %v925 = vpop.f32.mrf.mxu0
        %926 = vdwg.mxu0
        %v927 = vsel %vm764, %v924, -inf
        %928 = vmax.xlane.f32.xlu0 %v927
        %v929 = vpop.xlane.xlu0 %928
        %v930 = vsub.f32 %v924, %v929
        %v931 = vmul.f32 %v930, 1.442695
        %v932 = vpow.pop %v931
        %v933 = vsel %vm764, %v932, 0.0
        %934 = vadd.xlane.f32.xlu0 %v933
        %v935 = vpop.xlane.xlu0 %934
        %v936 = vrcp.pop %v935
        %v937 = vmul.f32 %v932, %v936
        %v938 = vpack.c.bf16 %v937, %v937
        %v939 = vpack.c.bf16 %v903, %v903
        %v941 = vsel %vm764, %v938, 0
        %v944 = vsel %vm781, %v939, 0
        %946 = vmatpush.bf16.msra.mxu0 0
        %947 = vmatpush.bf16.msra.mxu0 0
        %948 = vmatpush.bf16.msra.mxu0 0
        %949 = vmatpush.bf16.msra.mxu0 0
        %950 = vmatpush.bf16.msra.mxu0 0
        %951 = vmatpush.bf16.msra.mxu0 0
        %952 = vmatpush.bf16.msra.mxu0 0
        %953 = vmatpush.bf16.msra.mxu0 %v944
        %954 = vmatmul.bf16.gmra.mxu0 %v941
        %v955 = vpop.f32.mrf.mxu0
        %v956 = vadd.f32 0.0, %v955
        %v957 = vpop.f32.mrf.mxu0
        %958 = vdwg.mxu0
        %v959 = vpack.c.bf16 %v956, %v956
        %s960 = scalar_lea.vmem %s9, 8
        %v961 = vld [vmem:[%s960] sm:$0xf]
        %v962 = vld [vmem:[%s960 + $0x4] sm:$0xf]
        %v965 = vunpack.c.l.b16 %v961
        %v966 = vunpack.c.l.b16 %v962
        %v967 = vpack.c.b16 %v966, %v965
        %v970 = vsel %vm744, %v959, 0
        %972 = vmatpush.bf16.msra.mxu0 0
        %973 = vmatpush.bf16.msra.mxu0 0
        %974 = vmatpush.bf16.msra.mxu0 0
        %975 = vmatpush.bf16.msra.mxu0 0
        %976 = vmatpush.bf16.msra.mxu0 0
        %977 = vmatpush.bf16.msra.mxu0 0
        %978 = vmatpush.bf16.msra.mxu0 0
        %979 = vmatpush.bf16.msra.mxu0 %v967
        %980 = vmatmul.bf16.gmra.mxu0 %v970
        %v981 = vpop.f32.mrf.mxu0
        %v982 = vadd.f32 0.0, %v981
        %v983 = vpop.f32.mrf.mxu0
        %984 = vdwg.mxu0
        %v987 = vunpack.c.l.b16 %v799
        %v988 = vunpack.c.l.b16 %v800
        %v989 = vpack.c.b16 %v988, %v987
        %v992 = vsel %vm744, %v798, 0
        %994 = vmatpush.bf16.msra.mxu0 0
        %995 = vmatpush.bf16.msra.mxu0 0
        %996 = vmatpush.bf16.msra.mxu0 0
        %997 = vmatpush.bf16.msra.mxu0 0
        %998 = vmatpush.bf16.msra.mxu0 0
        %999 = vmatpush.bf16.msra.mxu0 0
        %1000 = vmatpush.bf16.msra.mxu0 0
        %1001 = vmatpush.bf16.msra.mxu0 %v989
        %1002 = vmatmul.bf16.gmra.mxu0 %v992
        %v1003 = vpop.f32.mrf.mxu0
        %v1004 = vadd.f32 %v982, %v1003
        %v1005 = vpop.f32.mrf.mxu0
        %1006 = vdwg.mxu0
        %v1007 = vld [vmem:[%s10] sm:$0x1]
        %v1009 = vperm.slane %v1007, 0
        %v1011 = vadd.f32 %v1004, %v1009
        %v1012 = vadd.f32 %v1011, %v631
        %v1013 = vld [vmem:[%s11] sm:$0x1]
        %v1014 = vld [vmem:[%s12] sm:$0x1]
        %v1015 = vsel %vm656, %v1012, 0.0
        %1016 = vadd.xlane.f32.xlu0 %v1015
        %v1017 = vpop.xlane.xlu0 %1016
        %v1018 = vrcp.pop 32.0
        %v1019 = vmul.f32 32.0, %v1018
        %v1020 = vsub.f32 1.0, %v1019
        %v1021 = vmul.f32 %v1018, %v1020
        %v1022 = vadd.f32 %v1018, %v1021
        %vm1023 = vweird.f32 %v1018
        %v1024 = vsel %vm1023, %v1018, %v1022
        %v1025 = vmul.f32 %v1017, %v1024
        %v1026 = vsub.f32 %v1012, %v1025
        %v1027 = vmul.f32 %v1026, %v1026
        %v1028 = vsel %vm656, %v1027, 0.0
        %1029 = vadd.xlane.f32.xlu0 %v1028
        %v1030 = vpop.xlane.xlu0 %1029
        %v1031 = vmul.f32 %v1030, %v1024
        %v1032 = vadd.f32 %v1031, 1e-05
        %v1033 = vrsqrt.pop %v1032
        %v1034 = vmul.f32 %v1033, %v1032
        %v1035 = vmul.f32 %v1034, %v1033
        %v1036 = vmul.f32 0.5, %v1035
        %v1037 = vsub.f32 1.5, %v1036
        %v1038 = vmul.f32 %v1033, %v1037
        %vm1039 = vweird.f32 %v1032
        %vm1040 = vweird.f32 %v1033
        %vm1041 = vmor %vm1039, %vm1040
        %v1042 = vsel %vm1041, %v1033, %v1038
        %v1043 = vmul.f32 %v1026, %v1042
        %v1045 = vperm.slane %v1013, 0
        %v1047 = vmul.f32 %v1043, %v1045
        %v1049 = vperm.slane %v1014, 0
        %v1051 = vadd.f32 %v1047, %v1049
        %1053 = vset.pattern.permute.xlu0 0
        %1054 = vperm.xlu0 %1053, %v632
        %v1055 = vpop.permute.xlu0 %1054
        %v1057 = vmul.f32 %v1051, %v1055
        %v1059 = vrot.slane %v1057, 7
        %vm1061 = vcmask 1040384
        %v1062 = vsel %vm1061, 0.0, %v1059
        %v1063 = vpack.c.bf16 %v1062, %v1062
        %v1064 = vld [vmem:[%s13] sm:$0xf]
        %v1065 = vld [vmem:[%s13 + $0x4] sm:$0xf]
        %v1066 = vld [vmem:[%s13 + $0x8] sm:$0xf]
        %v1067 = vld [vmem:[%s13 + $0xc] sm:$0xf]
        %v1068 = vpack.c.bf16 %v1057, %v1057
        %s1069 = scalar_lea.vmem %s13, 16
        %v1070 = vld [vmem:[%s1069] sm:$0xf]
        %v1071 = vld [vmem:[%s1069 + $0x4] sm:$0xf]
        %v1072 = vld [vmem:[%s1069 + $0x8] sm:$0xf]
        %v1073 = vld [vmem:[%s1069 + $0xc] sm:$0xf]
        %v1078 = vunpack.c.l.b16 %v1070
        %v1079 = vunpack.c.l.b16 %v1071
        %v1080 = vunpack.c.l.b16 %v1072
        %v1081 = vunpack.c.l.b16 %v1073
        %v1082 = vpack.c.b16 %v1079, %v1078
        %v1083 = vpack.c.b16 %v1081, %v1080
        %v1087 = vsel %vm656, %v1068, 0
        %1089 = vmatpush.bf16.msra.mxu0 0
        %1090 = vmatpush.bf16.msra.mxu0 0
        %1091 = vmatpush.bf16.msra.mxu0 0
        %1092 = vmatpush.bf16.msra.mxu0 0
        %1093 = vmatpush.bf16.msra.mxu0 0
        %1094 = vmatpush.bf16.msra.mxu0 0
        %1095 = vmatpush.bf16.msra.mxu0 %v1083
        %1096 = vmatpush.bf16.msra.mxu0 %v1082
        %1097 = vmatmul.bf16.gmra.mxu0 %v1087
        %v1098 = vpop.f32.mrf.mxu0
        %v1099 = vadd.f32 0.0, %v1098
        %v1100 = vpop.f32.mrf.mxu0
        %1101 = vdwg.mxu0
        %v1106 = vunpack.c.l.b16 %v1064
        %v1107 = vunpack.c.l.b16 %v1065
        %v1108 = vunpack.c.l.b16 %v1066
        %v1109 = vunpack.c.l.b16 %v1067
        %v1110 = vpack.c.b16 %v1107, %v1106
        %v1111 = vpack.c.b16 %v1109, %v1108
        %v1115 = vsel %vm656, %v1063, 0
        %1117 = vmatpush.bf16.msra.mxu0 0
        %1118 = vmatpush.bf16.msra.mxu0 0
        %1119 = vmatpush.bf16.msra.mxu0 0
        %1120 = vmatpush.bf16.msra.mxu0 0
        %1121 = vmatpush.bf16.msra.mxu0 0
        %1122 = vmatpush.bf16.msra.mxu0 0
        %1123 = vmatpush.bf16.msra.mxu0 %v1111
        %1124 = vmatpush.bf16.msra.mxu0 %v1110
        %1125 = vmatmul.bf16.gmra.mxu0 %v1115
        %v1126 = vpop.f32.mrf.mxu0
        %v1127 = vadd.f32 %v1099, %v1126
        %v1128 = vpop.f32.mrf.mxu0
        %1129 = vdwg.mxu0
        %v1130 = vrot.slane %v1057, 1
        %vm1132 = vcmask 1046528
        %v1133 = vsel %vm1132, %v1130, 0.0
        %v1134 = vpack.c.bf16 %v1133, %v1133
        %s1135 = scalar_lea.vmem %s13, 32
        %v1136 = vld [vmem:[%s1135] sm:$0xf]
        %v1137 = vld [vmem:[%s1135 + $0x4] sm:$0xf]
        %v1138 = vld [vmem:[%s1135 + $0x8] sm:$0xf]
        %v1139 = vld [vmem:[%s1135 + $0xc] sm:$0xf]
        %v1144 = vunpack.c.l.b16 %v1136
        %v1145 = vunpack.c.l.b16 %v1137
        %v1146 = vunpack.c.l.b16 %v1138
        %v1147 = vunpack.c.l.b16 %v1139
        %v1148 = vpack.c.b16 %v1145, %v1144
        %v1149 = vpack.c.b16 %v1147, %v1146
        %v1153 = vsel %vm656, %v1134, 0
        %1155 = vmatpush.bf16.msra.mxu0 0
        %1156 = vmatpush.bf16.msra.mxu0 0
        %1157 = vmatpush.bf16.msra.mxu0 0
        %1158 = vmatpush.bf16.msra.mxu0 0
        %1159 = vmatpush.bf16.msra.mxu0 0
        %1160 = vmatpush.bf16.msra.mxu0 0
        %1161 = vmatpush.bf16.msra.mxu0 %v1149
        %1162 = vmatpush.bf16.msra.mxu0 %v1148
        %1163 = vmatmul.bf16.gmra.mxu0 %v1153
        %v1164 = vpop.f32.mrf.mxu0
        %v1165 = vadd.f32 0.0, %v1164
        %v1166 = vpop.f32.mrf.mxu0
        %1167 = vdwg.mxu0
        %v1168 = vadd.f32 %v1127, %v1165
        %v1169 = vld [vmem:[%s14] sm:$0x1]
        %v1171 = vperm.slane %v1169, 0
        %v1173 = vadd.f32 %v1168, %v1171
        %v1174 = vmax.f32 %v1173, 0.0
        %v1176 = vrot.slane %v1174, 7
        %v1178 = vsel %vm1061, 0.0, %v1176
        %v1179 = vpack.c.bf16 %v1178, %v1178
        %v1180 = vld [vmem:[%s15] sm:$0xf]
        %v1181 = vld [vmem:[%s15 + $0x4] sm:$0xf]
        %v1182 = vld [vmem:[%s15 + $0x8] sm:$0xf]
        %v1183 = vld [vmem:[%s15 + $0xc] sm:$0xf]
        %v1184 = vld [vmem:[%s15 + $0x10] sm:$0xf]
        %v1185 = vld [vmem:[%s15 + $0x14] sm:$0xf]
        %v1186 = vld [vmem:[%s15 + $0x18] sm:$0xf]
        %v1187 = vld [vmem:[%s15 + $0x1c] sm:$0xf]
        %v1188 = vpack.c.bf16 %v1174, %v1174
        %s1189 = scalar_lea.vmem %s15, 32
        %v1190 = vld [vmem:[%s1189] sm:$0xf]
        %v1191 = vld [vmem:[%s1189 + $0x4] sm:$0xf]
        %v1192 = vld [vmem:[%s1189 + $0x8] sm:$0xf]
        %v1193 = vld [vmem:[%s1189 + $0xc] sm:$0xf]
        %v1194 = vld [vmem:[%s1189 + $0x10] sm:$0xf]
        %v1195 = vld [vmem:[%s1189 + $0x14] sm:$0xf]
        %v1196 = vld [vmem:[%s1189 + $0x18] sm:$0xf]
        %v1197 = vld [vmem:[%s1189 + $0x1c] sm:$0xf]
        %v1206 = vunpack.c.l.b16 %v1190
        %v1207 = vunpack.c.l.b16 %v1191
        %v1208 = vunpack.c.l.b16 %v1192
        %v1209 = vunpack.c.l.b16 %v1193
        %v1210 = vunpack.c.l.b16 %v1194
        %v1211 = vunpack.c.l.b16 %v1195
        %v1212 = vunpack.c.l.b16 %v1196
        %v1213 = vunpack.c.l.b16 %v1197
        %v1214 = vpack.c.b16 %v1207, %v1206
        %v1215 = vpack.c.b16 %v1209, %v1208
        %v1216 = vpack.c.b16 %v1211, %v1210
        %v1217 = vpack.c.b16 %v1213, %v1212
        %vm1222 = vcmask 523264
        %v1224 = vsel %vm1222, %v1188, 0
        %1226 = vmatpush.bf16.msra.mxu0 0
        %1227 = vmatpush.bf16.msra.mxu0 0
        %1228 = vmatpush.bf16.msra.mxu0 0
        %1229 = vmatpush.bf16.msra.mxu0 0
        %1230 = vmatpush.bf16.msra.mxu0 %v1217
        %1231 = vmatpush.bf16.msra.mxu0 %v1216
        %1232 = vmatpush.bf16.msra.mxu0 %v1215
        %1233 = vmatpush.bf16.msra.mxu0 %v1214
        %1234 = vmatmul.bf16.gmra.mxu0 %v1224
        %v1235 = vpop.f32.mrf.mxu0
        %v1236 = vadd.f32 0.0, %v1235
        %v1237 = vpop.f32.mrf.mxu0
        %1238 = vdwg.mxu0
        %v1247 = vunpack.c.l.b16 %v1180
        %v1248 = vunpack.c.l.b16 %v1181
        %v1249 = vunpack.c.l.b16 %v1182
        %v1250 = vunpack.c.l.b16 %v1183
        %v1251 = vunpack.c.l.b16 %v1184
        %v1252 = vunpack.c.l.b16 %v1185
        %v1253 = vunpack.c.l.b16 %v1186
        %v1254 = vunpack.c.l.b16 %v1187
        %v1255 = vpack.c.b16 %v1248, %v1247
        %v1256 = vpack.c.b16 %v1250, %v1249
        %v1257 = vpack.c.b16 %v1252, %v1251
        %v1258 = vpack.c.b16 %v1254, %v1253
        %v1264 = vsel %vm1222, %v1179, 0
        %1266 = vmatpush.bf16.msra.mxu0 0
        %1267 = vmatpush.bf16.msra.mxu0 0
        %1268 = vmatpush.bf16.msra.mxu0 0
        %1269 = vmatpush.bf16.msra.mxu0 0
        %1270 = vmatpush.bf16.msra.mxu0 %v1258
        %1271 = vmatpush.bf16.msra.mxu0 %v1257
        %1272 = vmatpush.bf16.msra.mxu0 %v1256
        %1273 = vmatpush.bf16.msra.mxu0 %v1255
        %1274 = vmatmul.bf16.gmra.mxu0 %v1264
        %v1275 = vpop.f32.mrf.mxu0
        %v1276 = vadd.f32 %v1236, %v1275
        %v1277 = vpop.f32.mrf.mxu0
        %1278 = vdwg.mxu0
        %v1279 = vrot.slane %v1174, 1
        %v1281 = vsel %vm1132, %v1279, 0.0
        %v1282 = vpack.c.bf16 %v1281, %v1281
        %s1283 = scalar_lea.vmem %s15, 64
        %v1284 = vld [vmem:[%s1283] sm:$0xf]
        %v1285 = vld [vmem:[%s1283 + $0x4] sm:$0xf]
        %v1286 = vld [vmem:[%s1283 + $0x8] sm:$0xf]
        %v1287 = vld [vmem:[%s1283 + $0xc] sm:$0xf]
        %v1288 = vld [vmem:[%s1283 + $0x10] sm:$0xf]
        %v1289 = vld [vmem:[%s1283 + $0x14] sm:$0xf]
        %v1290 = vld [vmem:[%s1283 + $0x18] sm:$0xf]
        %v1291 = vld [vmem:[%s1283 + $0x1c] sm:$0xf]
        %v1300 = vunpack.c.l.b16 %v1284
        %v1301 = vunpack.c.l.b16 %v1285
        %v1302 = vunpack.c.l.b16 %v1286
        %v1303 = vunpack.c.l.b16 %v1287
        %v1304 = vunpack.c.l.b16 %v1288
        %v1305 = vunpack.c.l.b16 %v1289
        %v1306 = vunpack.c.l.b16 %v1290
        %v1307 = vunpack.c.l.b16 %v1291
        %v1308 = vpack.c.b16 %v1301, %v1300
        %v1309 = vpack.c.b16 %v1303, %v1302
        %v1310 = vpack.c.b16 %v1305, %v1304
        %v1311 = vpack.c.b16 %v1307, %v1306
        %v1317 = vsel %vm1222, %v1282, 0
        %1319 = vmatpush.bf16.msra.mxu0 0
        %1320 = vmatpush.bf16.msra.mxu0 0
        %1321 = vmatpush.bf16.msra.mxu0 0
        %1322 = vmatpush.bf16.msra.mxu0 0
        %1323 = vmatpush.bf16.msra.mxu0 %v1311
        %1324 = vmatpush.bf16.msra.mxu0 %v1310
        %1325 = vmatpush.bf16.msra.mxu0 %v1309
        %1326 = vmatpush.bf16.msra.mxu0 %v1308
        %1327 = vmatmul.bf16.gmra.mxu0 %v1317
        %v1328 = vpop.f32.mrf.mxu0
        %v1329 = vadd.f32 0.0, %v1328
        %v1330 = vpop.f32.mrf.mxu0
        %1331 = vdwg.mxu0
        %v1332 = vadd.f32 %v1276, %v1329
        %v1333 = vld [vmem:[%s16] sm:$0x1]
        %v1335 = vperm.slane %v1333, 0
        %v1337 = vadd.f32 %v1332, %v1335
        %v1338 = vadd.f32 %v1337, %v1057
        %v1339 = vld [vmem:[%s17] sm:$0x1]
        %v1340 = vld [vmem:[%s18] sm:$0x1]
        %v1341 = vsel %vm656, %v1338, 0.0
        %1342 = vadd.xlane.f32.xlu0 %v1341
        %v1343 = vpop.xlane.xlu0 %1342
        %v1344 = vmul.f32 %v1343, %v1024
        %v1345 = vsub.f32 %v1338, %v1344
        %v1346 = vmul.f32 %v1345, %v1345
        %v1347 = vsel %vm656, %v1346, 0.0
        %1348 = vadd.xlane.f32.xlu0 %v1347
        %v1349 = vpop.xlane.xlu0 %1348
        %v1350 = vmul.f32 %v1349, %v1024
        %v1351 = vadd.f32 %v1350, 1e-05
        %v1352 = vrsqrt.pop %v1351
        %v1353 = vmul.f32 %v1352, %v1351
        %v1354 = vmul.f32 %v1353, %v1352
        %v1355 = vmul.f32 0.5, %v1354
        %v1356 = vsub.f32 1.5, %v1355
        %v1357 = vmul.f32 %v1352, %v1356
        %vm1358 = vweird.f32 %v1351
        %vm1359 = vweird.f32 %v1352
        %vm1360 = vmor %vm1358, %vm1359
        %v1361 = vsel %vm1360, %v1352, %v1357
        %v1362 = vmul.f32 %v1345, %v1361
        %v1364 = vperm.slane %v1339, 0
        %v1366 = vmul.f32 %v1362, %v1364
        %v1368 = vperm.slane %v1340, 0
        %v1370 = vadd.f32 %v1366, %v1368
        %v1371 = vmul.f32 %v1370, %v1055
        %v1372 = vpack.c.bf16 %v1371, %v1371
        %s1373 = scalar_lea.vmem %s3, 32
        %v1374 = vld [vmem:[%s1373] sm:$0xf]
        %v1375 = vld [vmem:[%s1373 + $0x4] sm:$0xf]
        %v1376 = vld [vmem:[%s1373 + $0x8] sm:$0xf]
        %v1377 = vld [vmem:[%s1373 + $0xc] sm:$0xf]
        %s1378 = scalar_lea.vmem %s6, 2
        %v1379 = vld [vmem:[%s1378] sm:$0x1]
        %v1381 = vperm.slane %v1379, 0
        %v1387 = vunpack.c.l.b16 %v1374
        %v1388 = vunpack.c.l.b16 %v1375
        %v1389 = vunpack.c.l.b16 %v1376
        %v1390 = vunpack.c.l.b16 %v1377
        %v1391 = vpack.c.b16 %v1388, %v1387
        %v1392 = vpack.c.b16 %v1390, %v1389
        %v1396 = vsel %vm656, %v1372, 0
        %1398 = vmatpush.bf16.msra.mxu0 0
        %1399 = vmatpush.bf16.msra.mxu0 0
        %1400 = vmatpush.bf16.msra.mxu0 0
        %1401 = vmatpush.bf16.msra.mxu0 0
        %1402 = vmatpush.bf16.msra.mxu0 0
        %1403 = vmatpush.bf16.msra.mxu0 0
        %1404 = vmatpush.bf16.msra.mxu0 %v1392
        %1405 = vmatpush.bf16.msra.mxu0 %v1391
        %1406 = vmatmul.bf16.gmra.mxu0 %v1396
        %v1407 = vpop.f32.mrf.mxu0
        %v1408 = vadd.f32 %v1381, %v1407
        %v1409 = vpop.f32.mrf.mxu0
        %1410 = vdwg.mxu0
        %s1411 = scalar_lea.vmem %s4, 32
        %v1412 = vld [vmem:[%s1411] sm:$0xf]
        %v1413 = vld [vmem:[%s1411 + $0x4] sm:$0xf]
        %v1414 = vld [vmem:[%s1411 + $0x8] sm:$0xf]
        %v1415 = vld [vmem:[%s1411 + $0xc] sm:$0xf]
        %s1416 = scalar_lea.vmem %s7, 2
        %v1417 = vld [vmem:[%s1416] sm:$0x1]
        %v1419 = vperm.slane %v1417, 0
        %v1425 = vunpack.c.l.b16 %v1412
        %v1426 = vunpack.c.l.b16 %v1413
        %v1427 = vunpack.c.l.b16 %v1414
        %v1428 = vunpack.c.l.b16 %v1415
        %v1429 = vpack.c.b16 %v1426, %v1425
        %v1430 = vpack.c.b16 %v1428, %v1427
        %1433 = vmatpush.bf16.msra.mxu0 0
        %1434 = vmatpush.bf16.msra.mxu0 0
        %1435 = vmatpush.bf16.msra.mxu0 0
        %1436 = vmatpush.bf16.msra.mxu0 0
        %1437 = vmatpush.bf16.msra.mxu0 0
        %1438 = vmatpush.bf16.msra.mxu0 0
        %1439 = vmatpush.bf16.msra.mxu0 %v1430
        %1440 = vmatpush.bf16.msra.mxu0 %v1429
        %1441 = vmatmul.bf16.gmra.mxu0 %v1396
        %v1442 = vpop.f32.mrf.mxu0
        %v1443 = vadd.f32 %v1419, %v1442
        %v1444 = vpop.f32.mrf.mxu0
        %1445 = vdwg.mxu0
        %s1446 = scalar_lea.vmem %s5, 32
        %v1447 = vld [vmem:[%s1446] sm:$0xf]
        %v1448 = vld [vmem:[%s1446 + $0x4] sm:$0xf]
        %v1449 = vld [vmem:[%s1446 + $0x8] sm:$0xf]
        %v1450 = vld [vmem:[%s1446 + $0xc] sm:$0xf]
        %s1451 = scalar_lea.vmem %s8, 2
        %v1452 = vld [vmem:[%s1451] sm:$0x1]
        %v1454 = vperm.slane %v1452, 0
        %v1460 = vunpack.c.l.b16 %v1447
        %v1461 = vunpack.c.l.b16 %v1448
        %v1462 = vunpack.c.l.b16 %v1449
        %v1463 = vunpack.c.l.b16 %v1450
        %v1464 = vpack.c.b16 %v1461, %v1460
        %v1465 = vpack.c.b16 %v1463, %v1462
        %1468 = vmatpush.bf16.msra.mxu0 0
        %1469 = vmatpush.bf16.msra.mxu0 0
        %1470 = vmatpush.bf16.msra.mxu0 0
        %1471 = vmatpush.bf16.msra.mxu0 0
        %1472 = vmatpush.bf16.msra.mxu0 0
        %1473 = vmatpush.bf16.msra.mxu0 0
        %1474 = vmatpush.bf16.msra.mxu0 %v1465
        %1475 = vmatpush.bf16.msra.mxu0 %v1464
        %1476 = vmatmul.bf16.gmra.mxu0 %v1396
        %v1477 = vpop.f32.mrf.mxu0
        %v1478 = vadd.f32 %v1454, %v1477
        %v1479 = vpop.f32.mrf.mxu0
        %1480 = vdwg.mxu0
        %v1481 = vpack.c.bf16 %v1408, %v1408
        %v1482 = vpack.c.bf16 %v1443, %v1443
        %v1484 = vsel %vm744, %v1481, 0
        %v1487 = vsel %vm744, %v1482, 0
        %1489 = vmatpush.bf16.xpose.msra.mxu0 0
        %1490 = vmatpush.bf16.xpose.msra.mxu0 0
        %1491 = vmatpush.bf16.xpose.msra.mxu0 0
        %1492 = vmatpush.bf16.xpose.msra.mxu0 0
        %1493 = vmatpush.bf16.xpose.msra.mxu0 0
        %1494 = vmatpush.bf16.xpose.msra.mxu0 0
        %1495 = vmatpush.bf16.xpose.msra.mxu0 0
        %1496 = vmatpush.bf16.xpose.msra.mxu0 %v1487
        %1497 = vmatmul.bf16.gmra.mxu0 %v1484
        %v1498 = vpop.f32.mrf.mxu0
        %v1499 = vadd.f32 %v742, %v1498
        %v1500 = vpop.f32.mrf.mxu0
        %1501 = vdwg.mxu0
        %v1502 = vsel %vm764, %v1499, -inf
        %1503 = vmax.xlane.f32.xlu0 %v1502
        %v1504 = vpop.xlane.xlu0 %1503
        %v1505 = vsub.f32 %v1499, %v1504
        %v1506 = vmul.f32 %v1505, 1.442695
        %v1507 = vpow.pop %v1506
        %v1508 = vsel %vm764, %v1507, 0.0
        %1509 = vadd.xlane.f32.xlu0 %v1508
        %v1510 = vpop.xlane.xlu0 %1509
        %v1511 = vrcp.pop %v1510
        %v1512 = vmul.f32 %v1507, %v1511
        %v1513 = vpack.c.bf16 %v1512, %v1512
        %v1514 = vpack.c.bf16 %v1478, %v1478
        %v1516 = vsel %vm764, %v1513, 0
        %v1519 = vsel %vm781, %v1514, 0
        %1521 = vmatpush.bf16.msra.mxu0 0
        %1522 = vmatpush.bf16.msra.mxu0 0
        %1523 = vmatpush.bf16.msra.mxu0 0
        %1524 = vmatpush.bf16.msra.mxu0 0
        %1525 = vmatpush.bf16.msra.mxu0 0
        %1526 = vmatpush.bf16.msra.mxu0 0
        %1527 = vmatpush.bf16.msra.mxu0 0
        %1528 = vmatpush.bf16.msra.mxu0 %v1519
        %1529 = vmatmul.bf16.gmra.mxu0 %v1516
        %v1530 = vpop.f32.mrf.mxu0
        %v1531 = vadd.f32 0.0, %v1530
        %v1532 = vpop.f32.mrf.mxu0
        %1533 = vdwg.mxu0
        %v1534 = vpack.c.bf16 %v1531, %v1531
        %s1535 = scalar_lea.vmem %s9, 16
        %v1536 = vld [vmem:[%s1535] sm:$0xf]
        %v1537 = vld [vmem:[%s1535 + $0x4] sm:$0xf]
        %s1538 = scalar_lea.vmem %s3, 48
        %v1539 = vld [vmem:[%s1538] sm:$0xf]
        %v1540 = vld [vmem:[%s1538 + $0x4] sm:$0xf]
        %v1541 = vld [vmem:[%s1538 + $0x8] sm:$0xf]
        %v1542 = vld [vmem:[%s1538 + $0xc] sm:$0xf]
        %s1543 = scalar_lea.vmem %s6, 3
        %v1544 = vld [vmem:[%s1543] sm:$0x1]
        %v1546 = vperm.slane %v1544, 0
        %v1552 = vunpack.c.l.b16 %v1539
        %v1553 = vunpack.c.l.b16 %v1540
        %v1554 = vunpack.c.l.b16 %v1541
        %v1555 = vunpack.c.l.b16 %v1542
        %v1556 = vpack.c.b16 %v1553, %v1552
        %v1557 = vpack.c.b16 %v1555, %v1554
        %1560 = vmatpush.bf16.msra.mxu0 0
        %1561 = vmatpush.bf16.msra.mxu0 0
        %1562 = vmatpush.bf16.msra.mxu0 0
        %1563 = vmatpush.bf16.msra.mxu0 0
        %1564 = vmatpush.bf16.msra.mxu0 0
        %1565 = vmatpush.bf16.msra.mxu0 0
        %1566 = vmatpush.bf16.msra.mxu0 %v1557
        %1567 = vmatpush.bf16.msra.mxu0 %v1556
        %1568 = vmatmul.bf16.gmra.mxu0 %v1396
        %v1569 = vpop.f32.mrf.mxu0
        %v1570 = vadd.f32 %v1546, %v1569
        %v1571 = vpop.f32.mrf.mxu0
        %1572 = vdwg.mxu0
        %s1573 = scalar_lea.vmem %s4, 48
        %v1574 = vld [vmem:[%s1573] sm:$0xf]
        %v1575 = vld [vmem:[%s1573 + $0x4] sm:$0xf]
        %v1576 = vld [vmem:[%s1573 + $0x8] sm:$0xf]
        %v1577 = vld [vmem:[%s1573 + $0xc] sm:$0xf]
        %s1578 = scalar_lea.vmem %s7, 3
        %v1579 = vld [vmem:[%s1578] sm:$0x1]
        %v1581 = vperm.slane %v1579, 0
        %v1587 = vunpack.c.l.b16 %v1574
        %v1588 = vunpack.c.l.b16 %v1575
        %v1589 = vunpack.c.l.b16 %v1576
        %v1590 = vunpack.c.l.b16 %v1577
        %v1591 = vpack.c.b16 %v1588, %v1587
        %v1592 = vpack.c.b16 %v1590, %v1589
        %1595 = vmatpush.bf16.msra.mxu0 0
        %1596 = vmatpush.bf16.msra.mxu0 0
        %1597 = vmatpush.bf16.msra.mxu0 0
        %1598 = vmatpush.bf16.msra.mxu0 0
        %1599 = vmatpush.bf16.msra.mxu0 0
        %1600 = vmatpush.bf16.msra.mxu0 0
        %1601 = vmatpush.bf16.msra.mxu0 %v1592
        %1602 = vmatpush.bf16.msra.mxu0 %v1591
        %1603 = vmatmul.bf16.gmra.mxu0 %v1396
        %v1604 = vpop.f32.mrf.mxu0
        %v1605 = vadd.f32 %v1581, %v1604
        %v1606 = vpop.f32.mrf.mxu0
        %1607 = vdwg.mxu0
        %s1608 = scalar_lea.vmem %s5, 48
        %v1609 = vld [vmem:[%s1608] sm:$0xf]
        %v1610 = vld [vmem:[%s1608 + $0x4] sm:$0xf]
        %v1611 = vld [vmem:[%s1608 + $0x8] sm:$0xf]
        %v1612 = vld [vmem:[%s1608 + $0xc] sm:$0xf]
        %s1613 = scalar_lea.vmem %s8, 3
        %v1614 = vld [vmem:[%s1613] sm:$0x1]
        %v1616 = vperm.slane %v1614, 0
        %v1622 = vunpack.c.l.b16 %v1609
        %v1623 = vunpack.c.l.b16 %v1610
        %v1624 = vunpack.c.l.b16 %v1611
        %v1625 = vunpack.c.l.b16 %v1612
        %v1626 = vpack.c.b16 %v1623, %v1622
        %v1627 = vpack.c.b16 %v1625, %v1624
        %1630 = vmatpush.bf16.msra.mxu0 0
        %1631 = vmatpush.bf16.msra.mxu0 0
        %1632 = vmatpush.bf16.msra.mxu0 0
        %1633 = vmatpush.bf16.msra.mxu0 0
        %1634 = vmatpush.bf16.msra.mxu0 0
        %1635 = vmatpush.bf16.msra.mxu0 0
        %1636 = vmatpush.bf16.msra.mxu0 %v1627
        %1637 = vmatpush.bf16.msra.mxu0 %v1626
        %1638 = vmatmul.bf16.gmra.mxu0 %v1396
        %v1639 = vpop.f32.mrf.mxu0
        %v1640 = vadd.f32 %v1616, %v1639
        %v1641 = vpop.f32.mrf.mxu0
        %1642 = vdwg.mxu0
        %v1643 = vpack.c.bf16 %v1570, %v1570
        %v1644 = vpack.c.bf16 %v1605, %v1605
        %v1646 = vsel %vm744, %v1643, 0
        %v1649 = vsel %vm744, %v1644, 0
        %1651 = vmatpush.bf16.xpose.msra.mxu0 0
        %1652 = vmatpush.bf16.xpose.msra.mxu0 0
        %1653 = vmatpush.bf16.xpose.msra.mxu0 0
        %1654 = vmatpush.bf16.xpose.msra.mxu0 0
        %1655 = vmatpush.bf16.xpose.msra.mxu0 0
        %1656 = vmatpush.bf16.xpose.msra.mxu0 0
        %1657 = vmatpush.bf16.xpose.msra.mxu0 0
        %1658 = vmatpush.bf16.xpose.msra.mxu0 %v1649
        %1659 = vmatmul.bf16.gmra.mxu0 %v1646
        %v1660 = vpop.f32.mrf.mxu0
        %v1661 = vadd.f32 %v742, %v1660
        %v1662 = vpop.f32.mrf.mxu0
        %1663 = vdwg.mxu0
        %v1664 = vsel %vm764, %v1661, -inf
        %1665 = vmax.xlane.f32.xlu0 %v1664
        %v1666 = vpop.xlane.xlu0 %1665
        %v1667 = vsub.f32 %v1661, %v1666
        %v1668 = vmul.f32 %v1667, 1.442695
        %v1669 = vpow.pop %v1668
        %v1670 = vsel %vm764, %v1669, 0.0
        %1671 = vadd.xlane.f32.xlu0 %v1670
        %v1672 = vpop.xlane.xlu0 %1671
        %v1673 = vrcp.pop %v1672
        %v1674 = vmul.f32 %v1669, %v1673
        %v1675 = vpack.c.bf16 %v1674, %v1674
        %v1676 = vpack.c.bf16 %v1640, %v1640
        %v1678 = vsel %vm764, %v1675, 0
        %v1681 = vsel %vm781, %v1676, 0
        %1683 = vmatpush.bf16.msra.mxu0 0
        %1684 = vmatpush.bf16.msra.mxu0 0
        %1685 = vmatpush.bf16.msra.mxu0 0
        %1686 = vmatpush.bf16.msra.mxu0 0
        %1687 = vmatpush.bf16.msra.mxu0 0
        %1688 = vmatpush.bf16.msra.mxu0 0
        %1689 = vmatpush.bf16.msra.mxu0 0
        %1690 = vmatpush.bf16.msra.mxu0 %v1681
        %1691 = vmatmul.bf16.gmra.mxu0 %v1678
        %v1692 = vpop.f32.mrf.mxu0
        %v1693 = vadd.f32 0.0, %v1692
        %v1694 = vpop.f32.mrf.mxu0
        %1695 = vdwg.mxu0
        %v1696 = vpack.c.bf16 %v1693, %v1693
        %s1697 = scalar_lea.vmem %s9, 24
        %v1698 = vld [vmem:[%s1697] sm:$0xf]
        %v1699 = vld [vmem:[%s1697 + $0x4] sm:$0xf]
        %v1702 = vunpack.c.l.b16 %v1698
        %v1703 = vunpack.c.l.b16 %v1699
        %v1704 = vpack.c.b16 %v1703, %v1702
        %v1707 = vsel %vm744, %v1696, 0
        %1709 = vmatpush.bf16.msra.mxu0 0
        %1710 = vmatpush.bf16.msra.mxu0 0
        %1711 = vmatpush.bf16.msra.mxu0 0
        %1712 = vmatpush.bf16.msra.mxu0 0
        %1713 = vmatpush.bf16.msra.mxu0 0
        %1714 = vmatpush.bf16.msra.mxu0 0
        %1715 = vmatpush.bf16.msra.mxu0 0
        %1716 = vmatpush.bf16.msra.mxu0 %v1704
        %1717 = vmatmul.bf16.gmra.mxu0 %v1707
        %v1718 = vpop.f32.mrf.mxu0
        %v1719 = vadd.f32 0.0, %v1718
        %v1720 = vpop.f32.mrf.mxu0
        %1721 = vdwg.mxu0
        %v1724 = vunpack.c.l.b16 %v1536
        %v1725 = vunpack.c.l.b16 %v1537
        %v1726 = vpack.c.b16 %v1725, %v1724
        %v1729 = vsel %vm744, %v1534, 0
        %1731 = vmatpush.bf16.msra.mxu0 0
        %1732 = vmatpush.bf16.msra.mxu0 0
        %1733 = vmatpush.bf16.msra.mxu0 0
        %1734 = vmatpush.bf16.msra.mxu0 0
        %1735 = vmatpush.bf16.msra.mxu0 0
        %1736 = vmatpush.bf16.msra.mxu0 0
        %1737 = vmatpush.bf16.msra.mxu0 0
        %1738 = vmatpush.bf16.msra.mxu0 %v1726
        %1739 = vmatmul.bf16.gmra.mxu0 %v1729
        %v1740 = vpop.f32.mrf.mxu0
        %v1741 = vadd.f32 %v1719, %v1740
        %v1742 = vpop.f32.mrf.mxu0
        %1743 = vdwg.mxu0
        %s1744 = scalar_lea.vmem %s10, 1
        %v1745 = vld [vmem:[%s1744] sm:$0x1]
        %v1747 = vperm.slane %v1745, 0
        %v1749 = vadd.f32 %v1741, %v1747
        %v1750 = vadd.f32 %v1749, %v1371
        %s1751 = scalar_lea.vmem %s11, 1
        %v1752 = vld [vmem:[%s1751] sm:$0x1]
        %s1753 = scalar_lea.vmem %s12, 1
        %v1754 = vld [vmem:[%s1753] sm:$0x1]
        %v1755 = vsel %vm656, %v1750, 0.0
        %1756 = vadd.xlane.f32.xlu0 %v1755
        %v1757 = vpop.xlane.xlu0 %1756
        %v1758 = vmul.f32 %v1757, %v1024
        %v1759 = vsub.f32 %v1750, %v1758
        %v1760 = vmul.f32 %v1759, %v1759
        %v1761 = vsel %vm656, %v1760, 0.0
        %1762 = vadd.xlane.f32.xlu0 %v1761
        %v1763 = vpop.xlane.xlu0 %1762
        %v1764 = vmul.f32 %v1763, %v1024
        %v1765 = vadd.f32 %v1764, 1e-05
        %v1766 = vrsqrt.pop %v1765
        %v1767 = vmul.f32 %v1766, %v1765
        %v1768 = vmul.f32 %v1767, %v1766
        %v1769 = vmul.f32 0.5, %v1768
        %v1770 = vsub.f32 1.5, %v1769
        %v1771 = vmul.f32 %v1766, %v1770
        %vm1772 = vweird.f32 %v1765
        %vm1773 = vweird.f32 %v1766
        %vm1774 = vmor %vm1772, %vm1773
        %v1775 = vsel %vm1774, %v1766, %v1771
        %v1776 = vmul.f32 %v1759, %v1775
        %v1778 = vperm.slane %v1752, 0
        %v1780 = vmul.f32 %v1776, %v1778
        %v1782 = vperm.slane %v1754, 0
        %v1784 = vadd.f32 %v1780, %v1782
        %v1785 = vmul.f32 %v1784, %v1055
        %v1787 = vrot.slane %v1785, 7
        %v1789 = vsel %vm1061, 0.0, %v1787
        %v1790 = vpack.c.bf16 %v1789, %v1789
        %s1791 = scalar_lea.vmem %s13, 48
        %v1792 = vld [vmem:[%s1791] sm:$0xf]
        %v1793 = vld [vmem:[%s1791 + $0x4] sm:$0xf]
        %v1794 = vld [vmem:[%s1791 + $0x8] sm:$0xf]
        %v1795 = vld [vmem:[%s1791 + $0xc] sm:$0xf]
        %v1796 = vpack.c.bf16 %v1785, %v1785
        %s1797 = scalar_lea.vmem %s13, 64
        %v1798 = vld [vmem:[%s1797] sm:$0xf]
        %v1799 = vld [vmem:[%s1797 + $0x4] sm:$0xf]
        %v1800 = vld [vmem:[%s1797 + $0x8] sm:$0xf]
        %v1801 = vld [vmem:[%s1797 + $0xc] sm:$0xf]
        %v1806 = vunpack.c.l.b16 %v1798
        %v1807 = vunpack.c.l.b16 %v1799
        %v1808 = vunpack.c.l.b16 %v1800
        %v1809 = vunpack.c.l.b16 %v1801
        %v1810 = vpack.c.b16 %v1807, %v1806
        %v1811 = vpack.c.b16 %v1809, %v1808
        %v1815 = vsel %vm656, %v1796, 0
        %1817 = vmatpush.bf16.msra.mxu0 0
        %1818 = vmatpush.bf16.msra.mxu0 0
        %1819 = vmatpush.bf16.msra.mxu0 0
        %1820 = vmatpush.bf16.msra.mxu0 0
        %1821 = vmatpush.bf16.msra.mxu0 0
        %1822 = vmatpush.bf16.msra.mxu0 0
        %1823 = vmatpush.bf16.msra.mxu0 %v1811
        %1824 = vmatpush.bf16.msra.mxu0 %v1810
        %1825 = vmatmul.bf16.gmra.mxu0 %v1815
        %v1826 = vpop.f32.mrf.mxu0
        %v1827 = vadd.f32 0.0, %v1826
        %v1828 = vpop.f32.mrf.mxu0
        %1829 = vdwg.mxu0
        %v1834 = vunpack.c.l.b16 %v1792
        %v1835 = vunpack.c.l.b16 %v1793
        %v1836 = vunpack.c.l.b16 %v1794
        %v1837 = vunpack.c.l.b16 %v1795
        %v1838 = vpack.c.b16 %v1835, %v1834
        %v1839 = vpack.c.b16 %v1837, %v1836
        %v1843 = vsel %vm656, %v1790, 0
        %1845 = vmatpush.bf16.msra.mxu0 0
        %1846 = vmatpush.bf16.msra.mxu0 0
        %1847 = vmatpush.bf16.msra.mxu0 0
        %1848 = vmatpush.bf16.msra.mxu0 0
        %1849 = vmatpush.bf16.msra.mxu0 0
        %1850 = vmatpush.bf16.msra.mxu0 0
        %1851 = vmatpush.bf16.msra.mxu0 %v1839
        %1852 = vmatpush.bf16.msra.mxu0 %v1838
        %1853 = vmatmul.bf16.gmra.mxu0 %v1843
        %v1854 = vpop.f32.mrf.mxu0
        %v1855 = vadd.f32 %v1827, %v1854
        %v1856 = vpop.f32.mrf.mxu0
        %1857 = vdwg.mxu0
        %v1858 = vrot.slane %v1785, 1
        %v1860 = vsel %vm1132, %v1858, 0.0
        %v1861 = vpack.c.bf16 %v1860, %v1860
        %s1862 = scalar_lea.vmem %s13, 80
        %v1863 = vld [vmem:[%s1862] sm:$0xf]
        %v1864 = vld [vmem:[%s1862 + $0x4] sm:$0xf]
        %v1865 = vld [vmem:[%s1862 + $0x8] sm:$0xf]
        %v1866 = vld [vmem:[%s1862 + $0xc] sm:$0xf]
        %v1871 = vunpack.c.l.b16 %v1863
        %v1872 = vunpack.c.l.b16 %v1864
        %v1873 = vunpack.c.l.b16 %v1865
        %v1874 = vunpack.c.l.b16 %v1866
        %v1875 = vpack.c.b16 %v1872, %v1871
        %v1876 = vpack.c.b16 %v1874, %v1873
        %v1880 = vsel %vm656, %v1861, 0
        %1882 = vmatpush.bf16.msra.mxu0 0
        %1883 = vmatpush.bf16.msra.mxu0 0
        %1884 = vmatpush.bf16.msra.mxu0 0
        %1885 = vmatpush.bf16.msra.mxu0 0
        %1886 = vmatpush.bf16.msra.mxu0 0
        %1887 = vmatpush.bf16.msra.mxu0 0
        %1888 = vmatpush.bf16.msra.mxu0 %v1876
        %1889 = vmatpush.bf16.msra.mxu0 %v1875
        %1890 = vmatmul.bf16.gmra.mxu0 %v1880
        %v1891 = vpop.f32.mrf.mxu0
        %v1892 = vadd.f32 0.0, %v1891
        %v1893 = vpop.f32.mrf.mxu0
        %1894 = vdwg.mxu0
        %v1895 = vadd.f32 %v1855, %v1892
        %s1896 = scalar_lea.vmem %s14, 1
        %v1897 = vld [vmem:[%s1896] sm:$0x1]
        %v1899 = vperm.slane %v1897, 0
        %v1901 = vadd.f32 %v1895, %v1899
        %v1902 = vmax.f32 %v1901, 0.0
        %v1904 = vrot.slane %v1902, 7
        %v1906 = vsel %vm1061, 0.0, %v1904
        %v1907 = vpack.c.bf16 %v1906, %v1906
        %s1908 = scalar_lea.vmem %s15, 96
        %v1909 = vld [vmem:[%s1908] sm:$0xf]
        %v1910 = vld [vmem:[%s1908 + $0x4] sm:$0xf]
        %v1911 = vld [vmem:[%s1908 + $0x8] sm:$0xf]
        %v1912 = vld [vmem:[%s1908 + $0xc] sm:$0xf]
        %v1913 = vld [vmem:[%s1908 + $0x10] sm:$0xf]
        %v1914 = vld [vmem:[%s1908 + $0x14] sm:$0xf]
        %v1915 = vld [vmem:[%s1908 + $0x18] sm:$0xf]
        %v1916 = vld [vmem:[%s1908 + $0x1c] sm:$0xf]
        %v1917 = vpack.c.bf16 %v1902, %v1902
        %s1918 = scalar_lea.vmem %s15, 128
        %v1919 = vld [vmem:[%s1918] sm:$0xf]
        %v1920 = vld [vmem:[%s1918 + $0x4] sm:$0xf]
        %v1921 = vld [vmem:[%s1918 + $0x8] sm:$0xf]
        %v1922 = vld [vmem:[%s1918 + $0xc] sm:$0xf]
        %v1923 = vld [vmem:[%s1918 + $0x10] sm:$0xf]
        %v1924 = vld [vmem:[%s1918 + $0x14] sm:$0xf]
        %v1925 = vld [vmem:[%s1918 + $0x18] sm:$0xf]
        %v1926 = vld [vmem:[%s1918 + $0x1c] sm:$0xf]
        %v1935 = vunpack.c.l.b16 %v1919
        %v1936 = vunpack.c.l.b16 %v1920
        %v1937 = vunpack.c.l.b16 %v1921
        %v1938 = vunpack.c.l.b16 %v1922
        %v1939 = vunpack.c.l.b16 %v1923
        %v1940 = vunpack.c.l.b16 %v1924
        %v1941 = vunpack.c.l.b16 %v1925
        %v1942 = vunpack.c.l.b16 %v1926
        %v1943 = vpack.c.b16 %v1936, %v1935
        %v1944 = vpack.c.b16 %v1938, %v1937
        %v1945 = vpack.c.b16 %v1940, %v1939
        %v1946 = vpack.c.b16 %v1942, %v1941
        %v1952 = vsel %vm1222, %v1917, 0
        %1954 = vmatpush.bf16.msra.mxu0 0
        %1955 = vmatpush.bf16.msra.mxu0 0
        %1956 = vmatpush.bf16.msra.mxu0 0
        %1957 = vmatpush.bf16.msra.mxu0 0
        %1958 = vmatpush.bf16.msra.mxu0 %v1946
        %1959 = vmatpush.bf16.msra.mxu0 %v1945
        %1960 = vmatpush.bf16.msra.mxu0 %v1944
        %1961 = vmatpush.bf16.msra.mxu0 %v1943
        %1962 = vmatmul.bf16.gmra.mxu0 %v1952
        %v1963 = vpop.f32.mrf.mxu0
        %v1964 = vadd.f32 0.0, %v1963
        %v1965 = vpop.f32.mrf.mxu0
        %1966 = vdwg.mxu0
        %v1975 = vunpack.c.l.b16 %v1909
        %v1976 = vunpack.c.l.b16 %v1910
        %v1977 = vunpack.c.l.b16 %v1911
        %v1978 = vunpack.c.l.b16 %v1912
        %v1979 = vunpack.c.l.b16 %v1913
        %v1980 = vunpack.c.l.b16 %v1914
        %v1981 = vunpack.c.l.b16 %v1915
        %v1982 = vunpack.c.l.b16 %v1916
        %v1983 = vpack.c.b16 %v1976, %v1975
        %v1984 = vpack.c.b16 %v1978, %v1977
        %v1985 = vpack.c.b16 %v1980, %v1979
        %v1986 = vpack.c.b16 %v1982, %v1981
        %v1992 = vsel %vm1222, %v1907, 0
        %1994 = vmatpush.bf16.msra.mxu0 0
        %1995 = vmatpush.bf16.msra.mxu0 0
        %1996 = vmatpush.bf16.msra.mxu0 0
        %1997 = vmatpush.bf16.msra.mxu0 0
        %1998 = vmatpush.bf16.msra.mxu0 %v1986
        %1999 = vmatpush.bf16.msra.mxu0 %v1985
        %2000 = vmatpush.bf16.msra.mxu0 %v1984
        %2001 = vmatpush.bf16.msra.mxu0 %v1983
        %2002 = vmatmul.bf16.gmra.mxu0 %v1992
        %v2003 = vpop.f32.mrf.mxu0
        %v2004 = vadd.f32 %v1964, %v2003
        %v2005 = vpop.f32.mrf.mxu0
        %2006 = vdwg.mxu0
        %v2007 = vrot.slane %v1902, 1
        %v2009 = vsel %vm1132, %v2007, 0.0
        %v2010 = vpack.c.bf16 %v2009, %v2009
        %s2011 = scalar_lea.vmem %s15, 160
        %v2012 = vld [vmem:[%s2011] sm:$0xf]
        %v2013 = vld [vmem:[%s2011 + $0x4] sm:$0xf]
        %v2014 = vld [vmem:[%s2011 + $0x8] sm:$0xf]
        %v2015 = vld [vmem:[%s2011 + $0xc] sm:$0xf]
        %v2016 = vld [vmem:[%s2011 + $0x10] sm:$0xf]
        %v2017 = vld [vmem:[%s2011 + $0x14] sm:$0xf]
        %v2018 = vld [vmem:[%s2011 + $0x18] sm:$0xf]
        %v2019 = vld [vmem:[%s2011 + $0x1c] sm:$0xf]
        %v2028 = vunpack.c.l.b16 %v2012
        %v2029 = vunpack.c.l.b16 %v2013
        %v2030 = vunpack.c.l.b16 %v2014
        %v2031 = vunpack.c.l.b16 %v2015
        %v2032 = vunpack.c.l.b16 %v2016
        %v2033 = vunpack.c.l.b16 %v2017
        %v2034 = vunpack.c.l.b16 %v2018
        %v2035 = vunpack.c.l.b16 %v2019
        %v2036 = vpack.c.b16 %v2029, %v2028
        %v2037 = vpack.c.b16 %v2031, %v2030
        %v2038 = vpack.c.b16 %v2033, %v2032
        %v2039 = vpack.c.b16 %v2035, %v2034
        %v2045 = vsel %vm1222, %v2010, 0
        %2047 = vmatpush.bf16.msra.mxu0 0
        %2048 = vmatpush.bf16.msra.mxu0 0
        %2049 = vmatpush.bf16.msra.mxu0 0
        %2050 = vmatpush.bf16.msra.mxu0 0
        %2051 = vmatpush.bf16.msra.mxu0 %v2039
        %2052 = vmatpush.bf16.msra.mxu0 %v2038
        %2053 = vmatpush.bf16.msra.mxu0 %v2037
        %2054 = vmatpush.bf16.msra.mxu0 %v2036
        %2055 = vmatmul.bf16.gmra.mxu0 %v2045
        %v2056 = vpop.f32.mrf.mxu0
        %v2057 = vadd.f32 0.0, %v2056
        %v2058 = vpop.f32.mrf.mxu0
        %2059 = vdwg.mxu0
        %v2060 = vadd.f32 %v2004, %v2057
        %s2061 = scalar_lea.vmem %s16, 1
        %v2062 = vld [vmem:[%s2061] sm:$0x1]
        %v2064 = vperm.slane %v2062, 0
        %v2066 = vadd.f32 %v2060, %v2064
        %v2067 = vadd.f32 %v2066, %v1785
        %s2068 = scalar_lea.vmem %s17, 1
        %v2069 = vld [vmem:[%s2068] sm:$0x1]
        %s2070 = scalar_lea.vmem %s18, 1
        %v2071 = vld [vmem:[%s2070] sm:$0x1]
        %v2072 = vsel %vm656, %v2067, 0.0
        %2073 = vadd.xlane.f32.xlu0 %v2072
        %v2074 = vpop.xlane.xlu0 %2073
        %v2075 = vmul.f32 %v2074, %v1024
        %v2076 = vsub.f32 %v2067, %v2075
        %v2077 = vmul.f32 %v2076, %v2076
        %v2078 = vsel %vm656, %v2077, 0.0
        %2079 = vadd.xlane.f32.xlu0 %v2078
        %v2080 = vpop.xlane.xlu0 %2079
        %v2081 = vmul.f32 %v2080, %v1024
        %v2082 = vadd.f32 %v2081, 1e-05
        %v2083 = vrsqrt.pop %v2082
        %v2084 = vmul.f32 %v2083, %v2082
        %v2085 = vmul.f32 %v2084, %v2083
        %v2086 = vmul.f32 0.5, %v2085
        %v2087 = vsub.f32 1.5, %v2086
        %v2088 = vmul.f32 %v2083, %v2087
        %vm2089 = vweird.f32 %v2082
        %vm2090 = vweird.f32 %v2083
        %vm2091 = vmor %vm2089, %vm2090
        %v2092 = vsel %vm2091, %v2083, %v2088
        %v2093 = vmul.f32 %v2076, %v2092
        %v2095 = vperm.slane %v2069, 0
        %v2097 = vmul.f32 %v2093, %v2095
        %v2099 = vperm.slane %v2071, 0
        %v2101 = vadd.f32 %v2097, %v2099
        %v2102 = vmul.f32 %v2101, %v1055
        %v2103 = vpack.c.bf16 %v2102, %v2102
        %vm2104 = vcmask 257024
        %2105 = vst.msk [vmem:[%s617] sm:$0xf] %vm2104, %v2103
        %s2106 = sand.u32 %s455, 1
        %s2107 = scalar_lea.sflag [#allocation3], %s2106
        %s2108 = sand.u32 %s455, 1
        %s2109 = smul.addr %s2108, 4
        %s2110 = scalar_lea.vmem [#allocation2], %s2109
        // Predicated region
        $region97: #{tpu_custom_call.1} parent=95 // pred_check
          %p2111 = pneg %p465
        $region98: #{tpu_custom_call.1} parent=95 // pred_check_branch
          %2113 = sbr.rel (%p2111) target = $region100
        $region99: #{tpu_custom_call.1} parent=95 // pred_region
          %2115 = vsyncadd %s2107, 0
          %s2116 = smul.addr %s33, 4
          %s2117 = scalar_lea.hbm %s19, %s2116
          %s2119 = sshll.u32 %s2110, 4
          %s2120 = int_to_ptr.vmem [resolvable:$true] %s2119
          %s2121 = sshll.u32 %s2117, 4
          %s2122 = int_to_ptr.hbm [resolvable:$true] %s2121
          %2124 = dma.vmem_to_hbm [thread:$0]  %s2120, 64, %s2122, %s2107
        $region100: #{tpu_custom_call.1} parent=95 // pred_fallthru
          _
      $region96: #{tpu_custom_call.1} parent=5 // pred_fallthru
        _
      %p2125 = scmp.le.s32.totalorder 2, %s28
      // Predicated region
      $region101: #{tpu_custom_call.1} parent=5 // pred_check
        %p2126 = pneg %p2125
      $region102: #{tpu_custom_call.1} parent=5 // pred_check_branch
        %2128 = sbr.rel (%p2126) target = $region104
      $region103: #{tpu_custom_call.1} parent=5 // pred_region
        %s2129 = ssub.s32 %s28, 2
        // Predicated region
        $region105: #{tpu_custom_call.1} parent=103 // pred_check
          %p2130 = pneg %p471
        $region106: #{tpu_custom_call.1} parent=103 // pred_check_branch
          %2132 = sbr.rel (%p2130) target = $region108
        $region107: #{tpu_custom_call.1} parent=103 // pred_region
          %s2133 = sand.u32 %s456, 1
          %s2134 = scalar_lea.sflag [#allocation3], %s2133
          %s2135 = sand.u32 %s456, 1
          %s2136 = smul.addr %s2135, 4
          %s2137 = scalar_lea.vmem [#allocation2], %s2136
          %2139 = dma.done %s2134, 64
        $region108: #{tpu_custom_call.1} parent=103 // pred_fallthru
          _
      $region104: #{tpu_custom_call.1} parent=5 // pred_fallthru
        _
    $region6: #{tpu_custom_call.1} parent=1 // loop_footer
      %s32 = sadd.s32 1, %s28
    $region7: #{tpu_custom_call.1} parent=1 // loop_footer_branch
      %27 = sbr.rel target = $region3
    $region8: #{tpu_custom_call.1} parent=1 // loop_exit
      _
    %2140 = vsyncpa [#allocation3], 1
    %s2141 = scalar_lea.sflag [#allocation3], 1
    %2142 = vsyncpa %s2141, 1

</llo_original>
